<compile_context>
chip_gen: v5e
topology: v5e:2x2
jax: 0.10.0
libtpu: 0.0.40
codegen_flags: <defaults>
</compile_context>

<pallas_src>
import functools

import jax
import jax.numpy as jnp
from jax import lax
from jax.experimental import pallas as pl
from jax.experimental.pallas import tpu as pltpu

_BN_EPS = 1e-5
_TILE_CANDIDATES = (1024, 512, 256, 128, 64, 32, 16, 8)


def _pick_tile_m(m):
    """Largest row tile dividing M that still gives >= 2 grid steps; else any divisor."""
    for t in _TILE_CANDIDATES:
        if m % t == 0 and m // t >= 2:
            return t
    for t in _TILE_CANDIDATES:
        if m % t == 0:
            return t
    return m


# ---------------------------------------------------------------------------
# Pallas kernels
# ---------------------------------------------------------------------------
def _mm_stats_kernel(a_ref, w_ref, o_ref, sum_ref, ssq_ref):
    """1x1-conv tile: (tm,K)x(K,C) bf16 matmul + per-channel sum / sum-of-squares."""
    acc = jnp.dot(a_ref[...], w_ref[...], preferred_element_type=jnp.float32)
    o_ref[...] = acc.astype(o_ref.dtype)
    sum_ref[...] = jnp.sum(acc, axis=0)[None, None, :]
    ssq_ref[...] = jnp.sum(acc * acc, axis=0)[None, None, :]


def matmul_stats(a_bf16, w_bf16, out_dtype=jnp.float32):
    """a: (M,K) bf16, w: (K,C) bf16 -> (conv (M,C), chan_sum (C,), chan_ssq (C,))."""
    m, k = a_bf16.shape
    _, c = w_bf16.shape
    tm = _pick_tile_m(m)
    gm = m // tm
    conv, sums, ssqs = pl.pallas_call(
        _mm_stats_kernel,
        out_shape=(
            jax.ShapeDtypeStruct((m, c), out_dtype),
            jax.ShapeDtypeStruct((gm, 1, c), jnp.float32),
            jax.ShapeDtypeStruct((gm, 1, c), jnp.float32),
        ),
        grid=(gm,),
        in_specs=[
            pl.BlockSpec((tm, k), lambda i: (i, 0)),
            pl.BlockSpec((k, c), lambda i: (0, 0)),
        ],
        out_specs=(
            pl.BlockSpec((tm, c), lambda i: (i, 0)),
            pl.BlockSpec((1, 1, c), lambda i: (i, 0, 0)),
            pl.BlockSpec((1, 1, c), lambda i: (i, 0, 0)),
        ),
        compiler_params=pltpu.CompilerParams(dimension_semantics=("parallel",)),
    )(a_bf16, w_bf16)
    return conv, jnp.sum(sums, axis=(0, 1)), jnp.sum(ssqs, axis=(0, 1))


def _make_dw_kernel(stride, ho, wo, c):
    s = stride

    def kernel(*refs):
        phase_refs = refs[: s * s]
        w_ref = refs[s * s]
        o_ref, sum_ref, ssq_ref = refs[s * s + 1:]
        wv = w_ref[...].astype(jnp.float32)                      # (9, C)
        acc = jnp.zeros((1, ho, wo, c), jnp.float32)
        for ki in range(3):
            for kj in range(3):
                ph = phase_refs[(ki % s) * s + (kj % s)]
                ro, co = ki // s, kj // s
                tap = ph[:, ro:ro + ho, co:co + wo, :].astype(jnp.float32)
                acc = acc + tap * wv[ki * 3 + kj]                # per-channel weight
        o_ref[...] = acc.astype(o_ref.dtype)
        sum_ref[...] = jnp.sum(acc, axis=(0, 1, 2))[None, None, :]
        ssq_ref[...] = jnp.sum(acc * acc, axis=(0, 1, 2))[None, None, :]

    return kernel


def depthwise3x3(h_nhwc, w9c, stride, out_dtype=jnp.float32):
    """Depthwise 3x3 conv, padding=1.  h: (N,H,W,C) bf16, w9c: (9,C) f32.

    Returns (conv (N,Ho,Wo,C), chan_sum (C,), chan_ssq (C,), Ho, Wo)."""
    n, h, w, c = h_nhwc.shape
    s = stride
    ho = (h - 1) // s + 1
    wo = (w - 1) // s + 1
    # Pad (left/top = 1, right/bottom >= 1) so every stride-phase view has one shape.
    pad_h = (-(h + 2)) % s
    pad_w = (-(w + 2)) % s
    xp = jnp.pad(h_nhwc, ((0, 0), (1, 1 + pad_h), (1, 1 + pad_w), (0, 0)))
    if s == 1:
        phases = (xp,)
    else:
        phases = tuple(xp[:, p::s, q::s, :] for p in range(s) for q in range(s))
    hph, wph = phases[0].shape[1], phases[0].shape[2]

    phase_spec = pl.BlockSpec((1, hph, wph, c), lambda b: (b, 0, 0, 0))
    out, sums, ssqs = pl.pallas_call(
        _make_dw_kernel(s, ho, wo, c),
        out_shape=(
            jax.ShapeDtypeStruct((n, ho, wo, c), out_dtype),
            jax.ShapeDtypeStruct((n, 1, c), jnp.float32),
            jax.ShapeDtypeStruct((n, 1, c), jnp.float32),
        ),
        grid=(n,),
        in_specs=[phase_spec] * (s * s) + [pl.BlockSpec((9, c), lambda b: (0, 0))],
        out_specs=(
            pl.BlockSpec((1, ho, wo, c), lambda b: (b, 0, 0, 0)),
            pl.BlockSpec((1, 1, c), lambda b: (b, 0, 0)),
            pl.BlockSpec((1, 1, c), lambda b: (b, 0, 0)),
        ),
        compiler_params=pltpu.CompilerParams(dimension_semantics=("parallel",)),
    )(*phases, w9c)
    return out, jnp.sum(sums, axis=(0, 1)), jnp.sum(ssqs, axis=(0, 1)), ho, wo


def _make_affine_kernel(relu):
    def kernel(x_ref, s_ref, b_ref, o_ref):
        y = x_ref[...].astype(jnp.float32) * s_ref[...] + b_ref[...]
        if relu:
            y = jnp.maximum(y, 0.0)
        o_ref[...] = y.astype(o_ref.dtype)
    return kernel


def bn_apply(x, scale, shift, *, relu, out_dtype):
    """y = x*scale + shift (+ReLU), per-channel scale/shift broadcast over rows."""
    m, c = x.shape
    tm = _pick_tile_m(m)
    data = pl.BlockSpec((tm, c), lambda i: (i, 0))
    vec = pl.BlockSpec((1, c), lambda i: (0, 0))
    return pl.pallas_call(
        _make_affine_kernel(relu),
        out_shape=jax.ShapeDtypeStruct((m, c), out_dtype),
        grid=(m // tm,),
        in_specs=[data, vec, vec],
        out_specs=data,
        compiler_params=pltpu.CompilerParams(dimension_semantics=("parallel",)),
    )(x, scale.reshape(1, c).astype(jnp.float32), shift.reshape(1, c).astype(jnp.float32))


def _dual_affine_add_kernel(x1_ref, s1_ref, b1_ref, x2_ref, s2_ref, b2_ref, o_ref):
    y = (x1_ref[...].astype(jnp.float32) * s1_ref[...] + b1_ref[...]
         + x2_ref[...].astype(jnp.float32) * s2_ref[...] + b2_ref[...])
    o_ref[...] = y


def bn_apply_add(x1, scale1, shift1, x2, scale2, shift2):
    """Fused BN3 + shortcut-BN + residual add: (x1*s1+b1) + (x2*s2+b2)."""
    m, c = x1.shape
    tm = _pick_tile_m(m)
    data = pl.BlockSpec((tm, c), lambda i: (i, 0))
    vec = pl.BlockSpec((1, c), lambda i: (0, 0))
    row = lambda v: v.reshape(1, c).astype(jnp.float32)
    return pl.pallas_call(
        _dual_affine_add_kernel,
        out_shape=jax.ShapeDtypeStruct((m, c), jnp.float32),
        grid=(m // tm,),
        in_specs=[data, vec, vec, data, vec, vec],
        out_specs=data,
        compiler_params=pltpu.CompilerParams(dimension_semantics=("parallel",)),
    )(x1, row(scale1), row(shift1), x2, row(scale2), row(shift2))


# ---------------------------------------------------------------------------
# BatchNorm statistics helper (tiny per-channel math, plain JAX)
# ---------------------------------------------------------------------------
def bn_scale_shift(chan_sum, chan_ssq, count, gamma, beta):
    mean = chan_sum / count
    var = jnp.maximum(chan_ssq / count - mean * mean, 0.0)   # biased variance
    scale = gamma * lax.rsqrt(var + _BN_EPS)
    return scale, beta - mean * scale


# ---------------------------------------------------------------------------
# Block parameters & forward
# ---------------------------------------------------------------------------
def init_block_params(key, in_planes, out_planes, expansion, stride):
    planes = expansion * in_planes
    ks = jax.random.split(key, 4)
    # PyTorch-layout conv weights (bias=False everywhere, as in the module).
    w1 = jax.random.normal(ks[0], (planes, in_planes, 1, 1), jnp.float32) * 0.1
    w2 = jax.random.normal(ks[1], (planes, 1, 3, 3), jnp.float32) * 0.1
    w3 = jax.random.normal(ks[2], (out_planes, planes, 1, 1), jnp.float32) * 0.1

    def bn(c):   # BatchNorm2d defaults: weight=1, bias=0
        return jnp.ones((c,), jnp.float32), jnp.zeros((c,), jnp.float32)

    # Params dict holds only arrays (jit-friendly); stride is passed statically.
    p = {
        # Pre-transformed weights (done once, outside the traced forward):
        "w1": jnp.transpose(w1[:, :, 0, 0]).astype(jnp.bfloat16),              # (Cin, planes)
        "w2": jnp.transpose(w2[:, 0, :, :], (1, 2, 0)).reshape(9, planes),     # (9, planes) f32
        "w3": jnp.transpose(w3[:, :, 0, 0]).astype(jnp.bfloat16),              # (planes, Cout)
    }
    p["bn1_g"], p["bn1_b"] = bn(planes)
    p["bn2_g"], p["bn2_b"] = bn(planes)
    p["bn3_g"], p["bn3_b"] = bn(out_planes)
    if stride == 1 and in_planes != out_planes:
        wsc = jax.random.normal(ks[3], (out_planes, in_planes, 1, 1), jnp.float32) * 0.1
        p["wsc"] = jnp.transpose(wsc[:, :, 0, 0]).astype(jnp.bfloat16)         # (Cin, Cout)
        p["bnsc_g"], p["bnsc_b"] = bn(out_planes)
    return p


@functools.partial(jax.jit, static_argnames=("stride",))
def block_forward(x_nchw, p, *, stride):
    n, cin, h, w = x_nchw.shape
    planes = p["w1"].shape[1]
    cout = p["w3"].shape[1]

    x = jnp.transpose(x_nchw, (0, 2, 3, 1)).astype(jnp.float32)     # NCHW -> NHWC
    x2d = x.reshape(n * h * w, cin)
    x2d_bf = x2d.astype(jnp.bfloat16)

    # --- expand: 1x1 conv -> BN1 -> ReLU ---------------------------------
    c1, s1, q1 = matmul_stats(x2d_bf, p["w1"], out_dtype=jnp.bfloat16)
    sc1, sh1 = bn_scale_shift(s1, q1, n * h * w, p["bn1_g"], p["bn1_b"])
    h1 = bn_apply(c1, sc1, sh1, relu=True, out_dtype=jnp.bfloat16)  # (N*H*W, planes)

    # --- depthwise: 3x3 group conv (stride) -> BN2 -> ReLU ---------------
    c2, s2, q2, ho, wo = depthwise3x3(h1.reshape(n, h, w, planes), p["w2"], stride,
                                      out_dtype=jnp.bfloat16)
    sc2, sh2 = bn_scale_shift(s2, q2, n * ho * wo, p["bn2_g"], p["bn2_b"])
    h2 = bn_apply(c2.reshape(n * ho * wo, planes), sc2, sh2,
                  relu=True, out_dtype=jnp.bfloat16)

    # --- project: 1x1 conv -> BN3 (+ shortcut) ---------------------------
    c3, s3, q3 = matmul_stats(h2, p["w3"], out_dtype=jnp.float32)
    sc3, sh3 = bn_scale_shift(s3, q3, n * ho * wo, p["bn3_g"], p["bn3_b"])

    if stride == 1:
        if "wsc" in p:    # shortcut = 1x1 conv + BN on the block input
            csc, ssc, qsc = matmul_stats(x2d_bf, p["wsc"], out_dtype=jnp.float32)
            scs, shs = bn_scale_shift(ssc, qsc, n * h * w, p["bnsc_g"], p["bnsc_b"])
            out2d = bn_apply_add(c3, sc3, sh3, csc, scs, shs)
        else:             # identity shortcut
            ones = jnp.ones((cout,), jnp.float32)
            zeros = jnp.zeros((cout,), jnp.float32)
            out2d = bn_apply_add(c3, sc3, sh3, x2d, ones, zeros)
    else:                 # stride != 1: no residual
        out2d = bn_apply(c3, sc3, sh3, relu=False, out_dtype=jnp.float32)

    out = out2d.reshape(n, ho, wo, cout)
    return jnp.transpose(out, (0, 3, 1, 2))                         # NHWC -> NCHW


if __name__ == "__main__":
    key = jax.random.PRNGKey(0)
    kp1, kp2, kp3, kx = jax.random.split(key, 4)
    x = jax.random.normal(kx, (2, 32, 16, 16), jnp.float32)

    # stride=1, in != out  -> conv + BN shortcut
    y1 = jax.block_until_ready(
        block_forward(x, init_block_params(kp1, 32, 64, 4, 1), stride=1))
    assert y1.shape == (2, 64, 16, 16) and y1.dtype == jnp.float32
    # stride=1, in == out  -> identity shortcut
    y2 = jax.block_until_ready(
        block_forward(x, init_block_params(kp2, 32, 32, 4, 1), stride=1))
    assert y2.shape == (2, 32, 16, 16)
    # stride=2             -> no shortcut, strided depthwise conv
    y3 = jax.block_until_ready(
        block_forward(x, init_block_params(kp3, 32, 64, 4, 2), stride=2))
    assert y3.shape == (2, 64, 8, 8)

    assert bool(jnp.isfinite(y1).all())
    assert bool(jnp.isfinite(y2).all())
    assert bool(jnp.isfinite(y3).all())
    print("KERNEL_OK")
</pallas_src>

<mosaic_0001>
module attributes {stable_mosaic.version = 11 : i64} {
  func.func @_mm_stats_kernel(%arg0: i32, %arg1: memref<256x32xbf16, #tpu.memory_space<vmem>>, %arg2: memref<32x128xbf16, #tpu.memory_space<vmem>>, %arg3: memref<256x128xbf16, #tpu.memory_space<vmem>>, %arg4: memref<1x1x128xf32, #tpu.memory_space<vmem>>, %arg5: memref<1x1x128xf32, #tpu.memory_space<vmem>>) attributes {dimension_semantics = [#tpu.dimension_semantics<parallel>], iteration_bounds = array<i64: 2>, scalar_prefetch = 0 : i64, scratch_operands = 0 : i64, tpu.core_type = #tpu.core_type<tc>, window_params = [{transform_indices = @transform_0, window_bounds = array<i64: 256, 32>}, {pipeline_mode = #tpu.pipeline_mode<synchronous>, transform_indices = @transform_1, window_bounds = array<i64: 32, 128>}, {transform_indices = @transform_2, window_bounds = array<i64: 256, 128>}, {transform_indices = @transform_3, window_bounds = array<i64: 1, 1, 128>}, {transform_indices = @transform_4, window_bounds = array<i64: 1, 1, 128>}]} {
    %c0 = arith.constant 0 : index
    %c0_0 = arith.constant 0 : index
    %0 = vector.load %arg1[%c0, %c0_0] : memref<256x32xbf16, #tpu.memory_space<vmem>>, vector<256x32xbf16>
    %c0_1 = arith.constant 0 : index
    %c0_2 = arith.constant 0 : index
    %1 = vector.load %arg2[%c0_1, %c0_2] : memref<32x128xbf16, #tpu.memory_space<vmem>>, vector<32x128xbf16>
    %cst = arith.constant dense<0.000000e+00> : vector<256x128xf32>
    %2 = tpu.matmul %0, %1, %cst {dimension_numbers = #tpu.dot_dimension_numbers<[1], [0], [0], [1], [0, 0, 1, 1], [], []>} : vector<256x32xbf16>, vector<32x128xbf16>, vector<256x128xf32> -> vector<256x128xf32>
    %3 = arith.truncf %2 : vector<256x128xf32> to vector<256x128xbf16>
    %c0_3 = arith.constant 0 : index
    %c0_4 = arith.constant 0 : index
    %4 = vector.load %arg3[%c0_3, %c0_4] : memref<256x128xbf16, #tpu.memory_space<vmem>>, vector<256x128xbf16>
    tpu.vector_store %arg3[%c0_3, %c0_4], %3 {strides = array<i32>} : memref<256x128xbf16, #tpu.memory_space<vmem>>, vector<256x128xbf16>,
    %cst_5 = arith.constant dense<0.000000e+00> : vector<128xf32>
    %5 = vector.multi_reduction <add>, %2, %cst_5 [0] : vector<256x128xf32> to vector<128xf32>
    %6 = vector.shape_cast %5 : vector<128xf32> to vector<1x1x128xf32>
    %c0_6 = arith.constant 0 : index
    %c0_7 = arith.constant 0 : index
    %c0_8 = arith.constant 0 : index
    %7 = vector.load %arg4[%c0_6, %c0_7, %c0_8] : memref<1x1x128xf32, #tpu.memory_space<vmem>>, vector<1x1x128xf32>
    tpu.vector_store %arg4[%c0_6, %c0_7, %c0_8], %6 {strides = array<i32>} : memref<1x1x128xf32, #tpu.memory_space<vmem>>, vector<1x1x128xf32>,
    %8 = arith.mulf %2, %2 : vector<256x128xf32>
    %cst_9 = arith.constant dense<0.000000e+00> : vector<128xf32>
    %9 = vector.multi_reduction <add>, %8, %cst_9 [0] : vector<256x128xf32> to vector<128xf32>
    %10 = vector.shape_cast %9 : vector<128xf32> to vector<1x1x128xf32>
    %c0_10 = arith.constant 0 : index
    %c0_11 = arith.constant 0 : index
    %c0_12 = arith.constant 0 : index
    %11 = vector.load %arg5[%c0_10, %c0_11, %c0_12] : memref<1x1x128xf32, #tpu.memory_space<vmem>>, vector<1x1x128xf32>
    tpu.vector_store %arg5[%c0_10, %c0_11, %c0_12], %10 {strides = array<i32>} : memref<1x1x128xf32, #tpu.memory_space<vmem>>, vector<1x1x128xf32>,
    return
  }
  func.func @transform_0(%arg0: i32) -> (i32, i32) {
    %c0_i32 = arith.constant 0 : i32
    %c0_i32_0 = arith.constant 0 : i32
    return %arg0, %c0_i32 : i32, i32
  }
  func.func @transform_1(%arg0: i32) -> (i32, i32) {
    %c0_i32 = arith.constant 0 : i32
    %c0_i32_0 = arith.constant 0 : i32
    %c0_i32_1 = arith.constant 0 : i32
    return %c0_i32, %c0_i32_0 : i32, i32
  }
  func.func @transform_2(%arg0: i32) -> (i32, i32) {
    %c0_i32 = arith.constant 0 : i32
    %c0_i32_0 = arith.constant 0 : i32
    return %arg0, %c0_i32 : i32, i32
  }
  func.func @transform_3(%arg0: i32) -> (i32, i32, i32) {
    %c0_i32 = arith.constant 0 : i32
    %c0_i32_0 = arith.constant 0 : i32
    %c0_i32_1 = arith.constant 0 : i32
    return %arg0, %c0_i32, %c0_i32_0 : i32, i32, i32
  }
  func.func @transform_4(%arg0: i32) -> (i32, i32, i32) {
    %c0_i32 = arith.constant 0 : i32
    %c0_i32_0 = arith.constant 0 : i32
    %c0_i32_1 = arith.constant 0 : i32
    return %arg0, %c0_i32, %c0_i32_0 : i32, i32, i32
  }
}

module attributes {stable_mosaic.version = 11 : i64} {
  func.func @kernel(%arg0: i32, %arg1: memref<256x128xbf16, #tpu.memory_space<vmem>>, %arg2: memref<1x128xf32, #tpu.memory_space<vmem>>, %arg3: memref<1x128xf32, #tpu.memory_space<vmem>>, %arg4: memref<256x128xbf16, #tpu.memory_space<vmem>>) attributes {dimension_semantics = [#tpu.dimension_semantics<parallel>], iteration_bounds = array<i64: 2>, scalar_prefetch = 0 : i64, scratch_operands = 0 : i64, tpu.core_type = #tpu.core_type<tc>, window_params = [{transform_indices = @transform_0, window_bounds = array<i64: 256, 128>}, {pipeline_mode = #tpu.pipeline_mode<synchronous>, transform_indices = @transform_1, window_bounds = array<i64: 1, 128>}, {pipeline_mode = #tpu.pipeline_mode<synchronous>, transform_indices = @transform_2, window_bounds = array<i64: 1, 128>}, {transform_indices = @transform_3, window_bounds = array<i64: 256, 128>}]} {
    %c0 = arith.constant 0 : index
    %c0_0 = arith.constant 0 : index
    %0 = vector.load %arg1[%c0, %c0_0] : memref<256x128xbf16, #tpu.memory_space<vmem>>, vector<256x128xbf16>
    %1 = arith.extf %0 : vector<256x128xbf16> to vector<256x128xf32>
    %c0_1 = arith.constant 0 : index
    %c0_2 = arith.constant 0 : index
    %2 = vector.load %arg2[%c0_1, %c0_2] : memref<1x128xf32, #tpu.memory_space<vmem>>, vector<1x128xf32>
    %3 = vector.broadcast %2 : vector<1x128xf32> to vector<256x128xf32>
    %4 = arith.mulf %1, %3 : vector<256x128xf32>
    %c0_3 = arith.constant 0 : index
    %c0_4 = arith.constant 0 : index
    %5 = vector.load %arg3[%c0_3, %c0_4] : memref<1x128xf32, #tpu.memory_space<vmem>>, vector<1x128xf32>
    %6 = vector.broadcast %5 : vector<1x128xf32> to vector<256x128xf32>
    %7 = arith.addf %4, %6 : vector<256x128xf32>
    %cst = arith.constant 0.000000e+00 : f32
    %8 = vector.broadcast %cst : f32 to vector<256x128xf32>
    %9 = arith.maximumf %7, %8 : vector<256x128xf32>
    %10 = arith.truncf %9 : vector<256x128xf32> to vector<256x128xbf16>
    %c0_5 = arith.constant 0 : index
    %c0_6 = arith.constant 0 : index
    %11 = vector.load %arg4[%c0_5, %c0_6] : memref<256x128xbf16, #tpu.memory_space<vmem>>, vector<256x128xbf16>
    tpu.vector_store %arg4[%c0_5, %c0_6], %10 {strides = array<i32>} : memref<256x128xbf16, #tpu.memory_space<vmem>>, vector<256x128xbf16>,
    return
  }
  func.func @transform_0(%arg0: i32) -> (i32, i32) {
    %c0_i32 = arith.constant 0 : i32
    %c0_i32_0 = arith.constant 0 : i32
    return %arg0, %c0_i32 : i32, i32
  }
  func.func @transform_1(%arg0: i32) -> (i32, i32) {
    %c0_i32 = arith.constant 0 : i32
    %c0_i32_0 = arith.constant 0 : i32
    %c0_i32_1 = arith.constant 0 : i32
    return %c0_i32, %c0_i32_0 : i32, i32
  }
  func.func @transform_2(%arg0: i32) -> (i32, i32) {
    %c0_i32 = arith.constant 0 : i32
    %c0_i32_0 = arith.constant 0 : i32
    %c0_i32_1 = arith.constant 0 : i32
    return %c0_i32, %c0_i32_0 : i32, i32
  }
  func.func @transform_3(%arg0: i32) -> (i32, i32) {
    %c0_i32 = arith.constant 0 : i32
    %c0_i32_0 = arith.constant 0 : i32
    return %arg0, %c0_i32 : i32, i32
  }
}

module attributes {stable_mosaic.version = 11 : i64} {
  func.func @kernel(%arg0: i32, %arg1: memref<1x18x18x128xbf16, #tpu.memory_space<vmem>>, %arg2: memref<9x128xf32, #tpu.memory_space<vmem>>, %arg3: memref<1x16x16x128xbf16, #tpu.memory_space<vmem>>, %arg4: memref<1x1x128xf32, #tpu.memory_space<vmem>>, %arg5: memref<1x1x128xf32, #tpu.memory_space<vmem>>) attributes {dimension_semantics = [#tpu.dimension_semantics<parallel>], iteration_bounds = array<i64: 2>, scalar_prefetch = 0 : i64, scratch_operands = 0 : i64, tpu.core_type = #tpu.core_type<tc>, window_params = [{transform_indices = @transform_0, window_bounds = array<i64: 1, 18, 18, 128>}, {pipeline_mode = #tpu.pipeline_mode<synchronous>, transform_indices = @transform_1, window_bounds = array<i64: 9, 128>}, {transform_indices = @transform_2, window_bounds = array<i64: 1, 16, 16, 128>}, {transform_indices = @transform_3, window_bounds = array<i64: 1, 1, 128>}, {transform_indices = @transform_4, window_bounds = array<i64: 1, 1, 128>}]} {
    %c0 = arith.constant 0 : index
    %c0_0 = arith.constant 0 : index
    %0 = vector.load %arg2[%c0, %c0_0] : memref<9x128xf32, #tpu.memory_space<vmem>>, vector<9x128xf32>
    %cst = arith.constant 0.000000e+00 : f32
    %1 = vector.broadcast %cst : f32 to vector<1x16x16x128xf32>
    %c0_1 = arith.constant 0 : index
    %c0_2 = arith.constant 0 : index
    %c0_3 = arith.constant 0 : index
    %c0_4 = arith.constant 0 : index
    %2 = vector.load %arg1[%c0_1, %c0_2, %c0_3, %c0_4] : memref<1x18x18x128xbf16, #tpu.memory_space<vmem>>, vector<1x16x16x128xbf16>
    %3 = arith.extf %2 : vector<1x16x16x128xbf16> to vector<1x16x16x128xf32>
    %4 = vector.extract_strided_slice %0 {offsets = [0, 0], sizes = [1, 128], strides = [1, 1]} : vector<9x128xf32> to vector<1x128xf32>
    %5 = vector.shape_cast %4 : vector<1x128xf32> to vector<128xf32>
    %6 = vector.shape_cast %5 : vector<128xf32> to vector<1x1x1x128xf32>
    %7 = vector.broadcast %6 : vector<1x1x1x128xf32> to vector<1x16x16x128xf32>
    %8 = arith.mulf %3, %7 : vector<1x16x16x128xf32>
    %9 = arith.addf %1, %8 : vector<1x16x16x128xf32>
    %c0_5 = arith.constant 0 : index
    %c0_6 = arith.constant 0 : index
    %c1 = arith.constant 1 : index
    %c0_7 = arith.constant 0 : index
    %10 = vector.load %arg1[%c0_5, %c0_6, %c1, %c0_7] : memref<1x18x18x128xbf16, #tpu.memory_space<vmem>>, vector<1x16x16x128xbf16>
    %11 = arith.extf %10 : vector<1x16x16x128xbf16> to vector<1x16x16x128xf32>
    %12 = vector.extract_strided_slice %0 {offsets = [1, 0], sizes = [1, 128], strides = [1, 1]} : vector<9x128xf32> to vector<1x128xf32>
    %13 = vector.shape_cast %12 : vector<1x128xf32> to vector<128xf32>
    %14 = vector.shape_cast %13 : vector<128xf32> to vector<1x1x1x128xf32>
    %15 = vector.broadcast %14 : vector<1x1x1x128xf32> to vector<1x16x16x128xf32>
    %16 = arith.mulf %11, %15 : vector<1x16x16x128xf32>
    %17 = arith.addf %9, %16 : vector<1x16x16x128xf32>
    %c0_8 = arith.constant 0 : index
    %c0_9 = arith.constant 0 : index
    %c2 = arith.constant 2 : index
    %c0_10 = arith.constant 0 : index
    %18 = vector.load %arg1[%c0_8, %c0_9, %c2, %c0_10] : memref<1x18x18x128xbf16, #tpu.memory_space<vmem>>, vector<1x16x16x128xbf16>
    %19 = arith.extf %18 : vector<1x16x16x128xbf16> to vector<1x16x16x128xf32>
    %20 = vector.extract_strided_slice %0 {offsets = [2, 0], sizes = [1, 128], strides = [1, 1]} : vector<9x128xf32> to vector<1x128xf32>
    %21 = vector.shape_cast %20 : vector<1x128xf32> to vector<128xf32>
    %22 = vector.shape_cast %21 : vector<128xf32> to vector<1x1x1x128xf32>
    %23 = vector.broadcast %22 : vector<1x1x1x128xf32> to vector<1x16x16x128xf32>
    %24 = arith.mulf %19, %23 : vector<1x16x16x128xf32>
    %25 = arith.addf %17, %24 : vector<1x16x16x128xf32>
    %c0_11 = arith.constant 0 : index
    %c1_12 = arith.constant 1 : index
    %c0_13 = arith.constant 0 : index
    %c0_14 = arith.constant 0 : index
    %26 = vector.load %arg1[%c0_11, %c1_12, %c0_13, %c0_14] : memref<1x18x18x128xbf16, #tpu.memory_space<vmem>>, vector<1x16x16x128xbf16>
    %27 = arith.extf %26 : vector<1x16x16x128xbf16> to vector<1x16x16x128xf32>
    %28 = vector.extract_strided_slice %0 {offsets = [3, 0], sizes = [1, 128], strides = [1, 1]} : vector<9x128xf32> to vector<1x128xf32>
    %29 = vector.shape_cast %28 : vector<1x128xf32> to vector<128xf32>
    %30 = vector.shape_cast %29 : vector<128xf32> to vector<1x1x1x128xf32>
    %31 = vector.broadcast %30 : vector<1x1x1x128xf32> to vector<1x16x16x128xf32>
    %32 = arith.mulf %27, %31 : vector<1x16x16x128xf32>
    %33 = arith.addf %25, %32 : vector<1x16x16x128xf32>
    %c0_15 = arith.constant 0 : index
    %c1_16 = arith.constant 1 : index
    %c1_17 = arith.constant 1 : index
    %c0_18 = arith.constant 0 : index
    %34 = vector.load %arg1[%c0_15, %c1_16, %c1_17, %c0_18] : memref<1x18x18x128xbf16, #tpu.memory_space<vmem>>, vector<1x16x16x128xbf16>
    %35 = arith.extf %34 : vector<1x16x16x128xbf16> to vector<1x16x16x128xf32>
    %36 = vector.extract_strided_slice %0 {offsets = [4, 0], sizes = [1, 128], strides = [1, 1]} : vector<9x128xf32> to vector<1x128xf32>
    %37 = vector.shape_cast %36 : vector<1x128xf32> to vector<128xf32>
    %38 = vector.shape_cast %37 : vector<128xf32> to vector<1x1x1x128xf32>
    %39 = vector.broadcast %38 : vector<1x1x1x128xf32> to vector<1x16x16x128xf32>
    %40 = arith.mulf %35, %39 : vector<1x16x16x128xf32>
    %41 = arith.addf %33, %40 : vector<1x16x16x128xf32>
    %c0_19 = arith.constant 0 : index
    %c1_20 = arith.constant 1 : index
    %c2_21 = arith.constant 2 : index
    %c0_22 = arith.constant 0 : index
    %42 = vector.load %arg1[%c0_19, %c1_20, %c2_21, %c0_22] : memref<1x18x18x128xbf16, #tpu.memory_space<vmem>>, vector<1x16x16x128xbf16>
    %43 = arith.extf %42 : vector<1x16x16x128xbf16> to vector<1x16x16x128xf32>
    %44 = vector.extract_strided_slice %0 {offsets = [5, 0], sizes = [1, 128], strides = [1, 1]} : vector<9x128xf32> to vector<1x128xf32>
    %45 = vector.shape_cast %44 : vector<1x128xf32> to vector<128xf32>
    %46 = vector.shape_cast %45 : vector<128xf32> to vector<1x1x1x128xf32>
    %47 = vector.broadcast %46 : vector<1x1x1x128xf32> to vector<1x16x16x128xf32>
    %48 = arith.mulf %43, %47 : vector<1x16x16x128xf32>
    %49 = arith.addf %41, %48 : vector<1x16x16x128xf32>
    %c0_23 = arith.constant 0 : index
    %c2_24 = arith.constant 2 : index
    %c0_25 = arith.constant 0 : index
    %c0_26 = arith.constant 0 : index
    %50 = vector.load %arg1[%c0_23, %c2_24, %c0_25, %c0_26] : memref<1x18x18x128xbf16, #tpu.memory_space<vmem>>, vector<1x16x16x128xbf16>
    %51 = arith.extf %50 : vector<1x16x16x128xbf16> to vector<1x16x16x128xf32>
    %52 = vector.extract_strided_slice %0 {offsets = [6, 0], sizes = [1, 128], strides = [1, 1]} : vector<9x128xf32> to vector<1x128xf32>
    %53 = vector.shape_cast %52 : vector<1x128xf32> to vector<128xf32>
    %54 = vector.shape_cast %53 : vector<128xf32> to vector<1x1x1x128xf32>
    %55 = vector.broadcast %54 : vector<1x1x1x128xf32> to vector<1x16x16x128xf32>
    %56 = arith.mulf %51, %55 : vector<1x16x16x128xf32>
    %57 = arith.addf %49, %56 : vector<1x16x16x128xf32>
    %c0_27 = arith.constant 0 : index
    %c2_28 = arith.constant 2 : index
    %c1_29 = arith.constant 1 : index
    %c0_30 = arith.constant 0 : index
    %58 = vector.load %arg1[%c0_27, %c2_28, %c1_29, %c0_30] : memref<1x18x18x128xbf16, #tpu.memory_space<vmem>>, vector<1x16x16x128xbf16>
    %59 = arith.extf %58 : vector<1x16x16x128xbf16> to vector<1x16x16x128xf32>
    %60 = vector.extract_strided_slice %0 {offsets = [7, 0], sizes = [1, 128], strides = [1, 1]} : vector<9x128xf32> to vector<1x128xf32>
    %61 = vector.shape_cast %60 : vector<1x128xf32> to vector<128xf32>
    %62 = vector.shape_cast %61 : vector<128xf32> to vector<1x1x1x128xf32>
    %63 = vector.broadcast %62 : vector<1x1x1x128xf32> to vector<1x16x16x128xf32>
    %64 = arith.mulf %59, %63 : vector<1x16x16x128xf32>
    %65 = arith.addf %57, %64 : vector<1x16x16x128xf32>
    %c0_31 = arith.constant 0 : index
    %c2_32 = arith.constant 2 : index
    %c2_33 = arith.constant 2 : index
    %c0_34 = arith.constant 0 : index
    %66 = vector.load %arg1[%c0_31, %c2_32, %c2_33, %c0_34] : memref<1x18x18x128xbf16, #tpu.memory_space<vmem>>, vector<1x16x16x128xbf16>
    %67 = arith.extf %66 : vector<1x16x16x128xbf16> to vector<1x16x16x128xf32>
    %68 = vector.extract_strided_slice %0 {offsets = [8, 0], sizes = [1, 128], strides = [1, 1]} : vector<9x128xf32> to vector<1x128xf32>
    %69 = vector.shape_cast %68 : vector<1x128xf32> to vector<128xf32>
    %70 = vector.shape_cast %69 : vector<128xf32> to vector<1x1x1x128xf32>
    %71 = vector.broadcast %70 : vector<1x1x1x128xf32> to vector<1x16x16x128xf32>
    %72 = arith.mulf %67, %71 : vector<1x16x16x128xf32>
    %73 = arith.addf %65, %72 : vector<1x16x16x128xf32>
    %74 = arith.truncf %73 : vector<1x16x16x128xf32> to vector<1x16x16x128xbf16>
    %c0_35 = arith.constant 0 : index
    %c0_36 = arith.constant 0 : index
    %c0_37 = arith.constant 0 : index
    %c0_38 = arith.constant 0 : index
    %75 = vector.load %arg3[%c0_35, %c0_36, %c0_37, %c0_38] : memref<1x16x16x128xbf16, #tpu.memory_space<vmem>>, vector<1x16x16x128xbf16>
    tpu.vector_store %arg3[%c0_35, %c0_36, %c0_37, %c0_38], %74 {strides = array<i32>} : memref<1x16x16x128xbf16, #tpu.memory_space<vmem>>, vector<1x16x16x128xbf16>,
    %cst_39 = arith.constant dense<0.000000e+00> : vector<128xf32>
    %76 = vector.multi_reduction <add>, %73, %cst_39 [0, 1, 2] : vector<1x16x16x128xf32> to vector<128xf32>
    %77 = vector.shape_cast %76 : vector<128xf32> to vector<1x1x128xf32>
    %c0_40 = arith.constant 0 : index
    %c0_41 = arith.constant 0 : index
    %c0_42 = arith.constant 0 : index
    %78 = vector.load %arg4[%c0_40, %c0_41, %c0_42] : memref<1x1x128xf32, #tpu.memory_space<vmem>>, vector<1x1x128xf32>
    tpu.vector_store %arg4[%c0_40, %c0_41, %c0_42], %77 {strides = array<i32>} : memref<1x1x128xf32, #tpu.memory_space<vmem>>, vector<1x1x128xf32>,
    %79 = arith.mulf %73, %73 : vector<1x16x16x128xf32>
    %cst_43 = arith.constant dense<0.000000e+00> : vector<128xf32>
    %80 = vector.multi_reduction <add>, %79, %cst_43 [0, 1, 2] : vector<1x16x16x128xf32> to vector<128xf32>
    %81 = vector.shape_cast %80 : vector<128xf32> to vector<1x1x128xf32>
    %c0_44 = arith.constant 0 : index
    %c0_45 = arith.constant 0 : index
    %c0_46 = arith.constant 0 : index
    %82 = vector.load %arg5[%c0_44, %c0_45, %c0_46] : memref<1x1x128xf32, #tpu.memory_space<vmem>>, vector<1x1x128xf32>
    tpu.vector_store %arg5[%c0_44, %c0_45, %c0_46], %81 {strides = array<i32>} : memref<1x1x128xf32, #tpu.memory_space<vmem>>, vector<1x1x128xf32>,
    return
  }
  func.func @transform_0(%arg0: i32) -> (i32, i32, i32, i32) {
    %c0_i32 = arith.constant 0 : i32
    %c0_i32_0 = arith.constant 0 : i32
    %c0_i32_1 = arith.constant 0 : i32
    %c0_i32_2 = arith.constant 0 : i32
    return %arg0, %c0_i32, %c0_i32_0, %c0_i32_1 : i32, i32, i32, i32
  }
  func.func @transform_1(%arg0: i32) -> (i32, i32) {
    %c0_i32 = arith.constant 0 : i32
    %c0_i32_0 = arith.constant 0 : i32
    %c0_i32_1 = arith.constant 0 : i32
    return %c0_i32, %c0_i32_0 : i32, i32
  }
  func.func @transform_2(%arg0: i32) -> (i32, i32, i32, i32) {
    %c0_i32 = arith.constant 0 : i32
    %c0_i32_0 = arith.constant 0 : i32
    %c0_i32_1 = arith.constant 0 : i32
    %c0_i32_2 = arith.constant 0 : i32
    return %arg0, %c0_i32, %c0_i32_0, %c0_i32_1 : i32, i32, i32, i32
  }
  func.func @transform_3(%arg0: i32) -> (i32, i32, i32) {
    %c0_i32 = arith.constant 0 : i32
    %c0_i32_0 = arith.constant 0 : i32
    %c0_i32_1 = arith.constant 0 : i32
    return %arg0, %c0_i32, %c0_i32_0 : i32, i32, i32
  }
  func.func @transform_4(%arg0: i32) -> (i32, i32, i32) {
    %c0_i32 = arith.constant 0 : i32
    %c0_i32_0 = arith.constant 0 : i32
    %c0_i32_1 = arith.constant 0 : i32
    return %arg0, %c0_i32, %c0_i32_0 : i32, i32, i32
  }
}

module attributes {stable_mosaic.version = 11 : i64} {
  func.func @_mm_stats_kernel(%arg0: i32, %arg1: memref<256x128xbf16, #tpu.memory_space<vmem>>, %arg2: memref<128x64xbf16, #tpu.memory_space<vmem>>, %arg3: memref<256x64xf32, #tpu.memory_space<vmem>>, %arg4: memref<1x1x64xf32, #tpu.memory_space<vmem>>, %arg5: memref<1x1x64xf32, #tpu.memory_space<vmem>>) attributes {dimension_semantics = [#tpu.dimension_semantics<parallel>], iteration_bounds = array<i64: 2>, scalar_prefetch = 0 : i64, scratch_operands = 0 : i64, tpu.core_type = #tpu.core_type<tc>, window_params = [{transform_indices = @transform_0, window_bounds = array<i64: 256, 128>}, {pipeline_mode = #tpu.pipeline_mode<synchronous>, transform_indices = @transform_1, window_bounds = array<i64: 128, 64>}, {transform_indices = @transform_2, window_bounds = array<i64: 256, 64>}, {transform_indices = @transform_3, window_bounds = array<i64: 1, 1, 64>}, {transform_indices = @transform_4, window_bounds = array<i64: 1, 1, 64>}]} {
    %c0 = arith.constant 0 : index
    %c0_0 = arith.constant 0 : index
    %0 = vector.load %arg1[%c0, %c0_0] : memref<256x128xbf16, #tpu.memory_space<vmem>>, vector<256x128xbf16>
    %c0_1 = arith.constant 0 : index
    %c0_2 = arith.constant 0 : index
    %1 = vector.load %arg2[%c0_1, %c0_2] : memref<128x64xbf16, #tpu.memory_space<vmem>>, vector<128x64xbf16>
    %cst = arith.constant dense<0.000000e+00> : vector<256x64xf32>
    %2 = tpu.matmul %0, %1, %cst {dimension_numbers = #tpu.dot_dimension_numbers<[1], [0], [0], [1], [0, 0, 1, 1], [], []>} : vector<256x128xbf16>, vector<128x64xbf16>, vector<256x64xf32> -> vector<256x64xf32>
    %c0_3 = arith.constant 0 : index
    %c0_4 = arith.constant 0 : index
    %3 = vector.load %arg3[%c0_3, %c0_4] : memref<256x64xf32, #tpu.memory_space<vmem>>, vector<256x64xf32>
    tpu.vector_store %arg3[%c0_3, %c0_4], %2 {strides = array<i32>} : memref<256x64xf32, #tpu.memory_space<vmem>>, vector<256x64xf32>,
    %cst_5 = arith.constant dense<0.000000e+00> : vector<64xf32>
    %4 = vector.multi_reduction <add>, %2, %cst_5 [0] : vector<256x64xf32> to vector<64xf32>
    %5 = vector.shape_cast %4 : vector<64xf32> to vector<1x1x64xf32>
    %c0_6 = arith.constant 0 : index
    %c0_7 = arith.constant 0 : index
    %c0_8 = arith.constant 0 : index
    %6 = vector.load %arg4[%c0_6, %c0_7, %c0_8] : memref<1x1x64xf32, #tpu.memory_space<vmem>>, vector<1x1x64xf32>
    tpu.vector_store %arg4[%c0_6, %c0_7, %c0_8], %5 {strides = array<i32>} : memref<1x1x64xf32, #tpu.memory_space<vmem>>, vector<1x1x64xf32>,
    %7 = arith.mulf %2, %2 : vector<256x64xf32>
    %cst_9 = arith.constant dense<0.000000e+00> : vector<64xf32>
    %8 = vector.multi_reduction <add>, %7, %cst_9 [0] : vector<256x64xf32> to vector<64xf32>
    %9 = vector.shape_cast %8 : vector<64xf32> to vector<1x1x64xf32>
    %c0_10 = arith.constant 0 : index
    %c0_11 = arith.constant 0 : index
    %c0_12 = arith.constant 0 : index
    %10 = vector.load %arg5[%c0_10, %c0_11, %c0_12] : memref<1x1x64xf32, #tpu.memory_space<vmem>>, vector<1x1x64xf32>
    tpu.vector_store %arg5[%c0_10, %c0_11, %c0_12], %9 {strides = array<i32>} : memref<1x1x64xf32, #tpu.memory_space<vmem>>, vector<1x1x64xf32>,
    return
  }
  func.func @transform_0(%arg0: i32) -> (i32, i32) {
    %c0_i32 = arith.constant 0 : i32
    %c0_i32_0 = arith.constant 0 : i32
    return %arg0, %c0_i32 : i32, i32
  }
  func.func @transform_1(%arg0: i32) -> (i32, i32) {
    %c0_i32 = arith.constant 0 : i32
    %c0_i32_0 = arith.constant 0 : i32
    %c0_i32_1 = arith.constant 0 : i32
    return %c0_i32, %c0_i32_0 : i32, i32
  }
  func.func @transform_2(%arg0: i32) -> (i32, i32) {
    %c0_i32 = arith.constant 0 : i32
    %c0_i32_0 = arith.constant 0 : i32
    return %arg0, %c0_i32 : i32, i32
  }
  func.func @transform_3(%arg0: i32) -> (i32, i32, i32) {
    %c0_i32 = arith.constant 0 : i32
    %c0_i32_0 = arith.constant 0 : i32
    %c0_i32_1 = arith.constant 0 : i32
    return %arg0, %c0_i32, %c0_i32_0 : i32, i32, i32
  }
  func.func @transform_4(%arg0: i32) -> (i32, i32, i32) {
    %c0_i32 = arith.constant 0 : i32
    %c0_i32_0 = arith.constant 0 : i32
    %c0_i32_1 = arith.constant 0 : i32
    return %arg0, %c0_i32, %c0_i32_0 : i32, i32, i32
  }
}

module attributes {stable_mosaic.version = 11 : i64} {
  func.func @_mm_stats_kernel(%arg0: i32, %arg1: memref<256x32xbf16, #tpu.memory_space<vmem>>, %arg2: memref<32x64xbf16, #tpu.memory_space<vmem>>, %arg3: memref<256x64xf32, #tpu.memory_space<vmem>>, %arg4: memref<1x1x64xf32, #tpu.memory_space<vmem>>, %arg5: memref<1x1x64xf32, #tpu.memory_space<vmem>>) attributes {dimension_semantics = [#tpu.dimension_semantics<parallel>], iteration_bounds = array<i64: 2>, scalar_prefetch = 0 : i64, scratch_operands = 0 : i64, tpu.core_type = #tpu.core_type<tc>, window_params = [{transform_indices = @transform_0, window_bounds = array<i64: 256, 32>}, {pipeline_mode = #tpu.pipeline_mode<synchronous>, transform_indices = @transform_1, window_bounds = array<i64: 32, 64>}, {transform_indices = @transform_2, window_bounds = array<i64: 256, 64>}, {transform_indices = @transform_3, window_bounds = array<i64: 1, 1, 64>}, {transform_indices = @transform_4, window_bounds = array<i64: 1, 1, 64>}]} {
    %c0 = arith.constant 0 : index
    %c0_0 = arith.constant 0 : index
    %0 = vector.load %arg1[%c0, %c0_0] : memref<256x32xbf16, #tpu.memory_space<vmem>>, vector<256x32xbf16>
    %c0_1 = arith.constant 0 : index
    %c0_2 = arith.constant 0 : index
    %1 = vector.load %arg2[%c0_1, %c0_2] : memref<32x64xbf16, #tpu.memory_space<vmem>>, vector<32x64xbf16>
    %cst = arith.constant dense<0.000000e+00> : vector<256x64xf32>
    %2 = tpu.matmul %0, %1, %cst {dimension_numbers = #tpu.dot_dimension_numbers<[1], [0], [0], [1], [0, 0, 1, 1], [], []>} : vector<256x32xbf16>, vector<32x64xbf16>, vector<256x64xf32> -> vector<256x64xf32>
    %c0_3 = arith.constant 0 : index
    %c0_4 = arith.constant 0 : index
    %3 = vector.load %arg3[%c0_3, %c0_4] : memref<256x64xf32, #tpu.memory_space<vmem>>, vector<256x64xf32>
    tpu.vector_store %arg3[%c0_3, %c0_4], %2 {strides = array<i32>} : memref<256x64xf32, #tpu.memory_space<vmem>>, vector<256x64xf32>,
    %cst_5 = arith.constant dense<0.000000e+00> : vector<64xf32>
    %4 = vector.multi_reduction <add>, %2, %cst_5 [0] : vector<256x64xf32> to vector<64xf32>
    %5 = vector.shape_cast %4 : vector<64xf32> to vector<1x1x64xf32>
    %c0_6 = arith.constant 0 : index
    %c0_7 = arith.constant 0 : index
    %c0_8 = arith.constant 0 : index
    %6 = vector.load %arg4[%c0_6, %c0_7, %c0_8] : memref<1x1x64xf32, #tpu.memory_space<vmem>>, vector<1x1x64xf32>
    tpu.vector_store %arg4[%c0_6, %c0_7, %c0_8], %5 {strides = array<i32>} : memref<1x1x64xf32, #tpu.memory_space<vmem>>, vector<1x1x64xf32>,
    %7 = arith.mulf %2, %2 : vector<256x64xf32>
    %cst_9 = arith.constant dense<0.000000e+00> : vector<64xf32>
    %8 = vector.multi_reduction <add>, %7, %cst_9 [0] : vector<256x64xf32> to vector<64xf32>
    %9 = vector.shape_cast %8 : vector<64xf32> to vector<1x1x64xf32>
    %c0_10 = arith.constant 0 : index
    %c0_11 = arith.constant 0 : index
    %c0_12 = arith.constant 0 : index
    %10 = vector.load %arg5[%c0_10, %c0_11, %c0_12] : memref<1x1x64xf32, #tpu.memory_space<vmem>>, vector<1x1x64xf32>
    tpu.vector_store %arg5[%c0_10, %c0_11, %c0_12], %9 {strides = array<i32>} : memref<1x1x64xf32, #tpu.memory_space<vmem>>, vector<1x1x64xf32>,
    return
  }
  func.func @transform_0(%arg0: i32) -> (i32, i32) {
    %c0_i32 = arith.constant 0 : i32
    %c0_i32_0 = arith.constant 0 : i32
    return %arg0, %c0_i32 : i32, i32
  }
  func.func @transform_1(%arg0: i32) -> (i32, i32) {
    %c0_i32 = arith.constant 0 : i32
    %c0_i32_0 = arith.constant 0 : i32
    %c0_i32_1 = arith.constant 0 : i32
    return %c0_i32, %c0_i32_0 : i32, i32
  }
  func.func @transform_2(%arg0: i32) -> (i32, i32) {
    %c0_i32 = arith.constant 0 : i32
    %c0_i32_0 = arith.constant 0 : i32
    return %arg0, %c0_i32 : i32, i32
  }
  func.func @transform_3(%arg0: i32) -> (i32, i32, i32) {
    %c0_i32 = arith.constant 0 : i32
    %c0_i32_0 = arith.constant 0 : i32
    %c0_i32_1 = arith.constant 0 : i32
    return %arg0, %c0_i32, %c0_i32_0 : i32, i32, i32
  }
  func.func @transform_4(%arg0: i32) -> (i32, i32, i32) {
    %c0_i32 = arith.constant 0 : i32
    %c0_i32_0 = arith.constant 0 : i32
    %c0_i32_1 = arith.constant 0 : i32
    return %arg0, %c0_i32, %c0_i32_0 : i32, i32, i32
  }
}

module attributes {stable_mosaic.version = 11 : i64} {
  func.func @_dual_affine_add_kernel(%arg0: i32, %arg1: memref<256x64xf32, #tpu.memory_space<vmem>>, %arg2: memref<1x64xf32, #tpu.memory_space<vmem>>, %arg3: memref<1x64xf32, #tpu.memory_space<vmem>>, %arg4: memref<256x64xf32, #tpu.memory_space<vmem>>, %arg5: memref<1x64xf32, #tpu.memory_space<vmem>>, %arg6: memref<1x64xf32, #tpu.memory_space<vmem>>, %arg7: memref<256x64xf32, #tpu.memory_space<vmem>>) attributes {dimension_semantics = [#tpu.dimension_semantics<parallel>], iteration_bounds = array<i64: 2>, scalar_prefetch = 0 : i64, scratch_operands = 0 : i64, tpu.core_type = #tpu.core_type<tc>, window_params = [{transform_indices = @transform_0, window_bounds = array<i64: 256, 64>}, {pipeline_mode = #tpu.pipeline_mode<synchronous>, transform_indices = @transform_1, window_bounds = array<i64: 1, 64>}, {pipeline_mode = #tpu.pipeline_mode<synchronous>, transform_indices = @transform_2, window_bounds = array<i64: 1, 64>}, {transform_indices = @transform_3, window_bounds = array<i64: 256, 64>}, {pipeline_mode = #tpu.pipeline_mode<synchronous>, transform_indices = @transform_4, window_bounds = array<i64: 1, 64>}, {pipeline_mode = #tpu.pipeline_mode<synchronous>, transform_indices = @transform_5, window_bounds = array<i64: 1, 64>}, {transform_indices = @transform_6, window_bounds = array<i64: 256, 64>}]} {
    %c0 = arith.constant 0 : index
    %c0_0 = arith.constant 0 : index
    %0 = vector.load %arg1[%c0, %c0_0] : memref<256x64xf32, #tpu.memory_space<vmem>>, vector<256x64xf32>
    %c0_1 = arith.constant 0 : index
    %c0_2 = arith.constant 0 : index
    %1 = vector.load %arg2[%c0_1, %c0_2] : memref<1x64xf32, #tpu.memory_space<vmem>>, vector<1x64xf32>
    %2 = vector.broadcast %1 : vector<1x64xf32> to vector<256x64xf32>
    %3 = arith.mulf %0, %2 : vector<256x64xf32>
    %c0_3 = arith.constant 0 : index
    %c0_4 = arith.constant 0 : index
    %4 = vector.load %arg3[%c0_3, %c0_4] : memref<1x64xf32, #tpu.memory_space<vmem>>, vector<1x64xf32>
    %5 = vector.broadcast %4 : vector<1x64xf32> to vector<256x64xf32>
    %6 = arith.addf %3, %5 : vector<256x64xf32>
    %c0_5 = arith.constant 0 : index
    %c0_6 = arith.constant 0 : index
    %7 = vector.load %arg4[%c0_5, %c0_6] : memref<256x64xf32, #tpu.memory_space<vmem>>, vector<256x64xf32>
    %c0_7 = arith.constant 0 : index
    %c0_8 = arith.constant 0 : index
    %8 = vector.load %arg5[%c0_7, %c0_8] : memref<1x64xf32, #tpu.memory_space<vmem>>, vector<1x64xf32>
    %9 = vector.broadcast %8 : vector<1x64xf32> to vector<256x64xf32>
    %10 = arith.mulf %7, %9 : vector<256x64xf32>
    %11 = arith.addf %6, %10 : vector<256x64xf32>
    %c0_9 = arith.constant 0 : index
    %c0_10 = arith.constant 0 : index
    %12 = vector.load %arg6[%c0_9, %c0_10] : memref<1x64xf32, #tpu.memory_space<vmem>>, vector<1x64xf32>
    %13 = vector.broadcast %12 : vector<1x64xf32> to vector<256x64xf32>
    %14 = arith.addf %11, %13 : vector<256x64xf32>
    %c0_11 = arith.constant 0 : index
    %c0_12 = arith.constant 0 : index
    %15 = vector.load %arg7[%c0_11, %c0_12] : memref<256x64xf32, #tpu.memory_space<vmem>>, vector<256x64xf32>
    tpu.vector_store %arg7[%c0_11, %c0_12], %14 {strides = array<i32>} : memref<256x64xf32, #tpu.memory_space<vmem>>, vector<256x64xf32>,
    return
  }
  func.func @transform_0(%arg0: i32) -> (i32, i32) {
    %c0_i32 = arith.constant 0 : i32
    %c0_i32_0 = arith.constant 0 : i32
    return %arg0, %c0_i32 : i32, i32
  }
  func.func @transform_1(%arg0: i32) -> (i32, i32) {
    %c0_i32 = arith.constant 0 : i32
    %c0_i32_0 = arith.constant 0 : i32
    %c0_i32_1 = arith.constant 0 : i32
    return %c0_i32, %c0_i32_0 : i32, i32
  }
  func.func @transform_2(%arg0: i32) -> (i32, i32) {
    %c0_i32 = arith.constant 0 : i32
    %c0_i32_0 = arith.constant 0 : i32
    %c0_i32_1 = arith.constant 0 : i32
    return %c0_i32, %c0_i32_0 : i32, i32
  }
  func.func @transform_3(%arg0: i32) -> (i32, i32) {
    %c0_i32 = arith.constant 0 : i32
    %c0_i32_0 = arith.constant 0 : i32
    return %arg0, %c0_i32 : i32, i32
  }
  func.func @transform_4(%arg0: i32) -> (i32, i32) {
    %c0_i32 = arith.constant 0 : i32
    %c0_i32_0 = arith.constant 0 : i32
    %c0_i32_1 = arith.constant 0 : i32
    return %c0_i32, %c0_i32_0 : i32, i32
  }
  func.func @transform_5(%arg0: i32) -> (i32, i32) {
    %c0_i32 = arith.constant 0 : i32
    %c0_i32_0 = arith.constant 0 : i32
    %c0_i32_1 = arith.constant 0 : i32
    return %c0_i32, %c0_i32_0 : i32, i32
  }
  func.func @transform_6(%arg0: i32) -> (i32, i32) {
    %c0_i32 = arith.constant 0 : i32
    %c0_i32_0 = arith.constant 0 : i32
    return %arg0, %c0_i32 : i32, i32
  }
}

</mosaic_0001>

<llo_original>
// kernel: block_forward.7
$region0: #{block_forward.7}
  #allocation0 [shape = 'u32[]', space=smem, size = 0x4, offset = 0x4, fixed_abs, tag = 'smem constant byte address 0x4 - core index']
  #allocation1 [shape = 'u32[72,128]{1,0:T(1,128)}', space=vmem, size = 0x9000, scoped, tag = 'internal scratch']
  %s0 = inlined_call_operand.vmem [shape: bf16[512,32], index: 0, kind: input, shape index: {}]
  %s1 = inlined_call_operand.vmem [shape: bf16[32,128], index: 1, kind: input, shape index: {}]
  %s2 = inlined_call_operand.vmem [shape: bf16[512,128], index: 2, kind: output, shape index: {0}]
  %s3 = inlined_call_operand.vmem [shape: f32[2,1,128], index: 3, kind: output, shape index: {1}]
  %s4 = inlined_call_operand.vmem [shape: f32[2,1,128], index: 4, kind: output, shape index: {2}]
  %5 = xla_tuple %s2, %s3, %s4
  %s6 = sld [smem:[#allocation0]]
  $region57: #{block_forward.7} parent=0
    _
  %s8 = ssub.s32 1, %s6
  %s9 = scalar_select 0, %s8, %s6
  loop: start=0, step=1, limit=4
  $region2: #{block_forward.7} parent=0 // loop_pre_header
    _
  $region3: #{block_forward.7} parent=0 // loop_header
    %s11 = sphi 0, %s15
    %p12 = scmp.ge.s32.totalorder %s11, 4
    %s21 = sphi 0, %s23
    %s24 = sphi 0, %s21
    %s25 = sphi 0, %s24
    %s41 = sphi 0, %s25
    %s45 = sphi 0, %s45
    %s47 = sphi 0, %s45
    %s48 = sphi 0, %s47
    %s62 = sphi 0, %s48
    %s68 = sphi 0, %s70
    %s71 = sphi 0, %s68
    %s72 = sphi 0, %s71
    %s88 = sphi 0, %s72
    %s94 = sphi 0, %s96
    %s97 = sphi 0, %s94
    %s98 = sphi 0, %s97
    %s114 = sphi 0, %s98
    %s120 = sphi 0, %s122
    %s123 = sphi 0, %s120
    %s124 = sphi 0, %s123
    %s140 = sphi 0, %s124
  $region4: #{block_forward.7} parent=0 // loop_header_branch
    %14 = sbr.rel (%p12) target = $region8
  $region5: #{block_forward.7} parent=0 // loop_body
    %s16 = ssub.s32 %s11, 1
    %s17 = ssub.s32 %s11, 2
    %s18 = sadd.s32 %s11, 1
    %s19 = ssub.s32 %s11, %s18
    %p20 = scmp.eq.s32.totalorder %s19, 0
    %s22 = sadd.s32 %s21, 1
    %s23 = scalar_select %p20, %s21, %s22
    %p26 = pneg %p20
    %p27 = scmp.eq.s32.totalorder %s11, 1
    %p28 = por %p26, %p27
    %p29 = scmp.ne.s32.totalorder %s21, %s24
    %p30 = scmp.eq.s32.totalorder %s11, 0
    %p31 = por %p29, %p30
    %p32 = scmp.ne.s32.totalorder %s21, %s24
    %p33 = scmp.eq.s32.totalorder %s16, 1
    %p34 = por %p32, %p33
    %p35 = scmp.ne.s32.totalorder %s24, %s25
    %p36 = scmp.eq.s32.totalorder %s16, 0
    %p37 = por %p35, %p36
    %p38 = scmp.ne.s32.totalorder %s24, %s25
    %p39 = scmp.eq.s32.totalorder %s17, 1
    %p40 = por %p38, %p39
    %p42 = scmp.ne.s32.totalorder %s25, %s41
    %p43 = scmp.eq.s32.totalorder %s17, 0
    %p44 = por %p42, %p43
    %s46 = sadd.s32 %s45, 1
    %p49 = scmp.eq.s32.totalorder %s11, 1
    %p50 = scmp.ne.s32.totalorder %s45, %s47
    %p51 = scmp.eq.s32.totalorder %s11, 0
    %p52 = por %p50, %p51
    %p53 = scmp.ne.s32.totalorder %s45, %s47
    %p54 = scmp.eq.s32.totalorder %s16, 1
    %p55 = por %p53, %p54
    %p56 = scmp.ne.s32.totalorder %s47, %s48
    %p57 = scmp.eq.s32.totalorder %s16, 0
    %p58 = por %p56, %p57
    %p59 = scmp.ne.s32.totalorder %s47, %s48
    %p60 = scmp.eq.s32.totalorder %s17, 1
    %p61 = por %p59, %p60
    %p63 = scmp.ne.s32.totalorder %s48, %s62
    %p64 = scmp.eq.s32.totalorder %s17, 0
    %p65 = por %p63, %p64
    %s66 = ssub.s32 %s11, %s18
    %p67 = scmp.eq.s32.totalorder %s66, 0
    %s69 = sadd.s32 %s68, 1
    %s70 = scalar_select %p67, %s68, %s69
    %p73 = pneg %p67
    %p74 = scmp.eq.s32.totalorder %s11, 1
    %p75 = por %p73, %p74
    %p76 = scmp.ne.s32.totalorder %s68, %s71
    %p77 = scmp.eq.s32.totalorder %s11, 0
    %p78 = por %p76, %p77
    %p79 = scmp.ne.s32.totalorder %s68, %s71
    %p80 = scmp.eq.s32.totalorder %s16, 1
    %p81 = por %p79, %p80
    %p82 = scmp.ne.s32.totalorder %s71, %s72
    %p83 = scmp.eq.s32.totalorder %s16, 0
    %p84 = por %p82, %p83
    %p85 = scmp.ne.s32.totalorder %s71, %s72
    %p86 = scmp.eq.s32.totalorder %s17, 1
    %p87 = por %p85, %p86
    %p89 = scmp.ne.s32.totalorder %s72, %s88
    %p90 = scmp.eq.s32.totalorder %s17, 0
    %p91 = por %p89, %p90
    %s92 = ssub.s32 %s11, %s18
    %p93 = scmp.eq.s32.totalorder %s92, 0
    %s95 = sadd.s32 %s94, 1
    %s96 = scalar_select %p93, %s94, %s95
    %p99 = pneg %p93
    %p100 = scmp.eq.s32.totalorder %s11, 1
    %p101 = por %p99, %p100
    %p102 = scmp.ne.s32.totalorder %s94, %s97
    %p103 = scmp.eq.s32.totalorder %s11, 0
    %p104 = por %p102, %p103
    %p105 = scmp.ne.s32.totalorder %s94, %s97
    %p106 = scmp.eq.s32.totalorder %s16, 1
    %p107 = por %p105, %p106
    %p108 = scmp.ne.s32.totalorder %s97, %s98
    %p109 = scmp.eq.s32.totalorder %s16, 0
    %p110 = por %p108, %p109
    %p111 = scmp.ne.s32.totalorder %s97, %s98
    %p112 = scmp.eq.s32.totalorder %s17, 1
    %p113 = por %p111, %p112
    %p115 = scmp.ne.s32.totalorder %s98, %s114
    %p116 = scmp.eq.s32.totalorder %s17, 0
    %p117 = por %p115, %p116
    %s118 = ssub.s32 %s11, %s18
    %p119 = scmp.eq.s32.totalorder %s118, 0
    %s121 = sadd.s32 %s120, 1
    %s122 = scalar_select %p119, %s120, %s121
    %p125 = pneg %p119
    %p126 = scmp.eq.s32.totalorder %s11, 1
    %p127 = por %p125, %p126
    %p128 = scmp.ne.s32.totalorder %s120, %s123
    %p129 = scmp.eq.s32.totalorder %s11, 0
    %p130 = por %p128, %p129
    %p131 = scmp.ne.s32.totalorder %s120, %s123
    %p132 = scmp.eq.s32.totalorder %s16, 1
    %p133 = por %p131, %p132
    %p134 = scmp.ne.s32.totalorder %s123, %s124
    %p135 = scmp.eq.s32.totalorder %s16, 0
    %p136 = por %p134, %p135
    %p137 = scmp.ne.s32.totalorder %s123, %s124
    %p138 = scmp.eq.s32.totalorder %s17, 1
    %p139 = por %p137, %p138
    %p141 = scmp.ne.s32.totalorder %s124, %s140
    %p142 = scmp.eq.s32.totalorder %s17, 0
    %p143 = por %p141, %p142
    %p144 = scmp.le.s32.totalorder 1, %s11
    %p145 = scmp.lt.s32.totalorder %s11, 3
    %p146 = pnand %p144, %p145
    %p147 = pneg %p146
    // Predicated region
    $region9: #{block_forward.7} parent=5 // pred_check
      _
    $region10: #{block_forward.7} parent=5 // pred_check_branch
      %149 = sbr.rel (%p146) target = $region12
    $region11: #{block_forward.7} parent=5 // pred_region
      %s150 = ssub.s32 %s11, 1
      // Predicated region
      $region13: #{block_forward.7} parent=11 // pred_check
        %p151 = pneg %p58
      $region14: #{block_forward.7} parent=11 // pred_check_branch
        %153 = sbr.rel (%p151) target = $region16
      $region15: #{block_forward.7} parent=11 // pred_region
        _
      $region16: #{block_forward.7} parent=11 // pred_fallthru
        _
    $region12: #{block_forward.7} parent=5 // pred_fallthru
      _
    %p154 = scmp.lt.s32.totalorder %s11, 2
    // Predicated region
    $region17: #{block_forward.7} parent=5 // pred_check
      %p155 = pneg %p154
    $region18: #{block_forward.7} parent=5 // pred_check_branch
      %157 = sbr.rel (%p155) target = $region20
    $region19: #{block_forward.7} parent=5 // pred_region
      // Predicated region
      $region21: #{block_forward.7} parent=19 // pred_check
        %p158 = pneg %p31
      $region22: #{block_forward.7} parent=19 // pred_check_branch
        %160 = sbr.rel (%p158) target = $region24
      $region23: #{block_forward.7} parent=19 // pred_region
        %s161 = smul.u32 32, %s11
        %p162 = scmp.lt.s32.totalorder %s161, 63
        %s163 = scalar_select %p162, %s161, 63
        %s164 = smul.addr %s163, 4
        %s165 = scalar_lea.vmem %s0, %s164
        %s166 = smul.u32 32, %s11
      $region24: #{block_forward.7} parent=19 // pred_fallthru
        _
    $region20: #{block_forward.7} parent=5 // pred_fallthru
      _
    %p167 = scmp.le.s32.totalorder 1, %s11
    %p168 = scmp.lt.s32.totalorder %s11, 3
    %p169 = pnand %p167, %p168
    %p170 = pneg %p169
    // Predicated region
    $region25: #{block_forward.7} parent=5 // pred_check
      _
    $region26: #{block_forward.7} parent=5 // pred_check_branch
      %172 = sbr.rel (%p169) target = $region28
    $region27: #{block_forward.7} parent=5 // pred_region
      %s173 = ssub.s32 %s11, 1
      %s174 = smul.u32 32, %s16
      %p175 = scmp.lt.s32.totalorder %s174, 63
      %s176 = scalar_select %p175, %s174, 63
      %s177 = smul.addr %s176, 4
      %s178 = scalar_lea.vmem %s0, %s177
      %p179 = pneg %p37
      %p180 = pneg %p34
      %p181 = pneg %p58
      %p182 = pneg %p55
      %p183 = pneg %p84
      %p184 = pneg %p81
      %s185 = smul.u32 32, %s16
      %p186 = scmp.lt.s32.totalorder %s185, 63
      %s187 = scalar_select %p186, %s185, 63
      %s188 = smul.addr %s187, 4
      %s189 = scalar_lea.vmem %s2, %s188
      %p190 = pneg %p110
      %p191 = pneg %p107
      %p192 = scmp.lt.s32.totalorder %s16, 1
      %s193 = scalar_select %p192, %s16, 1
      %s194 = scalar_lea.vmem %s3, %s193
      %p195 = pneg %p136
      %p196 = pneg %p133
      %p197 = scmp.lt.s32.totalorder %s16, 1
      %s198 = scalar_select %p197, %s16, 1
      %s199 = scalar_lea.vmem %s4, %s198
      %s200 = smul.u32 32, %s16
      %p201 = scmp.lt.s32.totalorder %s200, 63
      %s202 = scalar_select %p201, %s200, 63
      %s203 = smul.addr %s202, 4
      %s204 = scalar_lea.vmem %s0, %s203
      %s205 = smul.u32 32, %s16
      %s206 = smul.u32 32, %s16
      %p207 = scmp.lt.s32.totalorder %s206, 63
      %s208 = scalar_select %p207, %s206, 63
      %s209 = smul.addr %s208, 4
      %s210 = scalar_lea.vmem %s2, %s209
      %s211 = smul.u32 32, %s16
      %p212 = scmp.lt.s32.totalorder %s16, 1
      %s213 = scalar_select %p212, %s16, 1
      %s214 = scalar_lea.vmem %s3, %s213
      %p215 = scmp.lt.s32.totalorder %s16, 1
      %s216 = scalar_select %p215, %s16, 1
      %s217 = scalar_lea.vmem %s4, %s216
      %v219 = vld [vmem:[%s204] sm:$0xf]
      %v220 = vld [vmem:[%s204 + $0x4] sm:$0xf]
      %v221 = vld [vmem:[%s204 + $0x8] sm:$0xf]
      %v222 = vld [vmem:[%s204 + $0xc] sm:$0xf]
      %v223 = vld [vmem:[%s204 + $0x10] sm:$0xf]
      %v224 = vld [vmem:[%s204 + $0x14] sm:$0xf]
      %v225 = vld [vmem:[%s204 + $0x18] sm:$0xf]
      %v226 = vld [vmem:[%s204 + $0x1c] sm:$0xf]
      %v227 = vld [vmem:[%s204 + $0x20] sm:$0xf]
      %v228 = vld [vmem:[%s204 + $0x24] sm:$0xf]
      %v229 = vld [vmem:[%s204 + $0x28] sm:$0xf]
      %v230 = vld [vmem:[%s204 + $0x2c] sm:$0xf]
      %v231 = vld [vmem:[%s204 + $0x30] sm:$0xf]
      %v232 = vld [vmem:[%s204 + $0x34] sm:$0xf]
      %v233 = vld [vmem:[%s204 + $0x38] sm:$0xf]
      %v234 = vld [vmem:[%s204 + $0x3c] sm:$0xf]
      %v235 = vld [vmem:[%s204 + $0x40] sm:$0xf]
      %v236 = vld [vmem:[%s204 + $0x44] sm:$0xf]
      %v237 = vld [vmem:[%s204 + $0x48] sm:$0xf]
      %v238 = vld [vmem:[%s204 + $0x4c] sm:$0xf]
      %v239 = vld [vmem:[%s204 + $0x50] sm:$0xf]
      %v240 = vld [vmem:[%s204 + $0x54] sm:$0xf]
      %v241 = vld [vmem:[%s204 + $0x58] sm:$0xf]
      %v242 = vld [vmem:[%s204 + $0x5c] sm:$0xf]
      %v243 = vld [vmem:[%s204 + $0x60] sm:$0xf]
      %v244 = vld [vmem:[%s204 + $0x64] sm:$0xf]
      %v245 = vld [vmem:[%s204 + $0x68] sm:$0xf]
      %v246 = vld [vmem:[%s204 + $0x6c] sm:$0xf]
      %v247 = vld [vmem:[%s204 + $0x70] sm:$0xf]
      %v248 = vld [vmem:[%s204 + $0x74] sm:$0xf]
      %v249 = vld [vmem:[%s204 + $0x78] sm:$0xf]
      %v250 = vld [vmem:[%s204 + $0x7c] sm:$0xf]
      %v251 = vld [vmem:[%s1] sm:$0xf]
      %v252 = vld [vmem:[%s1 + $0x4] sm:$0xf]
      %v253 = vld [vmem:[%s1 + $0x8] sm:$0xf]
      %v254 = vld [vmem:[%s1 + $0xc] sm:$0xf]
      %v287 = vunpack.c.l.b16 %v219
      %v288 = vunpack.c.l.b16 %v220
      %v289 = vunpack.c.l.b16 %v221
      %v290 = vunpack.c.l.b16 %v222
      %v291 = vunpack.c.l.b16 %v223
      %v292 = vunpack.c.l.b16 %v224
      %v293 = vunpack.c.l.b16 %v225
      %v294 = vunpack.c.l.b16 %v226
      %v295 = vunpack.c.l.b16 %v227
      %v296 = vunpack.c.l.b16 %v228
      %v297 = vunpack.c.l.b16 %v229
      %v298 = vunpack.c.l.b16 %v230
      %v299 = vunpack.c.l.b16 %v231
      %v300 = vunpack.c.l.b16 %v232
      %v301 = vunpack.c.l.b16 %v233
      %v302 = vunpack.c.l.b16 %v234
      %v303 = vunpack.c.l.b16 %v235
      %v304 = vunpack.c.l.b16 %v236
      %v305 = vunpack.c.l.b16 %v237
      %v306 = vunpack.c.l.b16 %v238
      %v307 = vunpack.c.l.b16 %v239
      %v308 = vunpack.c.l.b16 %v240
      %v309 = vunpack.c.l.b16 %v241
      %v310 = vunpack.c.l.b16 %v242
      %v311 = vunpack.c.l.b16 %v243
      %v312 = vunpack.c.l.b16 %v244
      %v313 = vunpack.c.l.b16 %v245
      %v314 = vunpack.c.l.b16 %v246
      %v315 = vunpack.c.l.b16 %v247
      %v316 = vunpack.c.l.b16 %v248
      %v317 = vunpack.c.l.b16 %v249
      %v318 = vunpack.c.l.b16 %v250
      %v319 = vpack.c.b16 %v288, %v287
      %v320 = vpack.c.b16 %v290, %v289
      %v321 = vpack.c.b16 %v292, %v291
      %v322 = vpack.c.b16 %v294, %v293
      %v323 = vpack.c.b16 %v296, %v295
      %v324 = vpack.c.b16 %v298, %v297
      %v325 = vpack.c.b16 %v300, %v299
      %v326 = vpack.c.b16 %v302, %v301
      %v327 = vpack.c.b16 %v304, %v303
      %v328 = vpack.c.b16 %v306, %v305
      %v329 = vpack.c.b16 %v308, %v307
      %v330 = vpack.c.b16 %v310, %v309
      %v331 = vpack.c.b16 %v312, %v311
      %v332 = vpack.c.b16 %v314, %v313
      %v333 = vpack.c.b16 %v316, %v315
      %v334 = vpack.c.b16 %v318, %v317
      %v339 = vunpack.c.l.b16 %v251
      %v340 = vunpack.c.l.b16 %v252
      %v341 = vunpack.c.l.b16 %v253
      %v342 = vunpack.c.l.b16 %v254
      %v343 = vpack.c.b16 %v340, %v339
      %v344 = vpack.c.b16 %v342, %v341
      %vm347 = vcmask 261120
      %v349 = vsel %vm347, %v319, 0
      %v352 = vsel %vm347, %v320, 0
      %v355 = vsel %vm347, %v321, 0
      %v358 = vsel %vm347, %v322, 0
      %v361 = vsel %vm347, %v323, 0
      %v364 = vsel %vm347, %v324, 0
      %v367 = vsel %vm347, %v325, 0
      %v370 = vsel %vm347, %v326, 0
      %v373 = vsel %vm347, %v327, 0
      %v376 = vsel %vm347, %v328, 0
      %v379 = vsel %vm347, %v329, 0
      %v382 = vsel %vm347, %v330, 0
      %v385 = vsel %vm347, %v331, 0
      %v388 = vsel %vm347, %v332, 0
      %v391 = vsel %vm347, %v333, 0
      %v394 = vsel %vm347, %v334, 0
      %396 = vmatpush.bf16.msra.mxu0 0
      %397 = vmatpush.bf16.msra.mxu0 0
      %398 = vmatpush.bf16.msra.mxu0 0
      %399 = vmatpush.bf16.msra.mxu0 0
      %400 = vmatpush.bf16.msra.mxu0 0
      %401 = vmatpush.bf16.msra.mxu0 0
      %402 = vmatpush.bf16.msra.mxu0 %v344
      %403 = vmatpush.bf16.msra.mxu0 %v343
      %404 = vmatmul.bf16.gmra.mxu0 %v349
      %v405 = vpop.f32.mrf.mxu0
      %v406 = vadd.f32 0.0, %v405
      %v407 = vpop.f32.mrf.mxu0
      %v408 = vadd.f32 0.0, %v407
      %409 = vmatmul.bf16.gmra.mxu0 %v352
      %v410 = vpop.f32.mrf.mxu0
      %v411 = vadd.f32 0.0, %v410
      %v412 = vpop.f32.mrf.mxu0
      %v413 = vadd.f32 0.0, %v412
      %414 = vmatmul.bf16.gmra.mxu0 %v355
      %v415 = vpop.f32.mrf.mxu0
      %v416 = vadd.f32 0.0, %v415
      %v417 = vpop.f32.mrf.mxu0
      %v418 = vadd.f32 0.0, %v417
      %419 = vmatmul.bf16.gmra.mxu0 %v358
      %v420 = vpop.f32.mrf.mxu0
      %v421 = vadd.f32 0.0, %v420
      %v422 = vpop.f32.mrf.mxu0
      %v423 = vadd.f32 0.0, %v422
      %424 = vmatmul.bf16.gmra.mxu0 %v361
      %v425 = vpop.f32.mrf.mxu0
      %v426 = vadd.f32 0.0, %v425
      %v427 = vpop.f32.mrf.mxu0
      %v428 = vadd.f32 0.0, %v427
      %429 = vmatmul.bf16.gmra.mxu0 %v364
      %v430 = vpop.f32.mrf.mxu0
      %v431 = vadd.f32 0.0, %v430
      %v432 = vpop.f32.mrf.mxu0
      %v433 = vadd.f32 0.0, %v432
      %434 = vmatmul.bf16.gmra.mxu0 %v367
      %v435 = vpop.f32.mrf.mxu0
      %v436 = vadd.f32 0.0, %v435
      %v437 = vpop.f32.mrf.mxu0
      %v438 = vadd.f32 0.0, %v437
      %439 = vmatmul.bf16.gmra.mxu0 %v370
      %v440 = vpop.f32.mrf.mxu0
      %v441 = vadd.f32 0.0, %v440
      %v442 = vpop.f32.mrf.mxu0
      %v443 = vadd.f32 0.0, %v442
      %444 = vmatmul.bf16.gmra.mxu0 %v373
      %v445 = vpop.f32.mrf.mxu0
      %v446 = vadd.f32 0.0, %v445
      %v447 = vpop.f32.mrf.mxu0
      %v448 = vadd.f32 0.0, %v447
      %449 = vmatmul.bf16.gmra.mxu0 %v376
      %v450 = vpop.f32.mrf.mxu0
      %v451 = vadd.f32 0.0, %v450
      %v452 = vpop.f32.mrf.mxu0
      %v453 = vadd.f32 0.0, %v452
      %454 = vmatmul.bf16.gmra.mxu0 %v379
      %v455 = vpop.f32.mrf.mxu0
      %v456 = vadd.f32 0.0, %v455
      %v457 = vpop.f32.mrf.mxu0
      %v458 = vadd.f32 0.0, %v457
      %459 = vmatmul.bf16.gmra.mxu0 %v382
      %v460 = vpop.f32.mrf.mxu0
      %v461 = vadd.f32 0.0, %v460
      %v462 = vpop.f32.mrf.mxu0
      %v463 = vadd.f32 0.0, %v462
      %464 = vmatmul.bf16.gmra.mxu0 %v385
      %v465 = vpop.f32.mrf.mxu0
      %v466 = vadd.f32 0.0, %v465
      %v467 = vpop.f32.mrf.mxu0
      %v468 = vadd.f32 0.0, %v467
      %469 = vmatmul.bf16.gmra.mxu0 %v388
      %v470 = vpop.f32.mrf.mxu0
      %v471 = vadd.f32 0.0, %v470
      %v472 = vpop.f32.mrf.mxu0
      %v473 = vadd.f32 0.0, %v472
      %474 = vmatmul.bf16.gmra.mxu0 %v391
      %v475 = vpop.f32.mrf.mxu0
      %v476 = vadd.f32 0.0, %v475
      %v477 = vpop.f32.mrf.mxu0
      %v478 = vadd.f32 0.0, %v477
      %479 = vmatmul.bf16.gmra.mxu0 %v394
      %v480 = vpop.f32.mrf.mxu0
      %v481 = vadd.f32 0.0, %v480
      %v482 = vpop.f32.mrf.mxu0
      %v483 = vadd.f32 0.0, %v482
      %484 = vdwg.mxu0
      %v485 = vpack.c.bf16 %v406, %v406
      %v486 = vpack.c.bf16 %v408, %v408
      %v487 = vpack.c.bf16 %v411, %v411
      %v488 = vpack.c.bf16 %v413, %v413
      %v489 = vpack.c.bf16 %v416, %v416
      %v490 = vpack.c.bf16 %v418, %v418
      %v491 = vpack.c.bf16 %v421, %v421
      %v492 = vpack.c.bf16 %v423, %v423
      %v493 = vpack.c.bf16 %v426, %v426
      %v494 = vpack.c.bf16 %v428, %v428
      %v495 = vpack.c.bf16 %v431, %v431
      %v496 = vpack.c.bf16 %v433, %v433
      %v497 = vpack.c.bf16 %v436, %v436
      %v498 = vpack.c.bf16 %v438, %v438
      %v499 = vpack.c.bf16 %v441, %v441
      %v500 = vpack.c.bf16 %v443, %v443
      %v501 = vpack.c.bf16 %v446, %v446
      %v502 = vpack.c.bf16 %v448, %v448
      %v503 = vpack.c.bf16 %v451, %v451
      %v504 = vpack.c.bf16 %v453, %v453
      %v505 = vpack.c.bf16 %v456, %v456
      %v506 = vpack.c.bf16 %v458, %v458
      %v507 = vpack.c.bf16 %v461, %v461
      %v508 = vpack.c.bf16 %v463, %v463
      %v509 = vpack.c.bf16 %v466, %v466
      %v510 = vpack.c.bf16 %v468, %v468
      %v511 = vpack.c.bf16 %v471, %v471
      %v512 = vpack.c.bf16 %v473, %v473
      %v513 = vpack.c.bf16 %v476, %v476
      %v514 = vpack.c.bf16 %v478, %v478
      %v515 = vpack.c.bf16 %v481, %v481
      %v516 = vpack.c.bf16 %v483, %v483
      %517 = vst [vmem:[%s210] sm:$0xf] %v485
      %518 = vst [vmem:[%s210 + $0x4] sm:$0xf] %v486
      %519 = vst [vmem:[%s210 + $0x8] sm:$0xf] %v487
      %520 = vst [vmem:[%s210 + $0xc] sm:$0xf] %v488
      %521 = vst [vmem:[%s210 + $0x10] sm:$0xf] %v489
      %522 = vst [vmem:[%s210 + $0x14] sm:$0xf] %v490
      %523 = vst [vmem:[%s210 + $0x18] sm:$0xf] %v491
      %524 = vst [vmem:[%s210 + $0x1c] sm:$0xf] %v492
      %525 = vst [vmem:[%s210 + $0x20] sm:$0xf] %v493
      %526 = vst [vmem:[%s210 + $0x24] sm:$0xf] %v494
      %527 = vst [vmem:[%s210 + $0x28] sm:$0xf] %v495
      %528 = vst [vmem:[%s210 + $0x2c] sm:$0xf] %v496
      %529 = vst [vmem:[%s210 + $0x30] sm:$0xf] %v497
      %530 = vst [vmem:[%s210 + $0x34] sm:$0xf] %v498
      %531 = vst [vmem:[%s210 + $0x38] sm:$0xf] %v499
      %532 = vst [vmem:[%s210 + $0x3c] sm:$0xf] %v500
      %533 = vst [vmem:[%s210 + $0x40] sm:$0xf] %v501
      %534 = vst [vmem:[%s210 + $0x44] sm:$0xf] %v502
      %535 = vst [vmem:[%s210 + $0x48] sm:$0xf] %v503
      %536 = vst [vmem:[%s210 + $0x4c] sm:$0xf] %v504
      %537 = vst [vmem:[%s210 + $0x50] sm:$0xf] %v505
      %538 = vst [vmem:[%s210 + $0x54] sm:$0xf] %v506
      %539 = vst [vmem:[%s210 + $0x58] sm:$0xf] %v507
      %540 = vst [vmem:[%s210 + $0x5c] sm:$0xf] %v508
      %541 = vst [vmem:[%s210 + $0x60] sm:$0xf] %v509
      %542 = vst [vmem:[%s210 + $0x64] sm:$0xf] %v510
      %543 = vst [vmem:[%s210 + $0x68] sm:$0xf] %v511
      %544 = vst [vmem:[%s210 + $0x6c] sm:$0xf] %v512
      %545 = vst [vmem:[%s210 + $0x70] sm:$0xf] %v513
      %546 = vst [vmem:[%s210 + $0x74] sm:$0xf] %v514
      %547 = vst [vmem:[%s210 + $0x78] sm:$0xf] %v515
      %548 = vst [vmem:[%s210 + $0x7c] sm:$0xf] %v516
      %v549 = vadd.f32 %v406, %v408
      %v550 = vadd.f32 %v549, %v411
      %v551 = vadd.f32 %v550, %v413
      %v552 = vadd.f32 %v551, %v416
      %v553 = vadd.f32 %v552, %v418
      %v554 = vadd.f32 %v553, %v421
      %v555 = vadd.f32 %v554, %v423
      %v556 = vadd.f32 %v555, %v426
      %v557 = vadd.f32 %v556, %v428
      %v558 = vadd.f32 %v557, %v431
      %v559 = vadd.f32 %v558, %v433
      %v560 = vadd.f32 %v559, %v436
      %v561 = vadd.f32 %v560, %v438
      %v562 = vadd.f32 %v561, %v441
      %v563 = vadd.f32 %v562, %v443
      %v564 = vadd.f32 %v563, %v446
      %v565 = vadd.f32 %v564, %v448
      %v566 = vadd.f32 %v565, %v451
      %v567 = vadd.f32 %v566, %v453
      %v568 = vadd.f32 %v567, %v456
      %v569 = vadd.f32 %v568, %v458
      %v570 = vadd.f32 %v569, %v461
      %v571 = vadd.f32 %v570, %v463
      %v572 = vadd.f32 %v571, %v466
      %v573 = vadd.f32 %v572, %v468
      %v574 = vadd.f32 %v573, %v471
      %v575 = vadd.f32 %v574, %v473
      %v576 = vadd.f32 %v575, %v476
      %v577 = vadd.f32 %v576, %v478
      %v578 = vadd.f32 %v577, %v481
      %v579 = vadd.f32 %v578, %v483
      %v580 = vrot.slane %v579, 4
      %v581 = vadd.f32 %v579, %v580
      %v582 = vrot.slane %v581, 2
      %v583 = vadd.f32 %v581, %v582
      %v584 = vrot.slane %v583, 1
      %v585 = vadd.f32 %v583, %v584
      %586 = vst [vmem:[%s214] sm:$0x1] %v585
      %v587 = vmul.f32 %v406, %v406
      %v588 = vmul.f32 %v408, %v408
      %v589 = vmul.f32 %v411, %v411
      %v590 = vmul.f32 %v413, %v413
      %v591 = vmul.f32 %v416, %v416
      %v592 = vmul.f32 %v418, %v418
      %v593 = vmul.f32 %v421, %v421
      %v594 = vmul.f32 %v423, %v423
      %v595 = vmul.f32 %v426, %v426
      %v596 = vmul.f32 %v428, %v428
      %v597 = vmul.f32 %v431, %v431
      %v598 = vmul.f32 %v433, %v433
      %v599 = vmul.f32 %v436, %v436
      %v600 = vmul.f32 %v438, %v438
      %v601 = vmul.f32 %v441, %v441
      %v602 = vmul.f32 %v443, %v443
      %v603 = vmul.f32 %v446, %v446
      %v604 = vmul.f32 %v448, %v448
      %v605 = vmul.f32 %v451, %v451
      %v606 = vmul.f32 %v453, %v453
      %v607 = vmul.f32 %v456, %v456
      %v608 = vmul.f32 %v458, %v458
      %v609 = vmul.f32 %v461, %v461
      %v610 = vmul.f32 %v463, %v463
      %v611 = vmul.f32 %v466, %v466
      %v612 = vmul.f32 %v468, %v468
      %v613 = vmul.f32 %v471, %v471
      %v614 = vmul.f32 %v473, %v473
      %v615 = vmul.f32 %v476, %v476
      %v616 = vmul.f32 %v478, %v478
      %v617 = vmul.f32 %v481, %v481
      %v618 = vmul.f32 %v483, %v483
      %v619 = vadd.f32 %v587, %v588
      %v620 = vadd.f32 %v619, %v589
      %v621 = vadd.f32 %v620, %v590
      %v622 = vadd.f32 %v621, %v591
      %v623 = vadd.f32 %v622, %v592
      %v624 = vadd.f32 %v623, %v593
      %v625 = vadd.f32 %v624, %v594
      %v626 = vadd.f32 %v625, %v595
      %v627 = vadd.f32 %v626, %v596
      %v628 = vadd.f32 %v627, %v597
      %v629 = vadd.f32 %v628, %v598
      %v630 = vadd.f32 %v629, %v599
      %v631 = vadd.f32 %v630, %v600
      %v632 = vadd.f32 %v631, %v601
      %v633 = vadd.f32 %v632, %v602
      %v634 = vadd.f32 %v633, %v603
      %v635 = vadd.f32 %v634, %v604
      %v636 = vadd.f32 %v635, %v605
      %v637 = vadd.f32 %v636, %v606
      %v638 = vadd.f32 %v637, %v607
      %v639 = vadd.f32 %v638, %v608
      %v640 = vadd.f32 %v639, %v609
      %v641 = vadd.f32 %v640, %v610
      %v642 = vadd.f32 %v641, %v611
      %v643 = vadd.f32 %v642, %v612
      %v644 = vadd.f32 %v643, %v613
      %v645 = vadd.f32 %v644, %v614
      %v646 = vadd.f32 %v645, %v615
      %v647 = vadd.f32 %v646, %v616
      %v648 = vadd.f32 %v647, %v617
      %v649 = vadd.f32 %v648, %v618
      %v650 = vrot.slane %v649, 4
      %v651 = vadd.f32 %v649, %v650
      %v652 = vrot.slane %v651, 2
      %v653 = vadd.f32 %v651, %v652
      %v654 = vrot.slane %v653, 1
      %v655 = vadd.f32 %v653, %v654
      %656 = vst [vmem:[%s217] sm:$0x1] %v655
      %s657 = smul.u32 32, %s16
      %p658 = scmp.lt.s32.totalorder %s657, 63
      %s659 = scalar_select %p658, %s657, 63
      %s660 = smul.addr %s659, 4
      %s661 = scalar_lea.vmem %s2, %s660
      %p662 = scmp.lt.s32.totalorder %s16, 1
      %s663 = scalar_select %p662, %s16, 1
      %s664 = scalar_lea.vmem %s3, %s663
      %p665 = scmp.lt.s32.totalorder %s16, 1
      %s666 = scalar_select %p665, %s16, 1
      %s667 = scalar_lea.vmem %s4, %s666
      // Predicated region
      $region29: #{block_forward.7} parent=27 // pred_check
        %p668 = pneg %p81
      $region30: #{block_forward.7} parent=27 // pred_check_branch
        %670 = sbr.rel (%p668) target = $region32
      $region31: #{block_forward.7} parent=27 // pred_region
        %s671 = smul.u32 32, %s16
      $region32: #{block_forward.7} parent=27 // pred_fallthru
        _
      // Predicated region
      $region33: #{block_forward.7} parent=27 // pred_check
        %p672 = pneg %p107
      $region34: #{block_forward.7} parent=27 // pred_check_branch
        %674 = sbr.rel (%p672) target = $region36
      $region35: #{block_forward.7} parent=27 // pred_region
        _
      $region36: #{block_forward.7} parent=27 // pred_fallthru
        _
      // Predicated region
      $region37: #{block_forward.7} parent=27 // pred_check
        %p675 = pneg %p133
      $region38: #{block_forward.7} parent=27 // pred_check_branch
        %677 = sbr.rel (%p675) target = $region40
      $region39: #{block_forward.7} parent=27 // pred_region
        _
      $region40: #{block_forward.7} parent=27 // pred_fallthru
        _
    $region28: #{block_forward.7} parent=5 // pred_fallthru
      _
    %p678 = scmp.le.s32.totalorder 2, %s11
    // Predicated region
    $region41: #{block_forward.7} parent=5 // pred_check
      %p679 = pneg %p678
    $region42: #{block_forward.7} parent=5 // pred_check_branch
      %681 = sbr.rel (%p679) target = $region44
    $region43: #{block_forward.7} parent=5 // pred_region
      %s682 = ssub.s32 %s11, 2
      // Predicated region
      $region45: #{block_forward.7} parent=43 // pred_check
        %p683 = pneg %p87
      $region46: #{block_forward.7} parent=43 // pred_check_branch
        %685 = sbr.rel (%p683) target = $region48
      $region47: #{block_forward.7} parent=43 // pred_region
        %s686 = smul.u32 32, %s17
        %p687 = scmp.lt.s32.totalorder %s686, 63
        %s688 = scalar_select %p687, %s686, 63
        %s689 = smul.addr %s688, 4
        %s690 = scalar_lea.vmem %s2, %s689
      $region48: #{block_forward.7} parent=43 // pred_fallthru
        _
      // Predicated region
      $region49: #{block_forward.7} parent=43 // pred_check
        %p691 = pneg %p113
      $region50: #{block_forward.7} parent=43 // pred_check_branch
        %693 = sbr.rel (%p691) target = $region52
      $region51: #{block_forward.7} parent=43 // pred_region
        %p694 = scmp.lt.s32.totalorder %s17, 1
        %s695 = scalar_select %p694, %s17, 1
        %s696 = scalar_lea.vmem %s3, %s695
      $region52: #{block_forward.7} parent=43 // pred_fallthru
        _
      // Predicated region
      $region53: #{block_forward.7} parent=43 // pred_check
        %p697 = pneg %p139
      $region54: #{block_forward.7} parent=43 // pred_check_branch
        %699 = sbr.rel (%p697) target = $region56
      $region55: #{block_forward.7} parent=43 // pred_region
        %p700 = scmp.lt.s32.totalorder %s17, 1
        %s701 = scalar_select %p700, %s17, 1
        %s702 = scalar_lea.vmem %s4, %s701
      $region56: #{block_forward.7} parent=43 // pred_fallthru
        _
    $region44: #{block_forward.7} parent=5 // pred_fallthru
      _
  $region6: #{block_forward.7} parent=0 // loop_footer
    %s15 = sadd.s32 1, %s11
  $region7: #{block_forward.7} parent=0 // loop_footer_branch
    %10 = sbr.rel target = $region3
  $region8: #{block_forward.7} parent=0 // loop_exit
    _

// kernel: block_forward.8
$region0: #{block_forward.8}
  #allocation0 [shape = 'u32[]', space=smem, size = 0x4, offset = 0x4, fixed_abs, tag = 'smem constant byte address 0x4 - core index']
  #allocation1 [shape = 'u32[72,128]{1,0:T(1,128)}', space=vmem, size = 0x9000, scoped, tag = 'internal scratch']
  %s0 = inlined_call_operand.vmem [shape: bf16[512,128], index: 0, kind: input, shape index: {}]
  %s1 = inlined_call_operand.vmem [shape: f32[1,128], index: 1, kind: input, shape index: {}]
  %s2 = inlined_call_operand.vmem [shape: f32[1,128], index: 2, kind: input, shape index: {}]
  %s3 = inlined_call_operand.vmem [shape: bf16[512,128], index: 3, kind: output, shape index: {}]
  %s4 = sld [smem:[#allocation0]]
  $region45: #{block_forward.8} parent=0
    _
  %s6 = ssub.s32 1, %s4
  %s7 = scalar_select 0, %s6, %s4
  loop: start=0, step=1, limit=4
  $region2: #{block_forward.8} parent=0 // loop_pre_header
    _
  $region3: #{block_forward.8} parent=0 // loop_header
    %s9 = sphi 0, %s13
    %p10 = scmp.ge.s32.totalorder %s9, 4
    %s19 = sphi 0, %s21
    %s22 = sphi 0, %s19
    %s23 = sphi 0, %s22
    %s39 = sphi 0, %s23
    %s43 = sphi 0, %s43
    %s45 = sphi 0, %s43
    %s46 = sphi 0, %s45
    %s60 = sphi 0, %s46
    %s64 = sphi 0, %s64
    %s66 = sphi 0, %s64
    %s67 = sphi 0, %s66
    %s81 = sphi 0, %s67
    %s87 = sphi 0, %s89
    %s90 = sphi 0, %s87
    %s91 = sphi 0, %s90
    %s107 = sphi 0, %s91
  $region4: #{block_forward.8} parent=0 // loop_header_branch
    %12 = sbr.rel (%p10) target = $region8
  $region5: #{block_forward.8} parent=0 // loop_body
    %s14 = ssub.s32 %s9, 1
    %s15 = ssub.s32 %s9, 2
    %s16 = sadd.s32 %s9, 1
    %s17 = ssub.s32 %s9, %s16
    %p18 = scmp.eq.s32.totalorder %s17, 0
    %s20 = sadd.s32 %s19, 1
    %s21 = scalar_select %p18, %s19, %s20
    %p24 = pneg %p18
    %p25 = scmp.eq.s32.totalorder %s9, 1
    %p26 = por %p24, %p25
    %p27 = scmp.ne.s32.totalorder %s19, %s22
    %p28 = scmp.eq.s32.totalorder %s9, 0
    %p29 = por %p27, %p28
    %p30 = scmp.ne.s32.totalorder %s19, %s22
    %p31 = scmp.eq.s32.totalorder %s14, 1
    %p32 = por %p30, %p31
    %p33 = scmp.ne.s32.totalorder %s22, %s23
    %p34 = scmp.eq.s32.totalorder %s14, 0
    %p35 = por %p33, %p34
    %p36 = scmp.ne.s32.totalorder %s22, %s23
    %p37 = scmp.eq.s32.totalorder %s15, 1
    %p38 = por %p36, %p37
    %p40 = scmp.ne.s32.totalorder %s23, %s39
    %p41 = scmp.eq.s32.totalorder %s15, 0
    %p42 = por %p40, %p41
    %s44 = sadd.s32 %s43, 1
    %p47 = scmp.eq.s32.totalorder %s9, 1
    %p48 = scmp.ne.s32.totalorder %s43, %s45
    %p49 = scmp.eq.s32.totalorder %s9, 0
    %p50 = por %p48, %p49
    %p51 = scmp.ne.s32.totalorder %s43, %s45
    %p52 = scmp.eq.s32.totalorder %s14, 1
    %p53 = por %p51, %p52
    %p54 = scmp.ne.s32.totalorder %s45, %s46
    %p55 = scmp.eq.s32.totalorder %s14, 0
    %p56 = por %p54, %p55
    %p57 = scmp.ne.s32.totalorder %s45, %s46
    %p58 = scmp.eq.s32.totalorder %s15, 1
    %p59 = por %p57, %p58
    %p61 = scmp.ne.s32.totalorder %s46, %s60
    %p62 = scmp.eq.s32.totalorder %s15, 0
    %p63 = por %p61, %p62
    %s65 = sadd.s32 %s64, 1
    %p68 = scmp.eq.s32.totalorder %s9, 1
    %p69 = scmp.ne.s32.totalorder %s64, %s66
    %p70 = scmp.eq.s32.totalorder %s9, 0
    %p71 = por %p69, %p70
    %p72 = scmp.ne.s32.totalorder %s64, %s66
    %p73 = scmp.eq.s32.totalorder %s14, 1
    %p74 = por %p72, %p73
    %p75 = scmp.ne.s32.totalorder %s66, %s67
    %p76 = scmp.eq.s32.totalorder %s14, 0
    %p77 = por %p75, %p76
    %p78 = scmp.ne.s32.totalorder %s66, %s67
    %p79 = scmp.eq.s32.totalorder %s15, 1
    %p80 = por %p78, %p79
    %p82 = scmp.ne.s32.totalorder %s67, %s81
    %p83 = scmp.eq.s32.totalorder %s15, 0
    %p84 = por %p82, %p83
    %s85 = ssub.s32 %s9, %s16
    %p86 = scmp.eq.s32.totalorder %s85, 0
    %s88 = sadd.s32 %s87, 1
    %s89 = scalar_select %p86, %s87, %s88
    %p92 = pneg %p86
    %p93 = scmp.eq.s32.totalorder %s9, 1
    %p94 = por %p92, %p93
    %p95 = scmp.ne.s32.totalorder %s87, %s90
    %p96 = scmp.eq.s32.totalorder %s9, 0
    %p97 = por %p95, %p96
    %p98 = scmp.ne.s32.totalorder %s87, %s90
    %p99 = scmp.eq.s32.totalorder %s14, 1
    %p100 = por %p98, %p99
    %p101 = scmp.ne.s32.totalorder %s90, %s91
    %p102 = scmp.eq.s32.totalorder %s14, 0
    %p103 = por %p101, %p102
    %p104 = scmp.ne.s32.totalorder %s90, %s91
    %p105 = scmp.eq.s32.totalorder %s15, 1
    %p106 = por %p104, %p105
    %p108 = scmp.ne.s32.totalorder %s91, %s107
    %p109 = scmp.eq.s32.totalorder %s15, 0
    %p110 = por %p108, %p109
    %p111 = scmp.le.s32.totalorder 1, %s9
    %p112 = scmp.lt.s32.totalorder %s9, 3
    %p113 = pnand %p111, %p112
    %p114 = pneg %p113
    // Predicated region
    $region9: #{block_forward.8} parent=5 // pred_check
      _
    $region10: #{block_forward.8} parent=5 // pred_check_branch
      %116 = sbr.rel (%p113) target = $region12
    $region11: #{block_forward.8} parent=5 // pred_region
      %s117 = ssub.s32 %s9, 1
      // Predicated region
      $region13: #{block_forward.8} parent=11 // pred_check
        %p118 = pneg %p56
      $region14: #{block_forward.8} parent=11 // pred_check_branch
        %120 = sbr.rel (%p118) target = $region16
      $region15: #{block_forward.8} parent=11 // pred_region
        _
      $region16: #{block_forward.8} parent=11 // pred_fallthru
        _
      // Predicated region
      $region17: #{block_forward.8} parent=11 // pred_check
        %p121 = pneg %p77
      $region18: #{block_forward.8} parent=11 // pred_check_branch
        %123 = sbr.rel (%p121) target = $region20
      $region19: #{block_forward.8} parent=11 // pred_region
        _
      $region20: #{block_forward.8} parent=11 // pred_fallthru
        _
    $region12: #{block_forward.8} parent=5 // pred_fallthru
      _
    %p124 = scmp.lt.s32.totalorder %s9, 2
    // Predicated region
    $region21: #{block_forward.8} parent=5 // pred_check
      %p125 = pneg %p124
    $region22: #{block_forward.8} parent=5 // pred_check_branch
      %127 = sbr.rel (%p125) target = $region24
    $region23: #{block_forward.8} parent=5 // pred_region
      // Predicated region
      $region25: #{block_forward.8} parent=23 // pred_check
        %p128 = pneg %p29
      $region26: #{block_forward.8} parent=23 // pred_check_branch
        %130 = sbr.rel (%p128) target = $region28
      $region27: #{block_forward.8} parent=23 // pred_region
        %s131 = smul.u32 32, %s9
        %p132 = scmp.lt.s32.totalorder %s131, 63
        %s133 = scalar_select %p132, %s131, 63
        %s134 = smul.addr %s133, 4
        %s135 = scalar_lea.vmem %s0, %s134
        %s136 = smul.u32 32, %s9
      $region28: #{block_forward.8} parent=23 // pred_fallthru
        _
    $region24: #{block_forward.8} parent=5 // pred_fallthru
      _
    %p137 = scmp.le.s32.totalorder 1, %s9
    %p138 = scmp.lt.s32.totalorder %s9, 3
    %p139 = pnand %p137, %p138
    %p140 = pneg %p139
    // Predicated region
    $region29: #{block_forward.8} parent=5 // pred_check
      _
    $region30: #{block_forward.8} parent=5 // pred_check_branch
      %142 = sbr.rel (%p139) target = $region32
    $region31: #{block_forward.8} parent=5 // pred_region
      %s143 = ssub.s32 %s9, 1
      %s144 = smul.u32 32, %s14
      %p145 = scmp.lt.s32.totalorder %s144, 63
      %s146 = scalar_select %p145, %s144, 63
      %s147 = smul.addr %s146, 4
      %s148 = scalar_lea.vmem %s0, %s147
      %p149 = pneg %p35
      %p150 = pneg %p32
      %p151 = pneg %p56
      %p152 = pneg %p53
      %p153 = pneg %p77
      %p154 = pneg %p74
      %p155 = pneg %p103
      %p156 = pneg %p100
      %s157 = smul.u32 32, %s14
      %p158 = scmp.lt.s32.totalorder %s157, 63
      %s159 = scalar_select %p158, %s157, 63
      %s160 = smul.addr %s159, 4
      %s161 = scalar_lea.vmem %s3, %s160
      %s162 = smul.u32 32, %s14
      %p163 = scmp.lt.s32.totalorder %s162, 63
      %s164 = scalar_select %p163, %s162, 63
      %s165 = smul.addr %s164, 4
      %s166 = scalar_lea.vmem %s0, %s165
      %s167 = smul.u32 32, %s14
      %s168 = smul.u32 32, %s14
      %p169 = scmp.lt.s32.totalorder %s168, 63
      %s170 = scalar_select %p169, %s168, 63
      %s171 = smul.addr %s170, 4
      %s172 = scalar_lea.vmem %s3, %s171
      %s173 = smul.u32 32, %s14
      %v174 = vld [vmem:[%s166] sm:$0xf]
      %v175 = vld [vmem:[%s166 + $0x4] sm:$0xf]
      %v176 = vld [vmem:[%s166 + $0x8] sm:$0xf]
      %v177 = vld [vmem:[%s166 + $0xc] sm:$0xf]
      %v178 = vld [vmem:[%s166 + $0x10] sm:$0xf]
      %v179 = vld [vmem:[%s166 + $0x14] sm:$0xf]
      %v180 = vld [vmem:[%s166 + $0x18] sm:$0xf]
      %v181 = vld [vmem:[%s166 + $0x1c] sm:$0xf]
      %v182 = vld [vmem:[%s166 + $0x20] sm:$0xf]
      %v183 = vld [vmem:[%s166 + $0x24] sm:$0xf]
      %v184 = vld [vmem:[%s166 + $0x28] sm:$0xf]
      %v185 = vld [vmem:[%s166 + $0x2c] sm:$0xf]
      %v186 = vld [vmem:[%s166 + $0x30] sm:$0xf]
      %v187 = vld [vmem:[%s166 + $0x34] sm:$0xf]
      %v188 = vld [vmem:[%s166 + $0x38] sm:$0xf]
      %v189 = vld [vmem:[%s166 + $0x3c] sm:$0xf]
      %v190 = vld [vmem:[%s166 + $0x40] sm:$0xf]
      %v191 = vld [vmem:[%s166 + $0x44] sm:$0xf]
      %v192 = vld [vmem:[%s166 + $0x48] sm:$0xf]
      %v193 = vld [vmem:[%s166 + $0x4c] sm:$0xf]
      %v194 = vld [vmem:[%s166 + $0x50] sm:$0xf]
      %v195 = vld [vmem:[%s166 + $0x54] sm:$0xf]
      %v196 = vld [vmem:[%s166 + $0x58] sm:$0xf]
      %v197 = vld [vmem:[%s166 + $0x5c] sm:$0xf]
      %v198 = vld [vmem:[%s166 + $0x60] sm:$0xf]
      %v199 = vld [vmem:[%s166 + $0x64] sm:$0xf]
      %v200 = vld [vmem:[%s166 + $0x68] sm:$0xf]
      %v201 = vld [vmem:[%s166 + $0x6c] sm:$0xf]
      %v202 = vld [vmem:[%s166 + $0x70] sm:$0xf]
      %v203 = vld [vmem:[%s166 + $0x74] sm:$0xf]
      %v204 = vld [vmem:[%s166 + $0x78] sm:$0xf]
      %v205 = vld [vmem:[%s166 + $0x7c] sm:$0xf]
      %v206 = vunpack.c.l.bf16 %v174
      %v207 = vunpack.c.l.bf16 %v175
      %v208 = vunpack.c.l.bf16 %v176
      %v209 = vunpack.c.l.bf16 %v177
      %v210 = vunpack.c.l.bf16 %v178
      %v211 = vunpack.c.l.bf16 %v179
      %v212 = vunpack.c.l.bf16 %v180
      %v213 = vunpack.c.l.bf16 %v181
      %v214 = vunpack.c.l.bf16 %v182
      %v215 = vunpack.c.l.bf16 %v183
      %v216 = vunpack.c.l.bf16 %v184
      %v217 = vunpack.c.l.bf16 %v185
      %v218 = vunpack.c.l.bf16 %v186
      %v219 = vunpack.c.l.bf16 %v187
      %v220 = vunpack.c.l.bf16 %v188
      %v221 = vunpack.c.l.bf16 %v189
      %v222 = vunpack.c.l.bf16 %v190
      %v223 = vunpack.c.l.bf16 %v191
      %v224 = vunpack.c.l.bf16 %v192
      %v225 = vunpack.c.l.bf16 %v193
      %v226 = vunpack.c.l.bf16 %v194
      %v227 = vunpack.c.l.bf16 %v195
      %v228 = vunpack.c.l.bf16 %v196
      %v229 = vunpack.c.l.bf16 %v197
      %v230 = vunpack.c.l.bf16 %v198
      %v231 = vunpack.c.l.bf16 %v199
      %v232 = vunpack.c.l.bf16 %v200
      %v233 = vunpack.c.l.bf16 %v201
      %v234 = vunpack.c.l.bf16 %v202
      %v235 = vunpack.c.l.bf16 %v203
      %v236 = vunpack.c.l.bf16 %v204
      %v237 = vunpack.c.l.bf16 %v205
      %v238 = vld [vmem:[%s1] sm:$0x1]
      %v240 = vperm.slane %v238, 0
      %v242 = vmul.f32 %v206, %v240
      %v243 = vmul.f32 %v207, %v240
      %v244 = vmul.f32 %v208, %v240
      %v245 = vmul.f32 %v209, %v240
      %v246 = vmul.f32 %v210, %v240
      %v247 = vmul.f32 %v211, %v240
      %v248 = vmul.f32 %v212, %v240
      %v249 = vmul.f32 %v213, %v240
      %v250 = vmul.f32 %v214, %v240
      %v251 = vmul.f32 %v215, %v240
      %v252 = vmul.f32 %v216, %v240
      %v253 = vmul.f32 %v217, %v240
      %v254 = vmul.f32 %v218, %v240
      %v255 = vmul.f32 %v219, %v240
      %v256 = vmul.f32 %v220, %v240
      %v257 = vmul.f32 %v221, %v240
      %v258 = vmul.f32 %v222, %v240
      %v259 = vmul.f32 %v223, %v240
      %v260 = vmul.f32 %v224, %v240
      %v261 = vmul.f32 %v225, %v240
      %v262 = vmul.f32 %v226, %v240
      %v263 = vmul.f32 %v227, %v240
      %v264 = vmul.f32 %v228, %v240
      %v265 = vmul.f32 %v229, %v240
      %v266 = vmul.f32 %v230, %v240
      %v267 = vmul.f32 %v231, %v240
      %v268 = vmul.f32 %v232, %v240
      %v269 = vmul.f32 %v233, %v240
      %v270 = vmul.f32 %v234, %v240
      %v271 = vmul.f32 %v235, %v240
      %v272 = vmul.f32 %v236, %v240
      %v273 = vmul.f32 %v237, %v240
      %v274 = vld [vmem:[%s2] sm:$0x1]
      %v276 = vperm.slane %v274, 0
      %v278 = vadd.f32 %v242, %v276
      %v279 = vadd.f32 %v243, %v276
      %v280 = vadd.f32 %v244, %v276
      %v281 = vadd.f32 %v245, %v276
      %v282 = vadd.f32 %v246, %v276
      %v283 = vadd.f32 %v247, %v276
      %v284 = vadd.f32 %v248, %v276
      %v285 = vadd.f32 %v249, %v276
      %v286 = vadd.f32 %v250, %v276
      %v287 = vadd.f32 %v251, %v276
      %v288 = vadd.f32 %v252, %v276
      %v289 = vadd.f32 %v253, %v276
      %v290 = vadd.f32 %v254, %v276
      %v291 = vadd.f32 %v255, %v276
      %v292 = vadd.f32 %v256, %v276
      %v293 = vadd.f32 %v257, %v276
      %v294 = vadd.f32 %v258, %v276
      %v295 = vadd.f32 %v259, %v276
      %v296 = vadd.f32 %v260, %v276
      %v297 = vadd.f32 %v261, %v276
      %v298 = vadd.f32 %v262, %v276
      %v299 = vadd.f32 %v263, %v276
      %v300 = vadd.f32 %v264, %v276
      %v301 = vadd.f32 %v265, %v276
      %v302 = vadd.f32 %v266, %v276
      %v303 = vadd.f32 %v267, %v276
      %v304 = vadd.f32 %v268, %v276
      %v305 = vadd.f32 %v269, %v276
      %v306 = vadd.f32 %v270, %v276
      %v307 = vadd.f32 %v271, %v276
      %v308 = vadd.f32 %v272, %v276
      %v309 = vadd.f32 %v273, %v276
      %v310 = vmax.f32 %v278, 0.0
      %v311 = vmax.f32 %v279, 0.0
      %v312 = vmax.f32 %v280, 0.0
      %v313 = vmax.f32 %v281, 0.0
      %v314 = vmax.f32 %v282, 0.0
      %v315 = vmax.f32 %v283, 0.0
      %v316 = vmax.f32 %v284, 0.0
      %v317 = vmax.f32 %v285, 0.0
      %v318 = vmax.f32 %v286, 0.0
      %v319 = vmax.f32 %v287, 0.0
      %v320 = vmax.f32 %v288, 0.0
      %v321 = vmax.f32 %v289, 0.0
      %v322 = vmax.f32 %v290, 0.0
      %v323 = vmax.f32 %v291, 0.0
      %v324 = vmax.f32 %v292, 0.0
      %v325 = vmax.f32 %v293, 0.0
      %v326 = vmax.f32 %v294, 0.0
      %v327 = vmax.f32 %v295, 0.0
      %v328 = vmax.f32 %v296, 0.0
      %v329 = vmax.f32 %v297, 0.0
      %v330 = vmax.f32 %v298, 0.0
      %v331 = vmax.f32 %v299, 0.0
      %v332 = vmax.f32 %v300, 0.0
      %v333 = vmax.f32 %v301, 0.0
      %v334 = vmax.f32 %v302, 0.0
      %v335 = vmax.f32 %v303, 0.0
      %v336 = vmax.f32 %v304, 0.0
      %v337 = vmax.f32 %v305, 0.0
      %v338 = vmax.f32 %v306, 0.0
      %v339 = vmax.f32 %v307, 0.0
      %v340 = vmax.f32 %v308, 0.0
      %v341 = vmax.f32 %v309, 0.0
      %v342 = vpack.c.bf16 %v310, %v310
      %v343 = vpack.c.bf16 %v311, %v311
      %v344 = vpack.c.bf16 %v312, %v312
      %v345 = vpack.c.bf16 %v313, %v313
      %v346 = vpack.c.bf16 %v314, %v314
      %v347 = vpack.c.bf16 %v315, %v315
      %v348 = vpack.c.bf16 %v316, %v316
      %v349 = vpack.c.bf16 %v317, %v317
      %v350 = vpack.c.bf16 %v318, %v318
      %v351 = vpack.c.bf16 %v319, %v319
      %v352 = vpack.c.bf16 %v320, %v320
      %v353 = vpack.c.bf16 %v321, %v321
      %v354 = vpack.c.bf16 %v322, %v322
      %v355 = vpack.c.bf16 %v323, %v323
      %v356 = vpack.c.bf16 %v324, %v324
      %v357 = vpack.c.bf16 %v325, %v325
      %v358 = vpack.c.bf16 %v326, %v326
      %v359 = vpack.c.bf16 %v327, %v327
      %v360 = vpack.c.bf16 %v328, %v328
      %v361 = vpack.c.bf16 %v329, %v329
      %v362 = vpack.c.bf16 %v330, %v330
      %v363 = vpack.c.bf16 %v331, %v331
      %v364 = vpack.c.bf16 %v332, %v332
      %v365 = vpack.c.bf16 %v333, %v333
      %v366 = vpack.c.bf16 %v334, %v334
      %v367 = vpack.c.bf16 %v335, %v335
      %v368 = vpack.c.bf16 %v336, %v336
      %v369 = vpack.c.bf16 %v337, %v337
      %v370 = vpack.c.bf16 %v338, %v338
      %v371 = vpack.c.bf16 %v339, %v339
      %v372 = vpack.c.bf16 %v340, %v340
      %v373 = vpack.c.bf16 %v341, %v341
      %374 = vst [vmem:[%s172] sm:$0xf] %v342
      %375 = vst [vmem:[%s172 + $0x4] sm:$0xf] %v343
      %376 = vst [vmem:[%s172 + $0x8] sm:$0xf] %v344
      %377 = vst [vmem:[%s172 + $0xc] sm:$0xf] %v345
      %378 = vst [vmem:[%s172 + $0x10] sm:$0xf] %v346
      %379 = vst [vmem:[%s172 + $0x14] sm:$0xf] %v347
      %380 = vst [vmem:[%s172 + $0x18] sm:$0xf] %v348
      %381 = vst [vmem:[%s172 + $0x1c] sm:$0xf] %v349
      %382 = vst [vmem:[%s172 + $0x20] sm:$0xf] %v350
      %383 = vst [vmem:[%s172 + $0x24] sm:$0xf] %v351
      %384 = vst [vmem:[%s172 + $0x28] sm:$0xf] %v352
      %385 = vst [vmem:[%s172 + $0x2c] sm:$0xf] %v353
      %386 = vst [vmem:[%s172 + $0x30] sm:$0xf] %v354
      %387 = vst [vmem:[%s172 + $0x34] sm:$0xf] %v355
      %388 = vst [vmem:[%s172 + $0x38] sm:$0xf] %v356
      %389 = vst [vmem:[%s172 + $0x3c] sm:$0xf] %v357
      %390 = vst [vmem:[%s172 + $0x40] sm:$0xf] %v358
      %391 = vst [vmem:[%s172 + $0x44] sm:$0xf] %v359
      %392 = vst [vmem:[%s172 + $0x48] sm:$0xf] %v360
      %393 = vst [vmem:[%s172 + $0x4c] sm:$0xf] %v361
      %394 = vst [vmem:[%s172 + $0x50] sm:$0xf] %v362
      %395 = vst [vmem:[%s172 + $0x54] sm:$0xf] %v363
      %396 = vst [vmem:[%s172 + $0x58] sm:$0xf] %v364
      %397 = vst [vmem:[%s172 + $0x5c] sm:$0xf] %v365
      %398 = vst [vmem:[%s172 + $0x60] sm:$0xf] %v366
      %399 = vst [vmem:[%s172 + $0x64] sm:$0xf] %v367
      %400 = vst [vmem:[%s172 + $0x68] sm:$0xf] %v368
      %401 = vst [vmem:[%s172 + $0x6c] sm:$0xf] %v369
      %402 = vst [vmem:[%s172 + $0x70] sm:$0xf] %v370
      %403 = vst [vmem:[%s172 + $0x74] sm:$0xf] %v371
      %404 = vst [vmem:[%s172 + $0x78] sm:$0xf] %v372
      %405 = vst [vmem:[%s172 + $0x7c] sm:$0xf] %v373
      %s406 = smul.u32 32, %s14
      %p407 = scmp.lt.s32.totalorder %s406, 63
      %s408 = scalar_select %p407, %s406, 63
      %s409 = smul.addr %s408, 4
      %s410 = scalar_lea.vmem %s3, %s409
      // Predicated region
      $region33: #{block_forward.8} parent=31 // pred_check
        %p411 = pneg %p100
      $region34: #{block_forward.8} parent=31 // pred_check_branch
        %413 = sbr.rel (%p411) target = $region36
      $region35: #{block_forward.8} parent=31 // pred_region
        %s414 = smul.u32 32, %s14
      $region36: #{block_forward.8} parent=31 // pred_fallthru
        _
    $region32: #{block_forward.8} parent=5 // pred_fallthru
      _
    %p415 = scmp.le.s32.totalorder 2, %s9
    // Predicated region
    $region37: #{block_forward.8} parent=5 // pred_check
      %p416 = pneg %p415
    $region38: #{block_forward.8} parent=5 // pred_check_branch
      %418 = sbr.rel (%p416) target = $region40
    $region39: #{block_forward.8} parent=5 // pred_region
      %s419 = ssub.s32 %s9, 2
      // Predicated region
      $region41: #{block_forward.8} parent=39 // pred_check
        %p420 = pneg %p106
      $region42: #{block_forward.8} parent=39 // pred_check_branch
        %422 = sbr.rel (%p420) target = $region44
      $region43: #{block_forward.8} parent=39 // pred_region
        %s423 = smul.u32 32, %s15
        %p424 = scmp.lt.s32.totalorder %s423, 63
        %s425 = scalar_select %p424, %s423, 63
        %s426 = smul.addr %s425, 4
        %s427 = scalar_lea.vmem %s3, %s426
      $region44: #{block_forward.8} parent=39 // pred_fallthru
        _
    $region40: #{block_forward.8} parent=5 // pred_fallthru
      _
  $region6: #{block_forward.8} parent=0 // loop_footer
    %s13 = sadd.s32 1, %s9
  $region7: #{block_forward.8} parent=0 // loop_footer_branch
    %8 = sbr.rel target = $region3
  $region8: #{block_forward.8} parent=0 // loop_exit
    _

// kernel: block_forward.11
$region0: #{block_forward.11}
  #allocation0 [shape = 'u32[]', space=smem, size = 0x4, offset = 0x4, fixed_abs, tag = 'smem constant byte address 0x4 - core index']
  #allocation1 [shape = 'u32[72,128]{1,0:T(1,128)}', space=vmem, size = 0x9000, scoped, tag = 'internal scratch']
  %s0 = inlined_call_operand.vmem [shape: bf16[512,128], index: 0, kind: input, shape index: {}]
  %s1 = inlined_call_operand.vmem [shape: bf16[128,64], index: 1, kind: input, shape index: {}]
  %s2 = inlined_call_operand.vmem [shape: f32[512,64], index: 2, kind: output, shape index: {0}]
  %s3 = inlined_call_operand.vmem [shape: f32[2,1,64], index: 3, kind: output, shape index: {1}]
  %s4 = inlined_call_operand.vmem [shape: f32[2,1,64], index: 4, kind: output, shape index: {2}]
  %5 = xla_tuple %s2, %s3, %s4
  %s6 = sld [smem:[#allocation0]]
  $region57: #{block_forward.11} parent=0
    _
  %s8 = ssub.s32 1, %s6
  %s9 = scalar_select 0, %s8, %s6
  loop: start=0, step=1, limit=4
  $region2: #{block_forward.11} parent=0 // loop_pre_header
    _
  $region3: #{block_forward.11} parent=0 // loop_header
    %s11 = sphi 0, %s15
    %p12 = scmp.ge.s32.totalorder %s11, 4
    %s21 = sphi 0, %s23
    %s24 = sphi 0, %s21
    %s25 = sphi 0, %s24
    %s41 = sphi 0, %s25
    %s45 = sphi 0, %s45
    %s47 = sphi 0, %s45
    %s48 = sphi 0, %s47
    %s62 = sphi 0, %s48
    %s68 = sphi 0, %s70
    %s71 = sphi 0, %s68
    %s72 = sphi 0, %s71
    %s88 = sphi 0, %s72
    %s94 = sphi 0, %s96
    %s97 = sphi 0, %s94
    %s98 = sphi 0, %s97
    %s114 = sphi 0, %s98
    %s120 = sphi 0, %s122
    %s123 = sphi 0, %s120
    %s124 = sphi 0, %s123
    %s140 = sphi 0, %s124
  $region4: #{block_forward.11} parent=0 // loop_header_branch
    %14 = sbr.rel (%p12) target = $region8
  $region5: #{block_forward.11} parent=0 // loop_body
    %s16 = ssub.s32 %s11, 1
    %s17 = ssub.s32 %s11, 2
    %s18 = sadd.s32 %s11, 1
    %s19 = ssub.s32 %s11, %s18
    %p20 = scmp.eq.s32.totalorder %s19, 0
    %s22 = sadd.s32 %s21, 1
    %s23 = scalar_select %p20, %s21, %s22
    %p26 = pneg %p20
    %p27 = scmp.eq.s32.totalorder %s11, 1
    %p28 = por %p26, %p27
    %p29 = scmp.ne.s32.totalorder %s21, %s24
    %p30 = scmp.eq.s32.totalorder %s11, 0
    %p31 = por %p29, %p30
    %p32 = scmp.ne.s32.totalorder %s21, %s24
    %p33 = scmp.eq.s32.totalorder %s16, 1
    %p34 = por %p32, %p33
    %p35 = scmp.ne.s32.totalorder %s24, %s25
    %p36 = scmp.eq.s32.totalorder %s16, 0
    %p37 = por %p35, %p36
    %p38 = scmp.ne.s32.totalorder %s24, %s25
    %p39 = scmp.eq.s32.totalorder %s17, 1
    %p40 = por %p38, %p39
    %p42 = scmp.ne.s32.totalorder %s25, %s41
    %p43 = scmp.eq.s32.totalorder %s17, 0
    %p44 = por %p42, %p43
    %s46 = sadd.s32 %s45, 1
    %p49 = scmp.eq.s32.totalorder %s11, 1
    %p50 = scmp.ne.s32.totalorder %s45, %s47
    %p51 = scmp.eq.s32.totalorder %s11, 0
    %p52 = por %p50, %p51
    %p53 = scmp.ne.s32.totalorder %s45, %s47
    %p54 = scmp.eq.s32.totalorder %s16, 1
    %p55 = por %p53, %p54
    %p56 = scmp.ne.s32.totalorder %s47, %s48
    %p57 = scmp.eq.s32.totalorder %s16, 0
    %p58 = por %p56, %p57
    %p59 = scmp.ne.s32.totalorder %s47, %s48
    %p60 = scmp.eq.s32.totalorder %s17, 1
    %p61 = por %p59, %p60
    %p63 = scmp.ne.s32.totalorder %s48, %s62
    %p64 = scmp.eq.s32.totalorder %s17, 0
    %p65 = por %p63, %p64
    %s66 = ssub.s32 %s11, %s18
    %p67 = scmp.eq.s32.totalorder %s66, 0
    %s69 = sadd.s32 %s68, 1
    %s70 = scalar_select %p67, %s68, %s69
    %p73 = pneg %p67
    %p74 = scmp.eq.s32.totalorder %s11, 1
    %p75 = por %p73, %p74
    %p76 = scmp.ne.s32.totalorder %s68, %s71
    %p77 = scmp.eq.s32.totalorder %s11, 0
    %p78 = por %p76, %p77
    %p79 = scmp.ne.s32.totalorder %s68, %s71
    %p80 = scmp.eq.s32.totalorder %s16, 1
    %p81 = por %p79, %p80
    %p82 = scmp.ne.s32.totalorder %s71, %s72
    %p83 = scmp.eq.s32.totalorder %s16, 0
    %p84 = por %p82, %p83
    %p85 = scmp.ne.s32.totalorder %s71, %s72
    %p86 = scmp.eq.s32.totalorder %s17, 1
    %p87 = por %p85, %p86
    %p89 = scmp.ne.s32.totalorder %s72, %s88
    %p90 = scmp.eq.s32.totalorder %s17, 0
    %p91 = por %p89, %p90
    %s92 = ssub.s32 %s11, %s18
    %p93 = scmp.eq.s32.totalorder %s92, 0
    %s95 = sadd.s32 %s94, 1
    %s96 = scalar_select %p93, %s94, %s95
    %p99 = pneg %p93
    %p100 = scmp.eq.s32.totalorder %s11, 1
    %p101 = por %p99, %p100
    %p102 = scmp.ne.s32.totalorder %s94, %s97
    %p103 = scmp.eq.s32.totalorder %s11, 0
    %p104 = por %p102, %p103
    %p105 = scmp.ne.s32.totalorder %s94, %s97
    %p106 = scmp.eq.s32.totalorder %s16, 1
    %p107 = por %p105, %p106
    %p108 = scmp.ne.s32.totalorder %s97, %s98
    %p109 = scmp.eq.s32.totalorder %s16, 0
    %p110 = por %p108, %p109
    %p111 = scmp.ne.s32.totalorder %s97, %s98
    %p112 = scmp.eq.s32.totalorder %s17, 1
    %p113 = por %p111, %p112
    %p115 = scmp.ne.s32.totalorder %s98, %s114
    %p116 = scmp.eq.s32.totalorder %s17, 0
    %p117 = por %p115, %p116
    %s118 = ssub.s32 %s11, %s18
    %p119 = scmp.eq.s32.totalorder %s118, 0
    %s121 = sadd.s32 %s120, 1
    %s122 = scalar_select %p119, %s120, %s121
    %p125 = pneg %p119
    %p126 = scmp.eq.s32.totalorder %s11, 1
    %p127 = por %p125, %p126
    %p128 = scmp.ne.s32.totalorder %s120, %s123
    %p129 = scmp.eq.s32.totalorder %s11, 0
    %p130 = por %p128, %p129
    %p131 = scmp.ne.s32.totalorder %s120, %s123
    %p132 = scmp.eq.s32.totalorder %s16, 1
    %p133 = por %p131, %p132
    %p134 = scmp.ne.s32.totalorder %s123, %s124
    %p135 = scmp.eq.s32.totalorder %s16, 0
    %p136 = por %p134, %p135
    %p137 = scmp.ne.s32.totalorder %s123, %s124
    %p138 = scmp.eq.s32.totalorder %s17, 1
    %p139 = por %p137, %p138
    %p141 = scmp.ne.s32.totalorder %s124, %s140
    %p142 = scmp.eq.s32.totalorder %s17, 0
    %p143 = por %p141, %p142
    %p144 = scmp.le.s32.totalorder 1, %s11
    %p145 = scmp.lt.s32.totalorder %s11, 3
    %p146 = pnand %p144, %p145
    %p147 = pneg %p146
    // Predicated region
    $region9: #{block_forward.11} parent=5 // pred_check
      _
    $region10: #{block_forward.11} parent=5 // pred_check_branch
      %149 = sbr.rel (%p146) target = $region12
    $region11: #{block_forward.11} parent=5 // pred_region
      %s150 = ssub.s32 %s11, 1
      // Predicated region
      $region13: #{block_forward.11} parent=11 // pred_check
        %p151 = pneg %p58
      $region14: #{block_forward.11} parent=11 // pred_check_branch
        %153 = sbr.rel (%p151) target = $region16
      $region15: #{block_forward.11} parent=11 // pred_region
        _
      $region16: #{block_forward.11} parent=11 // pred_fallthru
        _
    $region12: #{block_forward.11} parent=5 // pred_fallthru
      _
    %p154 = scmp.lt.s32.totalorder %s11, 2
    // Predicated region
    $region17: #{block_forward.11} parent=5 // pred_check
      %p155 = pneg %p154
    $region18: #{block_forward.11} parent=5 // pred_check_branch
      %157 = sbr.rel (%p155) target = $region20
    $region19: #{block_forward.11} parent=5 // pred_region
      // Predicated region
      $region21: #{block_forward.11} parent=19 // pred_check
        %p158 = pneg %p31
      $region22: #{block_forward.11} parent=19 // pred_check_branch
        %160 = sbr.rel (%p158) target = $region24
      $region23: #{block_forward.11} parent=19 // pred_region
        %s161 = smul.u32 32, %s11
        %p162 = scmp.lt.s32.totalorder %s161, 63
        %s163 = scalar_select %p162, %s161, 63
        %s164 = smul.addr %s163, 4
        %s165 = scalar_lea.vmem %s0, %s164
        %s166 = smul.u32 32, %s11
      $region24: #{block_forward.11} parent=19 // pred_fallthru
        _
    $region20: #{block_forward.11} parent=5 // pred_fallthru
      _
    %p167 = scmp.le.s32.totalorder 1, %s11
    %p168 = scmp.lt.s32.totalorder %s11, 3
    %p169 = pnand %p167, %p168
    %p170 = pneg %p169
    // Predicated region
    $region25: #{block_forward.11} parent=5 // pred_check
      _
    $region26: #{block_forward.11} parent=5 // pred_check_branch
      %172 = sbr.rel (%p169) target = $region28
    $region27: #{block_forward.11} parent=5 // pred_region
      %s173 = ssub.s32 %s11, 1
      %s174 = smul.u32 32, %s16
      %p175 = scmp.lt.s32.totalorder %s174, 63
      %s176 = scalar_select %p175, %s174, 63
      %s177 = smul.addr %s176, 4
      %s178 = scalar_lea.vmem %s0, %s177
      %p179 = pneg %p37
      %p180 = pneg %p34
      %p181 = pneg %p58
      %p182 = pneg %p55
      %p183 = pneg %p84
      %p184 = pneg %p81
      %s185 = smul.u32 32, %s16
      %p186 = scmp.lt.s32.totalorder %s185, 63
      %s187 = scalar_select %p186, %s185, 63
      %s188 = smul.addr %s187, 8
      %s189 = scalar_lea.vmem %s2, %s188
      %p190 = pneg %p110
      %p191 = pneg %p107
      %p192 = scmp.lt.s32.totalorder %s16, 1
      %s193 = scalar_select %p192, %s16, 1
      %s194 = scalar_lea.vmem %s3, %s193
      %p195 = pneg %p136
      %p196 = pneg %p133
      %p197 = scmp.lt.s32.totalorder %s16, 1
      %s198 = scalar_select %p197, %s16, 1
      %s199 = scalar_lea.vmem %s4, %s198
      %s200 = smul.u32 32, %s16
      %p201 = scmp.lt.s32.totalorder %s200, 63
      %s202 = scalar_select %p201, %s200, 63
      %s203 = smul.addr %s202, 4
      %s204 = scalar_lea.vmem %s0, %s203
      %s205 = smul.u32 32, %s16
      %s206 = smul.u32 32, %s16
      %p207 = scmp.lt.s32.totalorder %s206, 63
      %s208 = scalar_select %p207, %s206, 63
      %s209 = smul.addr %s208, 8
      %s210 = scalar_lea.vmem %s2, %s209
      %s211 = smul.u32 32, %s16
      %p212 = scmp.lt.s32.totalorder %s16, 1
      %s213 = scalar_select %p212, %s16, 1
      %s214 = scalar_lea.vmem %s3, %s213
      %p215 = scmp.lt.s32.totalorder %s16, 1
      %s216 = scalar_select %p215, %s16, 1
      %s217 = scalar_lea.vmem %s4, %s216
      %v218 = vld [vmem:[%s204] sm:$0xf]
      %v219 = vld [vmem:[%s204 + $0x4] sm:$0xf]
      %v220 = vld [vmem:[%s204 + $0x8] sm:$0xf]
      %v221 = vld [vmem:[%s204 + $0xc] sm:$0xf]
      %v222 = vld [vmem:[%s204 + $0x10] sm:$0xf]
      %v223 = vld [vmem:[%s204 + $0x14] sm:$0xf]
      %v224 = vld [vmem:[%s204 + $0x18] sm:$0xf]
      %v225 = vld [vmem:[%s204 + $0x1c] sm:$0xf]
      %v226 = vld [vmem:[%s204 + $0x20] sm:$0xf]
      %v227 = vld [vmem:[%s204 + $0x24] sm:$0xf]
      %v228 = vld [vmem:[%s204 + $0x28] sm:$0xf]
      %v229 = vld [vmem:[%s204 + $0x2c] sm:$0xf]
      %v230 = vld [vmem:[%s204 + $0x30] sm:$0xf]
      %v231 = vld [vmem:[%s204 + $0x34] sm:$0xf]
      %v232 = vld [vmem:[%s204 + $0x38] sm:$0xf]
      %v233 = vld [vmem:[%s204 + $0x3c] sm:$0xf]
      %v234 = vld [vmem:[%s204 + $0x40] sm:$0xf]
      %v235 = vld [vmem:[%s204 + $0x44] sm:$0xf]
      %v236 = vld [vmem:[%s204 + $0x48] sm:$0xf]
      %v237 = vld [vmem:[%s204 + $0x4c] sm:$0xf]
      %v238 = vld [vmem:[%s204 + $0x50] sm:$0xf]
      %v239 = vld [vmem:[%s204 + $0x54] sm:$0xf]
      %v240 = vld [vmem:[%s204 + $0x58] sm:$0xf]
      %v241 = vld [vmem:[%s204 + $0x5c] sm:$0xf]
      %v242 = vld [vmem:[%s204 + $0x60] sm:$0xf]
      %v243 = vld [vmem:[%s204 + $0x64] sm:$0xf]
      %v244 = vld [vmem:[%s204 + $0x68] sm:$0xf]
      %v245 = vld [vmem:[%s204 + $0x6c] sm:$0xf]
      %v246 = vld [vmem:[%s204 + $0x70] sm:$0xf]
      %v247 = vld [vmem:[%s204 + $0x74] sm:$0xf]
      %v248 = vld [vmem:[%s204 + $0x78] sm:$0xf]
      %v249 = vld [vmem:[%s204 + $0x7c] sm:$0xf]
      %v250 = vld [vmem:[%s1] sm:$0xf]
      %v251 = vld [vmem:[%s1 + $0x4] sm:$0xf]
      %v252 = vld [vmem:[%s1 + $0x8] sm:$0xf]
      %v253 = vld [vmem:[%s1 + $0xc] sm:$0xf]
      %v254 = vld [vmem:[%s1 + $0x10] sm:$0xf]
      %v255 = vld [vmem:[%s1 + $0x14] sm:$0xf]
      %v256 = vld [vmem:[%s1 + $0x18] sm:$0xf]
      %v257 = vld [vmem:[%s1 + $0x1c] sm:$0xf]
      %v258 = vld [vmem:[%s1 + $0x20] sm:$0xf]
      %v259 = vld [vmem:[%s1 + $0x24] sm:$0xf]
      %v260 = vld [vmem:[%s1 + $0x28] sm:$0xf]
      %v261 = vld [vmem:[%s1 + $0x2c] sm:$0xf]
      %v262 = vld [vmem:[%s1 + $0x30] sm:$0xf]
      %v263 = vld [vmem:[%s1 + $0x34] sm:$0xf]
      %v264 = vld [vmem:[%s1 + $0x38] sm:$0xf]
      %v265 = vld [vmem:[%s1 + $0x3c] sm:$0xf]
      %v298 = vunpack.c.l.b16 %v218
      %v299 = vunpack.c.l.b16 %v219
      %v300 = vunpack.c.l.b16 %v220
      %v301 = vunpack.c.l.b16 %v221
      %v302 = vunpack.c.l.b16 %v222
      %v303 = vunpack.c.l.b16 %v223
      %v304 = vunpack.c.l.b16 %v224
      %v305 = vunpack.c.l.b16 %v225
      %v306 = vunpack.c.l.b16 %v226
      %v307 = vunpack.c.l.b16 %v227
      %v308 = vunpack.c.l.b16 %v228
      %v309 = vunpack.c.l.b16 %v229
      %v310 = vunpack.c.l.b16 %v230
      %v311 = vunpack.c.l.b16 %v231
      %v312 = vunpack.c.l.b16 %v232
      %v313 = vunpack.c.l.b16 %v233
      %v314 = vunpack.c.l.b16 %v234
      %v315 = vunpack.c.l.b16 %v235
      %v316 = vunpack.c.l.b16 %v236
      %v317 = vunpack.c.l.b16 %v237
      %v318 = vunpack.c.l.b16 %v238
      %v319 = vunpack.c.l.b16 %v239
      %v320 = vunpack.c.l.b16 %v240
      %v321 = vunpack.c.l.b16 %v241
      %v322 = vunpack.c.l.b16 %v242
      %v323 = vunpack.c.l.b16 %v243
      %v324 = vunpack.c.l.b16 %v244
      %v325 = vunpack.c.l.b16 %v245
      %v326 = vunpack.c.l.b16 %v246
      %v327 = vunpack.c.l.b16 %v247
      %v328 = vunpack.c.l.b16 %v248
      %v329 = vunpack.c.l.b16 %v249
      %v330 = vpack.c.b16 %v299, %v298
      %v331 = vpack.c.b16 %v301, %v300
      %v332 = vpack.c.b16 %v303, %v302
      %v333 = vpack.c.b16 %v305, %v304
      %v334 = vpack.c.b16 %v307, %v306
      %v335 = vpack.c.b16 %v309, %v308
      %v336 = vpack.c.b16 %v311, %v310
      %v337 = vpack.c.b16 %v313, %v312
      %v338 = vpack.c.b16 %v315, %v314
      %v339 = vpack.c.b16 %v317, %v316
      %v340 = vpack.c.b16 %v319, %v318
      %v341 = vpack.c.b16 %v321, %v320
      %v342 = vpack.c.b16 %v323, %v322
      %v343 = vpack.c.b16 %v325, %v324
      %v344 = vpack.c.b16 %v327, %v326
      %v345 = vpack.c.b16 %v329, %v328
      %v378 = vunpack.c.l.b16 %v250
      %v379 = vunpack.c.l.b16 %v251
      %v380 = vunpack.c.l.b16 %v252
      %v381 = vunpack.c.l.b16 %v253
      %v382 = vunpack.c.l.b16 %v254
      %v383 = vunpack.c.l.b16 %v255
      %v384 = vunpack.c.l.b16 %v256
      %v385 = vunpack.c.l.b16 %v257
      %v386 = vunpack.c.l.b16 %v258
      %v387 = vunpack.c.l.b16 %v259
      %v388 = vunpack.c.l.b16 %v260
      %v389 = vunpack.c.l.b16 %v261
      %v390 = vunpack.c.l.b16 %v262
      %v391 = vunpack.c.l.b16 %v263
      %v392 = vunpack.c.l.b16 %v264
      %v393 = vunpack.c.l.b16 %v265
      %v394 = vpack.c.b16 %v379, %v378
      %v395 = vpack.c.b16 %v381, %v380
      %v396 = vpack.c.b16 %v383, %v382
      %v397 = vpack.c.b16 %v385, %v384
      %v398 = vpack.c.b16 %v387, %v386
      %v399 = vpack.c.b16 %v389, %v388
      %v400 = vpack.c.b16 %v391, %v390
      %v401 = vpack.c.b16 %v393, %v392
      %410 = vmatpush.bf16.msra.mxu0 %v401
      %411 = vmatpush.bf16.msra.mxu0 %v400
      %412 = vmatpush.bf16.msra.mxu0 %v399
      %413 = vmatpush.bf16.msra.mxu0 %v398
      %414 = vmatpush.bf16.msra.mxu0 %v397
      %415 = vmatpush.bf16.msra.mxu0 %v396
      %416 = vmatpush.bf16.msra.mxu0 %v395
      %417 = vmatpush.bf16.msra.mxu0 %v394
      %418 = vmatmul.bf16.gmra.mxu0 %v330
      %v419 = vpop.f32.mrf.mxu0
      %v420 = vadd.f32 0.0, %v419
      %v421 = vpop.f32.mrf.mxu0
      %v422 = vadd.f32 0.0, %v421
      %423 = vmatmul.bf16.gmra.mxu0 %v331
      %v424 = vpop.f32.mrf.mxu0
      %v425 = vadd.f32 0.0, %v424
      %v426 = vpop.f32.mrf.mxu0
      %v427 = vadd.f32 0.0, %v426
      %428 = vmatmul.bf16.gmra.mxu0 %v332
      %v429 = vpop.f32.mrf.mxu0
      %v430 = vadd.f32 0.0, %v429
      %v431 = vpop.f32.mrf.mxu0
      %v432 = vadd.f32 0.0, %v431
      %433 = vmatmul.bf16.gmra.mxu0 %v333
      %v434 = vpop.f32.mrf.mxu0
      %v435 = vadd.f32 0.0, %v434
      %v436 = vpop.f32.mrf.mxu0
      %v437 = vadd.f32 0.0, %v436
      %438 = vmatmul.bf16.gmra.mxu0 %v334
      %v439 = vpop.f32.mrf.mxu0
      %v440 = vadd.f32 0.0, %v439
      %v441 = vpop.f32.mrf.mxu0
      %v442 = vadd.f32 0.0, %v441
      %443 = vmatmul.bf16.gmra.mxu0 %v335
      %v444 = vpop.f32.mrf.mxu0
      %v445 = vadd.f32 0.0, %v444
      %v446 = vpop.f32.mrf.mxu0
      %v447 = vadd.f32 0.0, %v446
      %448 = vmatmul.bf16.gmra.mxu0 %v336
      %v449 = vpop.f32.mrf.mxu0
      %v450 = vadd.f32 0.0, %v449
      %v451 = vpop.f32.mrf.mxu0
      %v452 = vadd.f32 0.0, %v451
      %453 = vmatmul.bf16.gmra.mxu0 %v337
      %v454 = vpop.f32.mrf.mxu0
      %v455 = vadd.f32 0.0, %v454
      %v456 = vpop.f32.mrf.mxu0
      %v457 = vadd.f32 0.0, %v456
      %458 = vmatmul.bf16.gmra.mxu0 %v338
      %v459 = vpop.f32.mrf.mxu0
      %v460 = vadd.f32 0.0, %v459
      %v461 = vpop.f32.mrf.mxu0
      %v462 = vadd.f32 0.0, %v461
      %463 = vmatmul.bf16.gmra.mxu0 %v339
      %v464 = vpop.f32.mrf.mxu0
      %v465 = vadd.f32 0.0, %v464
      %v466 = vpop.f32.mrf.mxu0
      %v467 = vadd.f32 0.0, %v466
      %468 = vmatmul.bf16.gmra.mxu0 %v340
      %v469 = vpop.f32.mrf.mxu0
      %v470 = vadd.f32 0.0, %v469
      %v471 = vpop.f32.mrf.mxu0
      %v472 = vadd.f32 0.0, %v471
      %473 = vmatmul.bf16.gmra.mxu0 %v341
      %v474 = vpop.f32.mrf.mxu0
      %v475 = vadd.f32 0.0, %v474
      %v476 = vpop.f32.mrf.mxu0
      %v477 = vadd.f32 0.0, %v476
      %478 = vmatmul.bf16.gmra.mxu0 %v342
      %v479 = vpop.f32.mrf.mxu0
      %v480 = vadd.f32 0.0, %v479
      %v481 = vpop.f32.mrf.mxu0
      %v482 = vadd.f32 0.0, %v481
      %483 = vmatmul.bf16.gmra.mxu0 %v343
      %v484 = vpop.f32.mrf.mxu0
      %v485 = vadd.f32 0.0, %v484
      %v486 = vpop.f32.mrf.mxu0
      %v487 = vadd.f32 0.0, %v486
      %488 = vmatmul.bf16.gmra.mxu0 %v344
      %v489 = vpop.f32.mrf.mxu0
      %v490 = vadd.f32 0.0, %v489
      %v491 = vpop.f32.mrf.mxu0
      %v492 = vadd.f32 0.0, %v491
      %493 = vmatmul.bf16.gmra.mxu0 %v345
      %v494 = vpop.f32.mrf.mxu0
      %v495 = vadd.f32 0.0, %v494
      %v496 = vpop.f32.mrf.mxu0
      %v497 = vadd.f32 0.0, %v496
      %498 = vdwg.mxu0
      %vm499 = vcmask 523264
      %500 = vst.msk [vmem:[%s210] sm:$0xff] %vm499, %v420
      %501 = vst.msk [vmem:[%s210 + $0x8] sm:$0xff] %vm499, %v422
      %502 = vst.msk [vmem:[%s210 + $0x10] sm:$0xff] %vm499, %v425
      %503 = vst.msk [vmem:[%s210 + $0x18] sm:$0xff] %vm499, %v427
      %504 = vst.msk [vmem:[%s210 + $0x20] sm:$0xff] %vm499, %v430
      %505 = vst.msk [vmem:[%s210 + $0x28] sm:$0xff] %vm499, %v432
      %506 = vst.msk [vmem:[%s210 + $0x30] sm:$0xff] %vm499, %v435
      %507 = vst.msk [vmem:[%s210 + $0x38] sm:$0xff] %vm499, %v437
      %508 = vst.msk [vmem:[%s210 + $0x40] sm:$0xff] %vm499, %v440
      %509 = vst.msk [vmem:[%s210 + $0x48] sm:$0xff] %vm499, %v442
      %510 = vst.msk [vmem:[%s210 + $0x50] sm:$0xff] %vm499, %v445
      %511 = vst.msk [vmem:[%s210 + $0x58] sm:$0xff] %vm499, %v447
      %512 = vst.msk [vmem:[%s210 + $0x60] sm:$0xff] %vm499, %v450
      %513 = vst.msk [vmem:[%s210 + $0x68] sm:$0xff] %vm499, %v452
      %514 = vst.msk [vmem:[%s210 + $0x70] sm:$0xff] %vm499, %v455
      %515 = vst.msk [vmem:[%s210 + $0x78] sm:$0xff] %vm499, %v457
      %516 = vst.msk [vmem:[%s210 + $0x80] sm:$0xff] %vm499, %v460
      %517 = vst.msk [vmem:[%s210 + $0x88] sm:$0xff] %vm499, %v462
      %518 = vst.msk [vmem:[%s210 + $0x90] sm:$0xff] %vm499, %v465
      %519 = vst.msk [vmem:[%s210 + $0x98] sm:$0xff] %vm499, %v467
      %520 = vst.msk [vmem:[%s210 + $0xa0] sm:$0xff] %vm499, %v470
      %521 = vst.msk [vmem:[%s210 + $0xa8] sm:$0xff] %vm499, %v472
      %522 = vst.msk [vmem:[%s210 + $0xb0] sm:$0xff] %vm499, %v475
      %523 = vst.msk [vmem:[%s210 + $0xb8] sm:$0xff] %vm499, %v477
      %524 = vst.msk [vmem:[%s210 + $0xc0] sm:$0xff] %vm499, %v480
      %525 = vst.msk [vmem:[%s210 + $0xc8] sm:$0xff] %vm499, %v482
      %526 = vst.msk [vmem:[%s210 + $0xd0] sm:$0xff] %vm499, %v485
      %527 = vst.msk [vmem:[%s210 + $0xd8] sm:$0xff] %vm499, %v487
      %528 = vst.msk [vmem:[%s210 + $0xe0] sm:$0xff] %vm499, %v490
      %529 = vst.msk [vmem:[%s210 + $0xe8] sm:$0xff] %vm499, %v492
      %530 = vst.msk [vmem:[%s210 + $0xf0] sm:$0xff] %vm499, %v495
      %531 = vst.msk [vmem:[%s210 + $0xf8] sm:$0xff] %vm499, %v497
      %v532 = vsel %vm499, %v420, 0.0
      %v533 = vsel %vm499, %v422, 0.0
      %v534 = vadd.f32 %v532, %v533
      %v535 = vsel %vm499, %v425, 0.0
      %v536 = vadd.f32 %v534, %v535
      %v537 = vsel %vm499, %v427, 0.0
      %v538 = vadd.f32 %v536, %v537
      %v539 = vsel %vm499, %v430, 0.0
      %v540 = vadd.f32 %v538, %v539
      %v541 = vsel %vm499, %v432, 0.0
      %v542 = vadd.f32 %v540, %v541
      %v543 = vsel %vm499, %v435, 0.0
      %v544 = vadd.f32 %v542, %v543
      %v545 = vsel %vm499, %v437, 0.0
      %v546 = vadd.f32 %v544, %v545
      %v547 = vsel %vm499, %v440, 0.0
      %v548 = vadd.f32 %v546, %v547
      %v549 = vsel %vm499, %v442, 0.0
      %v550 = vadd.f32 %v548, %v549
      %v551 = vsel %vm499, %v445, 0.0
      %v552 = vadd.f32 %v550, %v551
      %v553 = vsel %vm499, %v447, 0.0
      %v554 = vadd.f32 %v552, %v553
      %v555 = vsel %vm499, %v450, 0.0
      %v556 = vadd.f32 %v554, %v555
      %v557 = vsel %vm499, %v452, 0.0
      %v558 = vadd.f32 %v556, %v557
      %v559 = vsel %vm499, %v455, 0.0
      %v560 = vadd.f32 %v558, %v559
      %v561 = vsel %vm499, %v457, 0.0
      %v562 = vadd.f32 %v560, %v561
      %v563 = vsel %vm499, %v460, 0.0
      %v564 = vadd.f32 %v562, %v563
      %v565 = vsel %vm499, %v462, 0.0
      %v566 = vadd.f32 %v564, %v565
      %v567 = vsel %vm499, %v465, 0.0
      %v568 = vadd.f32 %v566, %v567
      %v569 = vsel %vm499, %v467, 0.0
      %v570 = vadd.f32 %v568, %v569
      %v571 = vsel %vm499, %v470, 0.0
      %v572 = vadd.f32 %v570, %v571
      %v573 = vsel %vm499, %v472, 0.0
      %v574 = vadd.f32 %v572, %v573
      %v575 = vsel %vm499, %v475, 0.0
      %v576 = vadd.f32 %v574, %v575
      %v577 = vsel %vm499, %v477, 0.0
      %v578 = vadd.f32 %v576, %v577
      %v579 = vsel %vm499, %v480, 0.0
      %v580 = vadd.f32 %v578, %v579
      %v581 = vsel %vm499, %v482, 0.0
      %v582 = vadd.f32 %v580, %v581
      %v583 = vsel %vm499, %v485, 0.0
      %v584 = vadd.f32 %v582, %v583
      %v585 = vsel %vm499, %v487, 0.0
      %v586 = vadd.f32 %v584, %v585
      %v587 = vsel %vm499, %v490, 0.0
      %v588 = vadd.f32 %v586, %v587
      %v589 = vsel %vm499, %v492, 0.0
      %v590 = vadd.f32 %v588, %v589
      %v591 = vsel %vm499, %v495, 0.0
      %v592 = vadd.f32 %v590, %v591
      %v593 = vsel %vm499, %v497, 0.0
      %v594 = vadd.f32 %v592, %v593
      %v595 = vrot.slane %v594, 4
      %v596 = vadd.f32 %v594, %v595
      %v597 = vrot.slane %v596, 2
      %v598 = vadd.f32 %v596, %v597
      %v599 = vrot.slane %v598, 1
      %v600 = vadd.f32 %v598, %v599
      %vm601 = vcmask 516096
      %602 = vst.msk [vmem:[%s214] sm:$0x1] %vm601, %v600
      %v603 = vmul.f32 %v420, %v420
      %v604 = vmul.f32 %v422, %v422
      %v605 = vmul.f32 %v425, %v425
      %v606 = vmul.f32 %v427, %v427
      %v607 = vmul.f32 %v430, %v430
      %v608 = vmul.f32 %v432, %v432
      %v609 = vmul.f32 %v435, %v435
      %v610 = vmul.f32 %v437, %v437
      %v611 = vmul.f32 %v440, %v440
      %v612 = vmul.f32 %v442, %v442
      %v613 = vmul.f32 %v445, %v445
      %v614 = vmul.f32 %v447, %v447
      %v615 = vmul.f32 %v450, %v450
      %v616 = vmul.f32 %v452, %v452
      %v617 = vmul.f32 %v455, %v455
      %v618 = vmul.f32 %v457, %v457
      %v619 = vmul.f32 %v460, %v460
      %v620 = vmul.f32 %v462, %v462
      %v621 = vmul.f32 %v465, %v465
      %v622 = vmul.f32 %v467, %v467
      %v623 = vmul.f32 %v470, %v470
      %v624 = vmul.f32 %v472, %v472
      %v625 = vmul.f32 %v475, %v475
      %v626 = vmul.f32 %v477, %v477
      %v627 = vmul.f32 %v480, %v480
      %v628 = vmul.f32 %v482, %v482
      %v629 = vmul.f32 %v485, %v485
      %v630 = vmul.f32 %v487, %v487
      %v631 = vmul.f32 %v490, %v490
      %v632 = vmul.f32 %v492, %v492
      %v633 = vmul.f32 %v495, %v495
      %v634 = vmul.f32 %v497, %v497
      %v635 = vsel %vm499, %v603, 0.0
      %v636 = vsel %vm499, %v604, 0.0
      %v637 = vadd.f32 %v635, %v636
      %v638 = vsel %vm499, %v605, 0.0
      %v639 = vadd.f32 %v637, %v638
      %v640 = vsel %vm499, %v606, 0.0
      %v641 = vadd.f32 %v639, %v640
      %v642 = vsel %vm499, %v607, 0.0
      %v643 = vadd.f32 %v641, %v642
      %v644 = vsel %vm499, %v608, 0.0
      %v645 = vadd.f32 %v643, %v644
      %v646 = vsel %vm499, %v609, 0.0
      %v647 = vadd.f32 %v645, %v646
      %v648 = vsel %vm499, %v610, 0.0
      %v649 = vadd.f32 %v647, %v648
      %v650 = vsel %vm499, %v611, 0.0
      %v651 = vadd.f32 %v649, %v650
      %v652 = vsel %vm499, %v612, 0.0
      %v653 = vadd.f32 %v651, %v652
      %v654 = vsel %vm499, %v613, 0.0
      %v655 = vadd.f32 %v653, %v654
      %v656 = vsel %vm499, %v614, 0.0
      %v657 = vadd.f32 %v655, %v656
      %v658 = vsel %vm499, %v615, 0.0
      %v659 = vadd.f32 %v657, %v658
      %v660 = vsel %vm499, %v616, 0.0
      %v661 = vadd.f32 %v659, %v660
      %v662 = vsel %vm499, %v617, 0.0
      %v663 = vadd.f32 %v661, %v662
      %v664 = vsel %vm499, %v618, 0.0
      %v665 = vadd.f32 %v663, %v664
      %v666 = vsel %vm499, %v619, 0.0
      %v667 = vadd.f32 %v665, %v666
      %v668 = vsel %vm499, %v620, 0.0
      %v669 = vadd.f32 %v667, %v668
      %v670 = vsel %vm499, %v621, 0.0
      %v671 = vadd.f32 %v669, %v670
      %v672 = vsel %vm499, %v622, 0.0
      %v673 = vadd.f32 %v671, %v672
      %v674 = vsel %vm499, %v623, 0.0
      %v675 = vadd.f32 %v673, %v674
      %v676 = vsel %vm499, %v624, 0.0
      %v677 = vadd.f32 %v675, %v676
      %v678 = vsel %vm499, %v625, 0.0
      %v679 = vadd.f32 %v677, %v678
      %v680 = vsel %vm499, %v626, 0.0
      %v681 = vadd.f32 %v679, %v680
      %v682 = vsel %vm499, %v627, 0.0
      %v683 = vadd.f32 %v681, %v682
      %v684 = vsel %vm499, %v628, 0.0
      %v685 = vadd.f32 %v683, %v684
      %v686 = vsel %vm499, %v629, 0.0
      %v687 = vadd.f32 %v685, %v686
      %v688 = vsel %vm499, %v630, 0.0
      %v689 = vadd.f32 %v687, %v688
      %v690 = vsel %vm499, %v631, 0.0
      %v691 = vadd.f32 %v689, %v690
      %v692 = vsel %vm499, %v632, 0.0
      %v693 = vadd.f32 %v691, %v692
      %v694 = vsel %vm499, %v633, 0.0
      %v695 = vadd.f32 %v693, %v694
      %v696 = vsel %vm499, %v634, 0.0
      %v697 = vadd.f32 %v695, %v696
      %v698 = vrot.slane %v697, 4
      %v699 = vadd.f32 %v697, %v698
      %v700 = vrot.slane %v699, 2
      %v701 = vadd.f32 %v699, %v700
      %v702 = vrot.slane %v701, 1
      %v703 = vadd.f32 %v701, %v702
      %704 = vst.msk [vmem:[%s217] sm:$0x1] %vm601, %v703
      %s705 = smul.u32 32, %s16
      %p706 = scmp.lt.s32.totalorder %s705, 63
      %s707 = scalar_select %p706, %s705, 63
      %s708 = smul.addr %s707, 8
      %s709 = scalar_lea.vmem %s2, %s708
      %p710 = scmp.lt.s32.totalorder %s16, 1
      %s711 = scalar_select %p710, %s16, 1
      %s712 = scalar_lea.vmem %s3, %s711
      %p713 = scmp.lt.s32.totalorder %s16, 1
      %s714 = scalar_select %p713, %s16, 1
      %s715 = scalar_lea.vmem %s4, %s714
      // Predicated region
      $region29: #{block_forward.11} parent=27 // pred_check
        %p716 = pneg %p81
      $region30: #{block_forward.11} parent=27 // pred_check_branch
        %718 = sbr.rel (%p716) target = $region32
      $region31: #{block_forward.11} parent=27 // pred_region
        %s719 = smul.u32 32, %s16
      $region32: #{block_forward.11} parent=27 // pred_fallthru
        _
      // Predicated region
      $region33: #{block_forward.11} parent=27 // pred_check
        %p720 = pneg %p107
      $region34: #{block_forward.11} parent=27 // pred_check_branch
        %722 = sbr.rel (%p720) target = $region36
      $region35: #{block_forward.11} parent=27 // pred_region
        _
      $region36: #{block_forward.11} parent=27 // pred_fallthru
        _
      // Predicated region
      $region37: #{block_forward.11} parent=27 // pred_check
        %p723 = pneg %p133
      $region38: #{block_forward.11} parent=27 // pred_check_branch
        %725 = sbr.rel (%p723) target = $region40
      $region39: #{block_forward.11} parent=27 // pred_region
        _
      $region40: #{block_forward.11} parent=27 // pred_fallthru
        _
    $region28: #{block_forward.11} parent=5 // pred_fallthru
      _
    %p726 = scmp.le.s32.totalorder 2, %s11
    // Predicated region
    $region41: #{block_forward.11} parent=5 // pred_check
      %p727 = pneg %p726
    $region42: #{block_forward.11} parent=5 // pred_check_branch
      %729 = sbr.rel (%p727) target = $region44
    $region43: #{block_forward.11} parent=5 // pred_region
      %s730 = ssub.s32 %s11, 2
      // Predicated region
      $region45: #{block_forward.11} parent=43 // pred_check
        %p731 = pneg %p87
      $region46: #{block_forward.11} parent=43 // pred_check_branch
        %733 = sbr.rel (%p731) target = $region48
      $region47: #{block_forward.11} parent=43 // pred_region
        %s734 = smul.u32 32, %s17
        %p735 = scmp.lt.s32.totalorder %s734, 63
        %s736 = scalar_select %p735, %s734, 63
        %s737 = smul.addr %s736, 8
        %s738 = scalar_lea.vmem %s2, %s737
      $region48: #{block_forward.11} parent=43 // pred_fallthru
        _
      // Predicated region
      $region49: #{block_forward.11} parent=43 // pred_check
        %p739 = pneg %p113
      $region50: #{block_forward.11} parent=43 // pred_check_branch
        %741 = sbr.rel (%p739) target = $region52
      $region51: #{block_forward.11} parent=43 // pred_region
        %p742 = scmp.lt.s32.totalorder %s17, 1
        %s743 = scalar_select %p742, %s17, 1
        %s744 = scalar_lea.vmem %s3, %s743
      $region52: #{block_forward.11} parent=43 // pred_fallthru
        _
      // Predicated region
      $region53: #{block_forward.11} parent=43 // pred_check
        %p745 = pneg %p139
      $region54: #{block_forward.11} parent=43 // pred_check_branch
        %747 = sbr.rel (%p745) target = $region56
      $region55: #{block_forward.11} parent=43 // pred_region
        %p748 = scmp.lt.s32.totalorder %s17, 1
        %s749 = scalar_select %p748, %s17, 1
        %s750 = scalar_lea.vmem %s4, %s749
      $region56: #{block_forward.11} parent=43 // pred_fallthru
        _
    $region44: #{block_forward.11} parent=5 // pred_fallthru
      _
  $region6: #{block_forward.11} parent=0 // loop_footer
    %s15 = sadd.s32 1, %s11
  $region7: #{block_forward.11} parent=0 // loop_footer_branch
    %10 = sbr.rel target = $region3
  $region8: #{block_forward.11} parent=0 // loop_exit
    _

// kernel: block_forward.12
$region0: #{block_forward.12}
  #allocation0 [shape = 'u32[]', space=smem, size = 0x4, offset = 0x4, fixed_abs, tag = 'smem constant byte address 0x4 - core index']
  #allocation1 [shape = 'u32[72,128]{1,0:T(1,128)}', space=vmem, size = 0x9000, scoped, tag = 'internal scratch']
  %s0 = inlined_call_operand.vmem [shape: bf16[512,32], index: 0, kind: input, shape index: {}]
  %s1 = inlined_call_operand.vmem [shape: bf16[32,64], index: 1, kind: input, shape index: {}]
  %s2 = inlined_call_operand.vmem [shape: f32[512,64], index: 2, kind: output, shape index: {0}]
  %s3 = inlined_call_operand.vmem [shape: f32[2,1,64], index: 3, kind: output, shape index: {1}]
  %s4 = inlined_call_operand.vmem [shape: f32[2,1,64], index: 4, kind: output, shape index: {2}]
  %5 = xla_tuple %s2, %s3, %s4
  %s6 = sld [smem:[#allocation0]]
  $region57: #{block_forward.12} parent=0
    _
  %s8 = ssub.s32 1, %s6
  %s9 = scalar_select 0, %s8, %s6
  loop: start=0, step=1, limit=4
  $region2: #{block_forward.12} parent=0 // loop_pre_header
    _
  $region3: #{block_forward.12} parent=0 // loop_header
    %s11 = sphi 0, %s15
    %p12 = scmp.ge.s32.totalorder %s11, 4
    %s21 = sphi 0, %s23
    %s24 = sphi 0, %s21
    %s25 = sphi 0, %s24
    %s41 = sphi 0, %s25
    %s45 = sphi 0, %s45
    %s47 = sphi 0, %s45
    %s48 = sphi 0, %s47
    %s62 = sphi 0, %s48
    %s68 = sphi 0, %s70
    %s71 = sphi 0, %s68
    %s72 = sphi 0, %s71
    %s88 = sphi 0, %s72
    %s94 = sphi 0, %s96
    %s97 = sphi 0, %s94
    %s98 = sphi 0, %s97
    %s114 = sphi 0, %s98
    %s120 = sphi 0, %s122
    %s123 = sphi 0, %s120
    %s124 = sphi 0, %s123
    %s140 = sphi 0, %s124
  $region4: #{block_forward.12} parent=0 // loop_header_branch
    %14 = sbr.rel (%p12) target = $region8
  $region5: #{block_forward.12} parent=0 // loop_body
    %s16 = ssub.s32 %s11, 1
    %s17 = ssub.s32 %s11, 2
    %s18 = sadd.s32 %s11, 1
    %s19 = ssub.s32 %s11, %s18
    %p20 = scmp.eq.s32.totalorder %s19, 0
    %s22 = sadd.s32 %s21, 1
    %s23 = scalar_select %p20, %s21, %s22
    %p26 = pneg %p20
    %p27 = scmp.eq.s32.totalorder %s11, 1
    %p28 = por %p26, %p27
    %p29 = scmp.ne.s32.totalorder %s21, %s24
    %p30 = scmp.eq.s32.totalorder %s11, 0
    %p31 = por %p29, %p30
    %p32 = scmp.ne.s32.totalorder %s21, %s24
    %p33 = scmp.eq.s32.totalorder %s16, 1
    %p34 = por %p32, %p33
    %p35 = scmp.ne.s32.totalorder %s24, %s25
    %p36 = scmp.eq.s32.totalorder %s16, 0
    %p37 = por %p35, %p36
    %p38 = scmp.ne.s32.totalorder %s24, %s25
    %p39 = scmp.eq.s32.totalorder %s17, 1
    %p40 = por %p38, %p39
    %p42 = scmp.ne.s32.totalorder %s25, %s41
    %p43 = scmp.eq.s32.totalorder %s17, 0
    %p44 = por %p42, %p43
    %s46 = sadd.s32 %s45, 1
    %p49 = scmp.eq.s32.totalorder %s11, 1
    %p50 = scmp.ne.s32.totalorder %s45, %s47
    %p51 = scmp.eq.s32.totalorder %s11, 0
    %p52 = por %p50, %p51
    %p53 = scmp.ne.s32.totalorder %s45, %s47
    %p54 = scmp.eq.s32.totalorder %s16, 1
    %p55 = por %p53, %p54
    %p56 = scmp.ne.s32.totalorder %s47, %s48
    %p57 = scmp.eq.s32.totalorder %s16, 0
    %p58 = por %p56, %p57
    %p59 = scmp.ne.s32.totalorder %s47, %s48
    %p60 = scmp.eq.s32.totalorder %s17, 1
    %p61 = por %p59, %p60
    %p63 = scmp.ne.s32.totalorder %s48, %s62
    %p64 = scmp.eq.s32.totalorder %s17, 0
    %p65 = por %p63, %p64
    %s66 = ssub.s32 %s11, %s18
    %p67 = scmp.eq.s32.totalorder %s66, 0
    %s69 = sadd.s32 %s68, 1
    %s70 = scalar_select %p67, %s68, %s69
    %p73 = pneg %p67
    %p74 = scmp.eq.s32.totalorder %s11, 1
    %p75 = por %p73, %p74
    %p76 = scmp.ne.s32.totalorder %s68, %s71
    %p77 = scmp.eq.s32.totalorder %s11, 0
    %p78 = por %p76, %p77
    %p79 = scmp.ne.s32.totalorder %s68, %s71
    %p80 = scmp.eq.s32.totalorder %s16, 1
    %p81 = por %p79, %p80
    %p82 = scmp.ne.s32.totalorder %s71, %s72
    %p83 = scmp.eq.s32.totalorder %s16, 0
    %p84 = por %p82, %p83
    %p85 = scmp.ne.s32.totalorder %s71, %s72
    %p86 = scmp.eq.s32.totalorder %s17, 1
    %p87 = por %p85, %p86
    %p89 = scmp.ne.s32.totalorder %s72, %s88
    %p90 = scmp.eq.s32.totalorder %s17, 0
    %p91 = por %p89, %p90
    %s92 = ssub.s32 %s11, %s18
    %p93 = scmp.eq.s32.totalorder %s92, 0
    %s95 = sadd.s32 %s94, 1
    %s96 = scalar_select %p93, %s94, %s95
    %p99 = pneg %p93
    %p100 = scmp.eq.s32.totalorder %s11, 1
    %p101 = por %p99, %p100
    %p102 = scmp.ne.s32.totalorder %s94, %s97
    %p103 = scmp.eq.s32.totalorder %s11, 0
    %p104 = por %p102, %p103
    %p105 = scmp.ne.s32.totalorder %s94, %s97
    %p106 = scmp.eq.s32.totalorder %s16, 1
    %p107 = por %p105, %p106
    %p108 = scmp.ne.s32.totalorder %s97, %s98
    %p109 = scmp.eq.s32.totalorder %s16, 0
    %p110 = por %p108, %p109
    %p111 = scmp.ne.s32.totalorder %s97, %s98
    %p112 = scmp.eq.s32.totalorder %s17, 1
    %p113 = por %p111, %p112
    %p115 = scmp.ne.s32.totalorder %s98, %s114
    %p116 = scmp.eq.s32.totalorder %s17, 0
    %p117 = por %p115, %p116
    %s118 = ssub.s32 %s11, %s18
    %p119 = scmp.eq.s32.totalorder %s118, 0
    %s121 = sadd.s32 %s120, 1
    %s122 = scalar_select %p119, %s120, %s121
    %p125 = pneg %p119
    %p126 = scmp.eq.s32.totalorder %s11, 1
    %p127 = por %p125, %p126
    %p128 = scmp.ne.s32.totalorder %s120, %s123
    %p129 = scmp.eq.s32.totalorder %s11, 0
    %p130 = por %p128, %p129
    %p131 = scmp.ne.s32.totalorder %s120, %s123
    %p132 = scmp.eq.s32.totalorder %s16, 1
    %p133 = por %p131, %p132
    %p134 = scmp.ne.s32.totalorder %s123, %s124
    %p135 = scmp.eq.s32.totalorder %s16, 0
    %p136 = por %p134, %p135
    %p137 = scmp.ne.s32.totalorder %s123, %s124
    %p138 = scmp.eq.s32.totalorder %s17, 1
    %p139 = por %p137, %p138
    %p141 = scmp.ne.s32.totalorder %s124, %s140
    %p142 = scmp.eq.s32.totalorder %s17, 0
    %p143 = por %p141, %p142
    %p144 = scmp.le.s32.totalorder 1, %s11
    %p145 = scmp.lt.s32.totalorder %s11, 3
    %p146 = pnand %p144, %p145
    %p147 = pneg %p146
    // Predicated region
    $region9: #{block_forward.12} parent=5 // pred_check
      _
    $region10: #{block_forward.12} parent=5 // pred_check_branch
      %149 = sbr.rel (%p146) target = $region12
    $region11: #{block_forward.12} parent=5 // pred_region
      %s150 = ssub.s32 %s11, 1
      // Predicated region
      $region13: #{block_forward.12} parent=11 // pred_check
        %p151 = pneg %p58
      $region14: #{block_forward.12} parent=11 // pred_check_branch
        %153 = sbr.rel (%p151) target = $region16
      $region15: #{block_forward.12} parent=11 // pred_region
        _
      $region16: #{block_forward.12} parent=11 // pred_fallthru
        _
    $region12: #{block_forward.12} parent=5 // pred_fallthru
      _
    %p154 = scmp.lt.s32.totalorder %s11, 2
    // Predicated region
    $region17: #{block_forward.12} parent=5 // pred_check
      %p155 = pneg %p154
    $region18: #{block_forward.12} parent=5 // pred_check_branch
      %157 = sbr.rel (%p155) target = $region20
    $region19: #{block_forward.12} parent=5 // pred_region
      // Predicated region
      $region21: #{block_forward.12} parent=19 // pred_check
        %p158 = pneg %p31
      $region22: #{block_forward.12} parent=19 // pred_check_branch
        %160 = sbr.rel (%p158) target = $region24
      $region23: #{block_forward.12} parent=19 // pred_region
        %s161 = smul.u32 32, %s11
        %p162 = scmp.lt.s32.totalorder %s161, 63
        %s163 = scalar_select %p162, %s161, 63
        %s164 = smul.addr %s163, 4
        %s165 = scalar_lea.vmem %s0, %s164
        %s166 = smul.u32 32, %s11
      $region24: #{block_forward.12} parent=19 // pred_fallthru
        _
    $region20: #{block_forward.12} parent=5 // pred_fallthru
      _
    %p167 = scmp.le.s32.totalorder 1, %s11
    %p168 = scmp.lt.s32.totalorder %s11, 3
    %p169 = pnand %p167, %p168
    %p170 = pneg %p169
    // Predicated region
    $region25: #{block_forward.12} parent=5 // pred_check
      _
    $region26: #{block_forward.12} parent=5 // pred_check_branch
      %172 = sbr.rel (%p169) target = $region28
    $region27: #{block_forward.12} parent=5 // pred_region
      %s173 = ssub.s32 %s11, 1
      %s174 = smul.u32 32, %s16
      %p175 = scmp.lt.s32.totalorder %s174, 63
      %s176 = scalar_select %p175, %s174, 63
      %s177 = smul.addr %s176, 4
      %s178 = scalar_lea.vmem %s0, %s177
      %p179 = pneg %p37
      %p180 = pneg %p34
      %p181 = pneg %p58
      %p182 = pneg %p55
      %p183 = pneg %p84
      %p184 = pneg %p81
      %s185 = smul.u32 32, %s16
      %p186 = scmp.lt.s32.totalorder %s185, 63
      %s187 = scalar_select %p186, %s185, 63
      %s188 = smul.addr %s187, 8
      %s189 = scalar_lea.vmem %s2, %s188
      %p190 = pneg %p110
      %p191 = pneg %p107
      %p192 = scmp.lt.s32.totalorder %s16, 1
      %s193 = scalar_select %p192, %s16, 1
      %s194 = scalar_lea.vmem %s3, %s193
      %p195 = pneg %p136
      %p196 = pneg %p133
      %p197 = scmp.lt.s32.totalorder %s16, 1
      %s198 = scalar_select %p197, %s16, 1
      %s199 = scalar_lea.vmem %s4, %s198
      %s200 = smul.u32 32, %s16
      %p201 = scmp.lt.s32.totalorder %s200, 63
      %s202 = scalar_select %p201, %s200, 63
      %s203 = smul.addr %s202, 4
      %s204 = scalar_lea.vmem %s0, %s203
      %s205 = smul.u32 32, %s16
      %s206 = smul.u32 32, %s16
      %p207 = scmp.lt.s32.totalorder %s206, 63
      %s208 = scalar_select %p207, %s206, 63
      %s209 = smul.addr %s208, 8
      %s210 = scalar_lea.vmem %s2, %s209
      %s211 = smul.u32 32, %s16
      %p212 = scmp.lt.s32.totalorder %s16, 1
      %s213 = scalar_select %p212, %s16, 1
      %s214 = scalar_lea.vmem %s3, %s213
      %p215 = scmp.lt.s32.totalorder %s16, 1
      %s216 = scalar_select %p215, %s16, 1
      %s217 = scalar_lea.vmem %s4, %s216
      %v219 = vld [vmem:[%s204] sm:$0xf]
      %v220 = vld [vmem:[%s204 + $0x4] sm:$0xf]
      %v221 = vld [vmem:[%s204 + $0x8] sm:$0xf]
      %v222 = vld [vmem:[%s204 + $0xc] sm:$0xf]
      %v223 = vld [vmem:[%s204 + $0x10] sm:$0xf]
      %v224 = vld [vmem:[%s204 + $0x14] sm:$0xf]
      %v225 = vld [vmem:[%s204 + $0x18] sm:$0xf]
      %v226 = vld [vmem:[%s204 + $0x1c] sm:$0xf]
      %v227 = vld [vmem:[%s204 + $0x20] sm:$0xf]
      %v228 = vld [vmem:[%s204 + $0x24] sm:$0xf]
      %v229 = vld [vmem:[%s204 + $0x28] sm:$0xf]
      %v230 = vld [vmem:[%s204 + $0x2c] sm:$0xf]
      %v231 = vld [vmem:[%s204 + $0x30] sm:$0xf]
      %v232 = vld [vmem:[%s204 + $0x34] sm:$0xf]
      %v233 = vld [vmem:[%s204 + $0x38] sm:$0xf]
      %v234 = vld [vmem:[%s204 + $0x3c] sm:$0xf]
      %v235 = vld [vmem:[%s204 + $0x40] sm:$0xf]
      %v236 = vld [vmem:[%s204 + $0x44] sm:$0xf]
      %v237 = vld [vmem:[%s204 + $0x48] sm:$0xf]
      %v238 = vld [vmem:[%s204 + $0x4c] sm:$0xf]
      %v239 = vld [vmem:[%s204 + $0x50] sm:$0xf]
      %v240 = vld [vmem:[%s204 + $0x54] sm:$0xf]
      %v241 = vld [vmem:[%s204 + $0x58] sm:$0xf]
      %v242 = vld [vmem:[%s204 + $0x5c] sm:$0xf]
      %v243 = vld [vmem:[%s204 + $0x60] sm:$0xf]
      %v244 = vld [vmem:[%s204 + $0x64] sm:$0xf]
      %v245 = vld [vmem:[%s204 + $0x68] sm:$0xf]
      %v246 = vld [vmem:[%s204 + $0x6c] sm:$0xf]
      %v247 = vld [vmem:[%s204 + $0x70] sm:$0xf]
      %v248 = vld [vmem:[%s204 + $0x74] sm:$0xf]
      %v249 = vld [vmem:[%s204 + $0x78] sm:$0xf]
      %v250 = vld [vmem:[%s204 + $0x7c] sm:$0xf]
      %v251 = vld [vmem:[%s1] sm:$0xf]
      %v252 = vld [vmem:[%s1 + $0x4] sm:$0xf]
      %v253 = vld [vmem:[%s1 + $0x8] sm:$0xf]
      %v254 = vld [vmem:[%s1 + $0xc] sm:$0xf]
      %v287 = vunpack.c.l.b16 %v219
      %v288 = vunpack.c.l.b16 %v220
      %v289 = vunpack.c.l.b16 %v221
      %v290 = vunpack.c.l.b16 %v222
      %v291 = vunpack.c.l.b16 %v223
      %v292 = vunpack.c.l.b16 %v224
      %v293 = vunpack.c.l.b16 %v225
      %v294 = vunpack.c.l.b16 %v226
      %v295 = vunpack.c.l.b16 %v227
      %v296 = vunpack.c.l.b16 %v228
      %v297 = vunpack.c.l.b16 %v229
      %v298 = vunpack.c.l.b16 %v230
      %v299 = vunpack.c.l.b16 %v231
      %v300 = vunpack.c.l.b16 %v232
      %v301 = vunpack.c.l.b16 %v233
      %v302 = vunpack.c.l.b16 %v234
      %v303 = vunpack.c.l.b16 %v235
      %v304 = vunpack.c.l.b16 %v236
      %v305 = vunpack.c.l.b16 %v237
      %v306 = vunpack.c.l.b16 %v238
      %v307 = vunpack.c.l.b16 %v239
      %v308 = vunpack.c.l.b16 %v240
      %v309 = vunpack.c.l.b16 %v241
      %v310 = vunpack.c.l.b16 %v242
      %v311 = vunpack.c.l.b16 %v243
      %v312 = vunpack.c.l.b16 %v244
      %v313 = vunpack.c.l.b16 %v245
      %v314 = vunpack.c.l.b16 %v246
      %v315 = vunpack.c.l.b16 %v247
      %v316 = vunpack.c.l.b16 %v248
      %v317 = vunpack.c.l.b16 %v249
      %v318 = vunpack.c.l.b16 %v250
      %v319 = vpack.c.b16 %v288, %v287
      %v320 = vpack.c.b16 %v290, %v289
      %v321 = vpack.c.b16 %v292, %v291
      %v322 = vpack.c.b16 %v294, %v293
      %v323 = vpack.c.b16 %v296, %v295
      %v324 = vpack.c.b16 %v298, %v297
      %v325 = vpack.c.b16 %v300, %v299
      %v326 = vpack.c.b16 %v302, %v301
      %v327 = vpack.c.b16 %v304, %v303
      %v328 = vpack.c.b16 %v306, %v305
      %v329 = vpack.c.b16 %v308, %v307
      %v330 = vpack.c.b16 %v310, %v309
      %v331 = vpack.c.b16 %v312, %v311
      %v332 = vpack.c.b16 %v314, %v313
      %v333 = vpack.c.b16 %v316, %v315
      %v334 = vpack.c.b16 %v318, %v317
      %v339 = vunpack.c.l.b16 %v251
      %v340 = vunpack.c.l.b16 %v252
      %v341 = vunpack.c.l.b16 %v253
      %v342 = vunpack.c.l.b16 %v254
      %v343 = vpack.c.b16 %v340, %v339
      %v344 = vpack.c.b16 %v342, %v341
      %vm347 = vcmask 261120
      %v349 = vsel %vm347, %v319, 0
      %v352 = vsel %vm347, %v320, 0
      %v355 = vsel %vm347, %v321, 0
      %v358 = vsel %vm347, %v322, 0
      %v361 = vsel %vm347, %v323, 0
      %v364 = vsel %vm347, %v324, 0
      %v367 = vsel %vm347, %v325, 0
      %v370 = vsel %vm347, %v326, 0
      %v373 = vsel %vm347, %v327, 0
      %v376 = vsel %vm347, %v328, 0
      %v379 = vsel %vm347, %v329, 0
      %v382 = vsel %vm347, %v330, 0
      %v385 = vsel %vm347, %v331, 0
      %v388 = vsel %vm347, %v332, 0
      %v391 = vsel %vm347, %v333, 0
      %v394 = vsel %vm347, %v334, 0
      %396 = vmatpush.bf16.msra.mxu0 0
      %397 = vmatpush.bf16.msra.mxu0 0
      %398 = vmatpush.bf16.msra.mxu0 0
      %399 = vmatpush.bf16.msra.mxu0 0
      %400 = vmatpush.bf16.msra.mxu0 0
      %401 = vmatpush.bf16.msra.mxu0 0
      %402 = vmatpush.bf16.msra.mxu0 %v344
      %403 = vmatpush.bf16.msra.mxu0 %v343
      %404 = vmatmul.bf16.gmra.mxu0 %v349
      %v405 = vpop.f32.mrf.mxu0
      %v406 = vadd.f32 0.0, %v405
      %v407 = vpop.f32.mrf.mxu0
      %v408 = vadd.f32 0.0, %v407
      %409 = vmatmul.bf16.gmra.mxu0 %v352
      %v410 = vpop.f32.mrf.mxu0
      %v411 = vadd.f32 0.0, %v410
      %v412 = vpop.f32.mrf.mxu0
      %v413 = vadd.f32 0.0, %v412
      %414 = vmatmul.bf16.gmra.mxu0 %v355
      %v415 = vpop.f32.mrf.mxu0
      %v416 = vadd.f32 0.0, %v415
      %v417 = vpop.f32.mrf.mxu0
      %v418 = vadd.f32 0.0, %v417
      %419 = vmatmul.bf16.gmra.mxu0 %v358
      %v420 = vpop.f32.mrf.mxu0
      %v421 = vadd.f32 0.0, %v420
      %v422 = vpop.f32.mrf.mxu0
      %v423 = vadd.f32 0.0, %v422
      %424 = vmatmul.bf16.gmra.mxu0 %v361
      %v425 = vpop.f32.mrf.mxu0
      %v426 = vadd.f32 0.0, %v425
      %v427 = vpop.f32.mrf.mxu0
      %v428 = vadd.f32 0.0, %v427
      %429 = vmatmul.bf16.gmra.mxu0 %v364
      %v430 = vpop.f32.mrf.mxu0
      %v431 = vadd.f32 0.0, %v430
      %v432 = vpop.f32.mrf.mxu0
      %v433 = vadd.f32 0.0, %v432
      %434 = vmatmul.bf16.gmra.mxu0 %v367
      %v435 = vpop.f32.mrf.mxu0
      %v436 = vadd.f32 0.0, %v435
      %v437 = vpop.f32.mrf.mxu0
      %v438 = vadd.f32 0.0, %v437
      %439 = vmatmul.bf16.gmra.mxu0 %v370
      %v440 = vpop.f32.mrf.mxu0
      %v441 = vadd.f32 0.0, %v440
      %v442 = vpop.f32.mrf.mxu0
      %v443 = vadd.f32 0.0, %v442
      %444 = vmatmul.bf16.gmra.mxu0 %v373
      %v445 = vpop.f32.mrf.mxu0
      %v446 = vadd.f32 0.0, %v445
      %v447 = vpop.f32.mrf.mxu0
      %v448 = vadd.f32 0.0, %v447
      %449 = vmatmul.bf16.gmra.mxu0 %v376
      %v450 = vpop.f32.mrf.mxu0
      %v451 = vadd.f32 0.0, %v450
      %v452 = vpop.f32.mrf.mxu0
      %v453 = vadd.f32 0.0, %v452
      %454 = vmatmul.bf16.gmra.mxu0 %v379
      %v455 = vpop.f32.mrf.mxu0
      %v456 = vadd.f32 0.0, %v455
      %v457 = vpop.f32.mrf.mxu0
      %v458 = vadd.f32 0.0, %v457
      %459 = vmatmul.bf16.gmra.mxu0 %v382
      %v460 = vpop.f32.mrf.mxu0
      %v461 = vadd.f32 0.0, %v460
      %v462 = vpop.f32.mrf.mxu0
      %v463 = vadd.f32 0.0, %v462
      %464 = vmatmul.bf16.gmra.mxu0 %v385
      %v465 = vpop.f32.mrf.mxu0
      %v466 = vadd.f32 0.0, %v465
      %v467 = vpop.f32.mrf.mxu0
      %v468 = vadd.f32 0.0, %v467
      %469 = vmatmul.bf16.gmra.mxu0 %v388
      %v470 = vpop.f32.mrf.mxu0
      %v471 = vadd.f32 0.0, %v470
      %v472 = vpop.f32.mrf.mxu0
      %v473 = vadd.f32 0.0, %v472
      %474 = vmatmul.bf16.gmra.mxu0 %v391
      %v475 = vpop.f32.mrf.mxu0
      %v476 = vadd.f32 0.0, %v475
      %v477 = vpop.f32.mrf.mxu0
      %v478 = vadd.f32 0.0, %v477
      %479 = vmatmul.bf16.gmra.mxu0 %v394
      %v480 = vpop.f32.mrf.mxu0
      %v481 = vadd.f32 0.0, %v480
      %v482 = vpop.f32.mrf.mxu0
      %v483 = vadd.f32 0.0, %v482
      %484 = vdwg.mxu0
      %vm485 = vcmask 523264
      %486 = vst.msk [vmem:[%s210] sm:$0xff] %vm485, %v406
      %487 = vst.msk [vmem:[%s210 + $0x8] sm:$0xff] %vm485, %v408
      %488 = vst.msk [vmem:[%s210 + $0x10] sm:$0xff] %vm485, %v411
      %489 = vst.msk [vmem:[%s210 + $0x18] sm:$0xff] %vm485, %v413
      %490 = vst.msk [vmem:[%s210 + $0x20] sm:$0xff] %vm485, %v416
      %491 = vst.msk [vmem:[%s210 + $0x28] sm:$0xff] %vm485, %v418
      %492 = vst.msk [vmem:[%s210 + $0x30] sm:$0xff] %vm485, %v421
      %493 = vst.msk [vmem:[%s210 + $0x38] sm:$0xff] %vm485, %v423
      %494 = vst.msk [vmem:[%s210 + $0x40] sm:$0xff] %vm485, %v426
      %495 = vst.msk [vmem:[%s210 + $0x48] sm:$0xff] %vm485, %v428
      %496 = vst.msk [vmem:[%s210 + $0x50] sm:$0xff] %vm485, %v431
      %497 = vst.msk [vmem:[%s210 + $0x58] sm:$0xff] %vm485, %v433
      %498 = vst.msk [vmem:[%s210 + $0x60] sm:$0xff] %vm485, %v436
      %499 = vst.msk [vmem:[%s210 + $0x68] sm:$0xff] %vm485, %v438
      %500 = vst.msk [vmem:[%s210 + $0x70] sm:$0xff] %vm485, %v441
      %501 = vst.msk [vmem:[%s210 + $0x78] sm:$0xff] %vm485, %v443
      %502 = vst.msk [vmem:[%s210 + $0x80] sm:$0xff] %vm485, %v446
      %503 = vst.msk [vmem:[%s210 + $0x88] sm:$0xff] %vm485, %v448
      %504 = vst.msk [vmem:[%s210 + $0x90] sm:$0xff] %vm485, %v451
      %505 = vst.msk [vmem:[%s210 + $0x98] sm:$0xff] %vm485, %v453
      %506 = vst.msk [vmem:[%s210 + $0xa0] sm:$0xff] %vm485, %v456
      %507 = vst.msk [vmem:[%s210 + $0xa8] sm:$0xff] %vm485, %v458
      %508 = vst.msk [vmem:[%s210 + $0xb0] sm:$0xff] %vm485, %v461
      %509 = vst.msk [vmem:[%s210 + $0xb8] sm:$0xff] %vm485, %v463
      %510 = vst.msk [vmem:[%s210 + $0xc0] sm:$0xff] %vm485, %v466
      %511 = vst.msk [vmem:[%s210 + $0xc8] sm:$0xff] %vm485, %v468
      %512 = vst.msk [vmem:[%s210 + $0xd0] sm:$0xff] %vm485, %v471
      %513 = vst.msk [vmem:[%s210 + $0xd8] sm:$0xff] %vm485, %v473
      %514 = vst.msk [vmem:[%s210 + $0xe0] sm:$0xff] %vm485, %v476
      %515 = vst.msk [vmem:[%s210 + $0xe8] sm:$0xff] %vm485, %v478
      %516 = vst.msk [vmem:[%s210 + $0xf0] sm:$0xff] %vm485, %v481
      %517 = vst.msk [vmem:[%s210 + $0xf8] sm:$0xff] %vm485, %v483
      %v518 = vsel %vm485, %v406, 0.0
      %v519 = vsel %vm485, %v408, 0.0
      %v520 = vadd.f32 %v518, %v519
      %v521 = vsel %vm485, %v411, 0.0
      %v522 = vadd.f32 %v520, %v521
      %v523 = vsel %vm485, %v413, 0.0
      %v524 = vadd.f32 %v522, %v523
      %v525 = vsel %vm485, %v416, 0.0
      %v526 = vadd.f32 %v524, %v525
      %v527 = vsel %vm485, %v418, 0.0
      %v528 = vadd.f32 %v526, %v527
      %v529 = vsel %vm485, %v421, 0.0
      %v530 = vadd.f32 %v528, %v529
      %v531 = vsel %vm485, %v423, 0.0
      %v532 = vadd.f32 %v530, %v531
      %v533 = vsel %vm485, %v426, 0.0
      %v534 = vadd.f32 %v532, %v533
      %v535 = vsel %vm485, %v428, 0.0
      %v536 = vadd.f32 %v534, %v535
      %v537 = vsel %vm485, %v431, 0.0
      %v538 = vadd.f32 %v536, %v537
      %v539 = vsel %vm485, %v433, 0.0
      %v540 = vadd.f32 %v538, %v539
      %v541 = vsel %vm485, %v436, 0.0
      %v542 = vadd.f32 %v540, %v541
      %v543 = vsel %vm485, %v438, 0.0
      %v544 = vadd.f32 %v542, %v543
      %v545 = vsel %vm485, %v441, 0.0
      %v546 = vadd.f32 %v544, %v545
      %v547 = vsel %vm485, %v443, 0.0
      %v548 = vadd.f32 %v546, %v547
      %v549 = vsel %vm485, %v446, 0.0
      %v550 = vadd.f32 %v548, %v549
      %v551 = vsel %vm485, %v448, 0.0
      %v552 = vadd.f32 %v550, %v551
      %v553 = vsel %vm485, %v451, 0.0
      %v554 = vadd.f32 %v552, %v553
      %v555 = vsel %vm485, %v453, 0.0
      %v556 = vadd.f32 %v554, %v555
      %v557 = vsel %vm485, %v456, 0.0
      %v558 = vadd.f32 %v556, %v557
      %v559 = vsel %vm485, %v458, 0.0
      %v560 = vadd.f32 %v558, %v559
      %v561 = vsel %vm485, %v461, 0.0
      %v562 = vadd.f32 %v560, %v561
      %v563 = vsel %vm485, %v463, 0.0
      %v564 = vadd.f32 %v562, %v563
      %v565 = vsel %vm485, %v466, 0.0
      %v566 = vadd.f32 %v564, %v565
      %v567 = vsel %vm485, %v468, 0.0
      %v568 = vadd.f32 %v566, %v567
      %v569 = vsel %vm485, %v471, 0.0
      %v570 = vadd.f32 %v568, %v569
      %v571 = vsel %vm485, %v473, 0.0
      %v572 = vadd.f32 %v570, %v571
      %v573 = vsel %vm485, %v476, 0.0
      %v574 = vadd.f32 %v572, %v573
      %v575 = vsel %vm485, %v478, 0.0
      %v576 = vadd.f32 %v574, %v575
      %v577 = vsel %vm485, %v481, 0.0
      %v578 = vadd.f32 %v576, %v577
      %v579 = vsel %vm485, %v483, 0.0
      %v580 = vadd.f32 %v578, %v579
      %v581 = vrot.slane %v580, 4
      %v582 = vadd.f32 %v580, %v581
      %v583 = vrot.slane %v582, 2
      %v584 = vadd.f32 %v582, %v583
      %v585 = vrot.slane %v584, 1
      %v586 = vadd.f32 %v584, %v585
      %vm587 = vcmask 516096
      %588 = vst.msk [vmem:[%s214] sm:$0x1] %vm587, %v586
      %v589 = vmul.f32 %v406, %v406
      %v590 = vmul.f32 %v408, %v408
      %v591 = vmul.f32 %v411, %v411
      %v592 = vmul.f32 %v413, %v413
      %v593 = vmul.f32 %v416, %v416
      %v594 = vmul.f32 %v418, %v418
      %v595 = vmul.f32 %v421, %v421
      %v596 = vmul.f32 %v423, %v423
      %v597 = vmul.f32 %v426, %v426
      %v598 = vmul.f32 %v428, %v428
      %v599 = vmul.f32 %v431, %v431
      %v600 = vmul.f32 %v433, %v433
      %v601 = vmul.f32 %v436, %v436
      %v602 = vmul.f32 %v438, %v438
      %v603 = vmul.f32 %v441, %v441
      %v604 = vmul.f32 %v443, %v443
      %v605 = vmul.f32 %v446, %v446
      %v606 = vmul.f32 %v448, %v448
      %v607 = vmul.f32 %v451, %v451
      %v608 = vmul.f32 %v453, %v453
      %v609 = vmul.f32 %v456, %v456
      %v610 = vmul.f32 %v458, %v458
      %v611 = vmul.f32 %v461, %v461
      %v612 = vmul.f32 %v463, %v463
      %v613 = vmul.f32 %v466, %v466
      %v614 = vmul.f32 %v468, %v468
      %v615 = vmul.f32 %v471, %v471
      %v616 = vmul.f32 %v473, %v473
      %v617 = vmul.f32 %v476, %v476
      %v618 = vmul.f32 %v478, %v478
      %v619 = vmul.f32 %v481, %v481
      %v620 = vmul.f32 %v483, %v483
      %v621 = vsel %vm485, %v589, 0.0
      %v622 = vsel %vm485, %v590, 0.0
      %v623 = vadd.f32 %v621, %v622
      %v624 = vsel %vm485, %v591, 0.0
      %v625 = vadd.f32 %v623, %v624
      %v626 = vsel %vm485, %v592, 0.0
      %v627 = vadd.f32 %v625, %v626
      %v628 = vsel %vm485, %v593, 0.0
      %v629 = vadd.f32 %v627, %v628
      %v630 = vsel %vm485, %v594, 0.0
      %v631 = vadd.f32 %v629, %v630
      %v632 = vsel %vm485, %v595, 0.0
      %v633 = vadd.f32 %v631, %v632
      %v634 = vsel %vm485, %v596, 0.0
      %v635 = vadd.f32 %v633, %v634
      %v636 = vsel %vm485, %v597, 0.0
      %v637 = vadd.f32 %v635, %v636
      %v638 = vsel %vm485, %v598, 0.0
      %v639 = vadd.f32 %v637, %v638
      %v640 = vsel %vm485, %v599, 0.0
      %v641 = vadd.f32 %v639, %v640
      %v642 = vsel %vm485, %v600, 0.0
      %v643 = vadd.f32 %v641, %v642
      %v644 = vsel %vm485, %v601, 0.0
      %v645 = vadd.f32 %v643, %v644
      %v646 = vsel %vm485, %v602, 0.0
      %v647 = vadd.f32 %v645, %v646
      %v648 = vsel %vm485, %v603, 0.0
      %v649 = vadd.f32 %v647, %v648
      %v650 = vsel %vm485, %v604, 0.0
      %v651 = vadd.f32 %v649, %v650
      %v652 = vsel %vm485, %v605, 0.0
      %v653 = vadd.f32 %v651, %v652
      %v654 = vsel %vm485, %v606, 0.0
      %v655 = vadd.f32 %v653, %v654
      %v656 = vsel %vm485, %v607, 0.0
      %v657 = vadd.f32 %v655, %v656
      %v658 = vsel %vm485, %v608, 0.0
      %v659 = vadd.f32 %v657, %v658
      %v660 = vsel %vm485, %v609, 0.0
      %v661 = vadd.f32 %v659, %v660
      %v662 = vsel %vm485, %v610, 0.0
      %v663 = vadd.f32 %v661, %v662
      %v664 = vsel %vm485, %v611, 0.0
      %v665 = vadd.f32 %v663, %v664
      %v666 = vsel %vm485, %v612, 0.0
      %v667 = vadd.f32 %v665, %v666
      %v668 = vsel %vm485, %v613, 0.0
      %v669 = vadd.f32 %v667, %v668
      %v670 = vsel %vm485, %v614, 0.0
      %v671 = vadd.f32 %v669, %v670
      %v672 = vsel %vm485, %v615, 0.0
      %v673 = vadd.f32 %v671, %v672
      %v674 = vsel %vm485, %v616, 0.0
      %v675 = vadd.f32 %v673, %v674
      %v676 = vsel %vm485, %v617, 0.0
      %v677 = vadd.f32 %v675, %v676
      %v678 = vsel %vm485, %v618, 0.0
      %v679 = vadd.f32 %v677, %v678
      %v680 = vsel %vm485, %v619, 0.0
      %v681 = vadd.f32 %v679, %v680
      %v682 = vsel %vm485, %v620, 0.0
      %v683 = vadd.f32 %v681, %v682
      %v684 = vrot.slane %v683, 4
      %v685 = vadd.f32 %v683, %v684
      %v686 = vrot.slane %v685, 2
      %v687 = vadd.f32 %v685, %v686
      %v688 = vrot.slane %v687, 1
      %v689 = vadd.f32 %v687, %v688
      %690 = vst.msk [vmem:[%s217] sm:$0x1] %vm587, %v689
      %s691 = smul.u32 32, %s16
      %p692 = scmp.lt.s32.totalorder %s691, 63
      %s693 = scalar_select %p692, %s691, 63
      %s694 = smul.addr %s693, 8
      %s695 = scalar_lea.vmem %s2, %s694
      %p696 = scmp.lt.s32.totalorder %s16, 1
      %s697 = scalar_select %p696, %s16, 1
      %s698 = scalar_lea.vmem %s3, %s697
      %p699 = scmp.lt.s32.totalorder %s16, 1
      %s700 = scalar_select %p699, %s16, 1
      %s701 = scalar_lea.vmem %s4, %s700
      // Predicated region
      $region29: #{block_forward.12} parent=27 // pred_check
        %p702 = pneg %p81
      $region30: #{block_forward.12} parent=27 // pred_check_branch
        %704 = sbr.rel (%p702) target = $region32
      $region31: #{block_forward.12} parent=27 // pred_region
        %s705 = smul.u32 32, %s16
      $region32: #{block_forward.12} parent=27 // pred_fallthru
        _
      // Predicated region
      $region33: #{block_forward.12} parent=27 // pred_check
        %p706 = pneg %p107
      $region34: #{block_forward.12} parent=27 // pred_check_branch
        %708 = sbr.rel (%p706) target = $region36
      $region35: #{block_forward.12} parent=27 // pred_region
        _
      $region36: #{block_forward.12} parent=27 // pred_fallthru
        _
      // Predicated region
      $region37: #{block_forward.12} parent=27 // pred_check
        %p709 = pneg %p133
      $region38: #{block_forward.12} parent=27 // pred_check_branch
        %711 = sbr.rel (%p709) target = $region40
      $region39: #{block_forward.12} parent=27 // pred_region
        _
      $region40: #{block_forward.12} parent=27 // pred_fallthru
        _
    $region28: #{block_forward.12} parent=5 // pred_fallthru
      _
    %p712 = scmp.le.s32.totalorder 2, %s11
    // Predicated region
    $region41: #{block_forward.12} parent=5 // pred_check
      %p713 = pneg %p712
    $region42: #{block_forward.12} parent=5 // pred_check_branch
      %715 = sbr.rel (%p713) target = $region44
    $region43: #{block_forward.12} parent=5 // pred_region
      %s716 = ssub.s32 %s11, 2
      // Predicated region
      $region45: #{block_forward.12} parent=43 // pred_check
        %p717 = pneg %p87
      $region46: #{block_forward.12} parent=43 // pred_check_branch
        %719 = sbr.rel (%p717) target = $region48
      $region47: #{block_forward.12} parent=43 // pred_region
        %s720 = smul.u32 32, %s17
        %p721 = scmp.lt.s32.totalorder %s720, 63
        %s722 = scalar_select %p721, %s720, 63
        %s723 = smul.addr %s722, 8
        %s724 = scalar_lea.vmem %s2, %s723
      $region48: #{block_forward.12} parent=43 // pred_fallthru
        _
      // Predicated region
      $region49: #{block_forward.12} parent=43 // pred_check
        %p725 = pneg %p113
      $region50: #{block_forward.12} parent=43 // pred_check_branch
        %727 = sbr.rel (%p725) target = $region52
      $region51: #{block_forward.12} parent=43 // pred_region
        %p728 = scmp.lt.s32.totalorder %s17, 1
        %s729 = scalar_select %p728, %s17, 1
        %s730 = scalar_lea.vmem %s3, %s729
      $region52: #{block_forward.12} parent=43 // pred_fallthru
        _
      // Predicated region
      $region53: #{block_forward.12} parent=43 // pred_check
        %p731 = pneg %p139
      $region54: #{block_forward.12} parent=43 // pred_check_branch
        %733 = sbr.rel (%p731) target = $region56
      $region55: #{block_forward.12} parent=43 // pred_region
        %p734 = scmp.lt.s32.totalorder %s17, 1
        %s735 = scalar_select %p734, %s17, 1
        %s736 = scalar_lea.vmem %s4, %s735
      $region56: #{block_forward.12} parent=43 // pred_fallthru
        _
    $region44: #{block_forward.12} parent=5 // pred_fallthru
      _
  $region6: #{block_forward.12} parent=0 // loop_footer
    %s15 = sadd.s32 1, %s11
  $region7: #{block_forward.12} parent=0 // loop_footer_branch
    %10 = sbr.rel target = $region3
  $region8: #{block_forward.12} parent=0 // loop_exit
    _

// kernel: block_forward.13
$region0: #{block_forward.13}
  #allocation0 [shape = 'u32[]', space=smem, size = 0x4, offset = 0x4, fixed_abs, tag = 'smem constant byte address 0x4 - core index']
  #allocation1 [shape = 'u32[72,128]{1,0:T(1,128)}', space=vmem, size = 0x9000, scoped, tag = 'internal scratch']
  %s0 = inlined_call_operand.vmem [shape: f32[512,64], index: 0, kind: input, shape index: {}]
  %s1 = inlined_call_operand.vmem [shape: f32[1,64], index: 1, kind: input, shape index: {}]
  %s2 = inlined_call_operand.vmem [shape: f32[1,64], index: 2, kind: input, shape index: {}]
  %s3 = inlined_call_operand.vmem [shape: f32[512,64], index: 3, kind: input, shape index: {}]
  %s4 = inlined_call_operand.vmem [shape: f32[1,64], index: 4, kind: input, shape index: {}]
  %s5 = inlined_call_operand.vmem [shape: f32[1,64], index: 5, kind: input, shape index: {}]
  %s6 = inlined_call_operand.hbm [shape: f32[512,64], index: 6, kind: output, shape index: {}]
  %s7 = sld [smem:[#allocation0]]
  $region57: #{block_forward.13} parent=0
    _
  %s9 = ssub.s32 1, %s7
  %s10 = scalar_select 0, %s9, %s7
  $region1: #{block_forward.13} parent=0
    #allocation2 [shape = 'u8[262144]{0}', space=vmem, size = 0x40000, scoped, tag = 'output window, operand 0']
    #allocation3 [shape = 's32[2]{0}', space=sflag, size = 0x8, scoped, tag = 'scoped memory for block_forward.13']
    %11 = vsyncpa [#allocation3], 0
    %s12 = scalar_lea.sflag [#allocation3], 1
    %13 = vsyncpa %s12, 0
    loop: start=0, step=1, limit=4
    $region2: #{block_forward.13} parent=1 // loop_pre_header
      _
    $region3: #{block_forward.13} parent=1 // loop_header
      %s15 = sphi 0, %s19
      %p16 = scmp.ge.s32.totalorder %s15, 4
      %s25 = sphi 0, %s27
      %s28 = sphi 0, %s25
      %s29 = sphi 0, %s28
      %s45 = sphi 0, %s29
      %s49 = sphi 0, %s49
      %s51 = sphi 0, %s49
      %s52 = sphi 0, %s51
      %s66 = sphi 0, %s52
      %s70 = sphi 0, %s70
      %s72 = sphi 0, %s70
      %s73 = sphi 0, %s72
      %s87 = sphi 0, %s73
      %s93 = sphi 0, %s95
      %s96 = sphi 0, %s93
      %s97 = sphi 0, %s96
      %s113 = sphi 0, %s97
      %s117 = sphi 0, %s117
      %s119 = sphi 0, %s117
      %s120 = sphi 0, %s119
      %s134 = sphi 0, %s120
      %s138 = sphi 0, %s138
      %s140 = sphi 0, %s138
      %s141 = sphi 0, %s140
      %s155 = sphi 0, %s141
      %s161 = sphi 0, %s163
      %s164 = sphi 0, %s161
      %s165 = sphi 0, %s164
      %s181 = sphi 0, %s165
    $region4: #{block_forward.13} parent=1 // loop_header_branch
      %18 = sbr.rel (%p16) target = $region8
    $region5: #{block_forward.13} parent=1 // loop_body
      %s20 = ssub.s32 %s15, 1
      %s21 = ssub.s32 %s15, 2
      %s22 = sadd.s32 %s15, 1
      %s23 = ssub.s32 %s15, %s22
      %p24 = scmp.eq.s32.totalorder %s23, 0
      %s26 = sadd.s32 %s25, 1
      %s27 = scalar_select %p24, %s25, %s26
      %p30 = pneg %p24
      %p31 = scmp.eq.s32.totalorder %s15, 1
      %p32 = por %p30, %p31
      %p33 = scmp.ne.s32.totalorder %s25, %s28
      %p34 = scmp.eq.s32.totalorder %s15, 0
      %p35 = por %p33, %p34
      %p36 = scmp.ne.s32.totalorder %s25, %s28
      %p37 = scmp.eq.s32.totalorder %s20, 1
      %p38 = por %p36, %p37
      %p39 = scmp.ne.s32.totalorder %s28, %s29
      %p40 = scmp.eq.s32.totalorder %s20, 0
      %p41 = por %p39, %p40
      %p42 = scmp.ne.s32.totalorder %s28, %s29
      %p43 = scmp.eq.s32.totalorder %s21, 1
      %p44 = por %p42, %p43
      %p46 = scmp.ne.s32.totalorder %s29, %s45
      %p47 = scmp.eq.s32.totalorder %s21, 0
      %p48 = por %p46, %p47
      %s50 = sadd.s32 %s49, 1
      %p53 = scmp.eq.s32.totalorder %s15, 1
      %p54 = scmp.ne.s32.totalorder %s49, %s51
      %p55 = scmp.eq.s32.totalorder %s15, 0
      %p56 = por %p54, %p55
      %p57 = scmp.ne.s32.totalorder %s49, %s51
      %p58 = scmp.eq.s32.totalorder %s20, 1
      %p59 = por %p57, %p58
      %p60 = scmp.ne.s32.totalorder %s51, %s52
      %p61 = scmp.eq.s32.totalorder %s20, 0
      %p62 = por %p60, %p61
      %p63 = scmp.ne.s32.totalorder %s51, %s52
      %p64 = scmp.eq.s32.totalorder %s21, 1
      %p65 = por %p63, %p64
      %p67 = scmp.ne.s32.totalorder %s52, %s66
      %p68 = scmp.eq.s32.totalorder %s21, 0
      %p69 = por %p67, %p68
      %s71 = sadd.s32 %s70, 1
      %p74 = scmp.eq.s32.totalorder %s15, 1
      %p75 = scmp.ne.s32.totalorder %s70, %s72
      %p76 = scmp.eq.s32.totalorder %s15, 0
      %p77 = por %p75, %p76
      %p78 = scmp.ne.s32.totalorder %s70, %s72
      %p79 = scmp.eq.s32.totalorder %s20, 1
      %p80 = por %p78, %p79
      %p81 = scmp.ne.s32.totalorder %s72, %s73
      %p82 = scmp.eq.s32.totalorder %s20, 0
      %p83 = por %p81, %p82
      %p84 = scmp.ne.s32.totalorder %s72, %s73
      %p85 = scmp.eq.s32.totalorder %s21, 1
      %p86 = por %p84, %p85
      %p88 = scmp.ne.s32.totalorder %s73, %s87
      %p89 = scmp.eq.s32.totalorder %s21, 0
      %p90 = por %p88, %p89
      %s91 = ssub.s32 %s15, %s22
      %p92 = scmp.eq.s32.totalorder %s91, 0
      %s94 = sadd.s32 %s93, 1
      %s95 = scalar_select %p92, %s93, %s94
      %p98 = pneg %p92
      %p99 = scmp.eq.s32.totalorder %s15, 1
      %p100 = por %p98, %p99
      %p101 = scmp.ne.s32.totalorder %s93, %s96
      %p102 = scmp.eq.s32.totalorder %s15, 0
      %p103 = por %p101, %p102
      %p104 = scmp.ne.s32.totalorder %s93, %s96
      %p105 = scmp.eq.s32.totalorder %s20, 1
      %p106 = por %p104, %p105
      %p107 = scmp.ne.s32.totalorder %s96, %s97
      %p108 = scmp.eq.s32.totalorder %s20, 0
      %p109 = por %p107, %p108
      %p110 = scmp.ne.s32.totalorder %s96, %s97
      %p111 = scmp.eq.s32.totalorder %s21, 1
      %p112 = por %p110, %p111
      %p114 = scmp.ne.s32.totalorder %s97, %s113
      %p115 = scmp.eq.s32.totalorder %s21, 0
      %p116 = por %p114, %p115
      %s118 = sadd.s32 %s117, 1
      %p121 = scmp.eq.s32.totalorder %s15, 1
      %p122 = scmp.ne.s32.totalorder %s117, %s119
      %p123 = scmp.eq.s32.totalorder %s15, 0
      %p124 = por %p122, %p123
      %p125 = scmp.ne.s32.totalorder %s117, %s119
      %p126 = scmp.eq.s32.totalorder %s20, 1
      %p127 = por %p125, %p126
      %p128 = scmp.ne.s32.totalorder %s119, %s120
      %p129 = scmp.eq.s32.totalorder %s20, 0
      %p130 = por %p128, %p129
      %p131 = scmp.ne.s32.totalorder %s119, %s120
      %p132 = scmp.eq.s32.totalorder %s21, 1
      %p133 = por %p131, %p132
      %p135 = scmp.ne.s32.totalorder %s120, %s134
      %p136 = scmp.eq.s32.totalorder %s21, 0
      %p137 = por %p135, %p136
      %s139 = sadd.s32 %s138, 1
      %p142 = scmp.eq.s32.totalorder %s15, 1
      %p143 = scmp.ne.s32.totalorder %s138, %s140
      %p144 = scmp.eq.s32.totalorder %s15, 0
      %p145 = por %p143, %p144
      %p146 = scmp.ne.s32.totalorder %s138, %s140
      %p147 = scmp.eq.s32.totalorder %s20, 1
      %p148 = por %p146, %p147
      %p149 = scmp.ne.s32.totalorder %s140, %s141
      %p150 = scmp.eq.s32.totalorder %s20, 0
      %p151 = por %p149, %p150
      %p152 = scmp.ne.s32.totalorder %s140, %s141
      %p153 = scmp.eq.s32.totalorder %s21, 1
      %p154 = por %p152, %p153
      %p156 = scmp.ne.s32.totalorder %s141, %s155
      %p157 = scmp.eq.s32.totalorder %s21, 0
      %p158 = por %p156, %p157
      %s159 = ssub.s32 %s15, %s22
      %p160 = scmp.eq.s32.totalorder %s159, 0
      %s162 = sadd.s32 %s161, 1
      %s163 = scalar_select %p160, %s161, %s162
      %p166 = pneg %p160
      %p167 = scmp.eq.s32.totalorder %s15, 1
      %p168 = por %p166, %p167
      %p169 = scmp.ne.s32.totalorder %s161, %s164
      %p170 = scmp.eq.s32.totalorder %s15, 0
      %p171 = por %p169, %p170
      %p172 = scmp.ne.s32.totalorder %s161, %s164
      %p173 = scmp.eq.s32.totalorder %s20, 1
      %p174 = por %p172, %p173
      %p175 = scmp.ne.s32.totalorder %s164, %s165
      %p176 = scmp.eq.s32.totalorder %s20, 0
      %p177 = por %p175, %p176
      %p178 = scmp.ne.s32.totalorder %s164, %s165
      %p179 = scmp.eq.s32.totalorder %s21, 1
      %p180 = por %p178, %p179
      %p182 = scmp.ne.s32.totalorder %s165, %s181
      %p183 = scmp.eq.s32.totalorder %s21, 0
      %p184 = por %p182, %p183
      %p185 = scmp.le.s32.totalorder 1, %s15
      %p186 = scmp.lt.s32.totalorder %s15, 3
      %p187 = pnand %p185, %p186
      %p188 = pneg %p187
      // Predicated region
      $region9: #{block_forward.13} parent=5 // pred_check
        _
      $region10: #{block_forward.13} parent=5 // pred_check_branch
        %190 = sbr.rel (%p187) target = $region12
      $region11: #{block_forward.13} parent=5 // pred_region
        %s191 = ssub.s32 %s15, 1
        // Predicated region
        $region13: #{block_forward.13} parent=11 // pred_check
          %p192 = pneg %p62
        $region14: #{block_forward.13} parent=11 // pred_check_branch
          %194 = sbr.rel (%p192) target = $region16
        $region15: #{block_forward.13} parent=11 // pred_region
          _
        $region16: #{block_forward.13} parent=11 // pred_fallthru
          _
        // Predicated region
        $region17: #{block_forward.13} parent=11 // pred_check
          %p195 = pneg %p83
        $region18: #{block_forward.13} parent=11 // pred_check_branch
          %197 = sbr.rel (%p195) target = $region20
        $region19: #{block_forward.13} parent=11 // pred_region
          _
        $region20: #{block_forward.13} parent=11 // pred_fallthru
          _
        // Predicated region
        $region21: #{block_forward.13} parent=11 // pred_check
          %p198 = pneg %p130
        $region22: #{block_forward.13} parent=11 // pred_check_branch
          %200 = sbr.rel (%p198) target = $region24
        $region23: #{block_forward.13} parent=11 // pred_region
          _
        $region24: #{block_forward.13} parent=11 // pred_fallthru
          _
        // Predicated region
        $region25: #{block_forward.13} parent=11 // pred_check
          %p201 = pneg %p151
        $region26: #{block_forward.13} parent=11 // pred_check_branch
          %203 = sbr.rel (%p201) target = $region28
        $region27: #{block_forward.13} parent=11 // pred_region
          _
        $region28: #{block_forward.13} parent=11 // pred_fallthru
          _
      $region12: #{block_forward.13} parent=5 // pred_fallthru
        _
      %p204 = scmp.lt.s32.totalorder %s15, 2
      // Predicated region
      $region29: #{block_forward.13} parent=5 // pred_check
        %p205 = pneg %p204
      $region30: #{block_forward.13} parent=5 // pred_check_branch
        %207 = sbr.rel (%p205) target = $region32
      $region31: #{block_forward.13} parent=5 // pred_region
        // Predicated region
        $region33: #{block_forward.13} parent=31 // pred_check
          %p208 = pneg %p35
        $region34: #{block_forward.13} parent=31 // pred_check_branch
          %210 = sbr.rel (%p208) target = $region36
        $region35: #{block_forward.13} parent=31 // pred_region
          %s211 = smul.u32 32, %s15
          %p212 = scmp.lt.s32.totalorder %s211, 63
          %s213 = scalar_select %p212, %s211, 63
          %s214 = smul.addr %s213, 8
          %s215 = scalar_lea.vmem %s0, %s214
          %s216 = smul.u32 32, %s15
        $region36: #{block_forward.13} parent=31 // pred_fallthru
          _
        // Predicated region
        $region37: #{block_forward.13} parent=31 // pred_check
          %p217 = pneg %p103
        $region38: #{block_forward.13} parent=31 // pred_check_branch
          %219 = sbr.rel (%p217) target = $region40
        $region39: #{block_forward.13} parent=31 // pred_region
          %s220 = smul.u32 32, %s15
          %p221 = scmp.lt.s32.totalorder %s220, 63
          %s222 = scalar_select %p221, %s220, 63
          %s223 = smul.addr %s222, 8
          %s224 = scalar_lea.vmem %s3, %s223
          %s225 = smul.u32 32, %s15
        $region40: #{block_forward.13} parent=31 // pred_fallthru
          _
      $region32: #{block_forward.13} parent=5 // pred_fallthru
        _
      %p226 = scmp.le.s32.totalorder 1, %s15
      %p227 = scmp.lt.s32.totalorder %s15, 3
      %p228 = pnand %p226, %p227
      %p229 = pneg %p228
      // Predicated region
      $region41: #{block_forward.13} parent=5 // pred_check
        _
      $region42: #{block_forward.13} parent=5 // pred_check_branch
        %231 = sbr.rel (%p228) target = $region44
      $region43: #{block_forward.13} parent=5 // pred_region
        %s232 = ssub.s32 %s15, 1
        %s233 = smul.u32 32, %s20
        %p234 = scmp.lt.s32.totalorder %s233, 63
        %s235 = scalar_select %p234, %s233, 63
        %s236 = smul.addr %s235, 8
        %s237 = scalar_lea.vmem %s0, %s236
        %p238 = pneg %p41
        %p239 = pneg %p38
        %p240 = pneg %p62
        %p241 = pneg %p59
        %p242 = pneg %p83
        %p243 = pneg %p80
        %s244 = smul.u32 32, %s20
        %p245 = scmp.lt.s32.totalorder %s244, 63
        %s246 = scalar_select %p245, %s244, 63
        %s247 = smul.addr %s246, 8
        %s248 = scalar_lea.vmem %s3, %s247
        %p249 = pneg %p109
        %p250 = pneg %p106
        %p251 = pneg %p130
        %p252 = pneg %p127
        %p253 = pneg %p151
        %p254 = pneg %p148
        %p255 = pneg %p177
        %p256 = pneg %p174
        %s257 = sand.u32 %s164, 1
        %s258 = scalar_lea.sflag [#allocation3], %s257
        %s259 = sand.u32 %s164, 1
        %s260 = smul.addr %s259, 256
        %s261 = scalar_lea.vmem [#allocation2], %s260
        %s262 = smul.u32 32, %s20
        %p263 = scmp.lt.s32.totalorder %s262, 63
        %s264 = scalar_select %p263, %s262, 63
        %s265 = smul.addr %s264, 8
        %s266 = scalar_lea.vmem %s0, %s265
        %s267 = smul.u32 32, %s20
        %s268 = smul.u32 32, %s20
        %p269 = scmp.lt.s32.totalorder %s268, 63
        %s270 = scalar_select %p269, %s268, 63
        %s271 = smul.addr %s270, 8
        %s272 = scalar_lea.vmem %s3, %s271
        %s273 = smul.u32 32, %s20
        %s274 = smul.u32 32, %s20
        %v275 = vld [vmem:[%s266] sm:$0xff]
        %v276 = vld [vmem:[%s266 + $0x8] sm:$0xff]
        %v277 = vld [vmem:[%s266 + $0x10] sm:$0xff]
        %v278 = vld [vmem:[%s266 + $0x18] sm:$0xff]
        %v279 = vld [vmem:[%s266 + $0x20] sm:$0xff]
        %v280 = vld [vmem:[%s266 + $0x28] sm:$0xff]
        %v281 = vld [vmem:[%s266 + $0x30] sm:$0xff]
        %v282 = vld [vmem:[%s266 + $0x38] sm:$0xff]
        %v283 = vld [vmem:[%s266 + $0x40] sm:$0xff]
        %v284 = vld [vmem:[%s266 + $0x48] sm:$0xff]
        %v285 = vld [vmem:[%s266 + $0x50] sm:$0xff]
        %v286 = vld [vmem:[%s266 + $0x58] sm:$0xff]
        %v287 = vld [vmem:[%s266 + $0x60] sm:$0xff]
        %v288 = vld [vmem:[%s266 + $0x68] sm:$0xff]
        %v289 = vld [vmem:[%s266 + $0x70] sm:$0xff]
        %v290 = vld [vmem:[%s266 + $0x78] sm:$0xff]
        %v291 = vld [vmem:[%s266 + $0x80] sm:$0xff]
        %v292 = vld [vmem:[%s266 + $0x88] sm:$0xff]
        %v293 = vld [vmem:[%s266 + $0x90] sm:$0xff]
        %v294 = vld [vmem:[%s266 + $0x98] sm:$0xff]
        %v295 = vld [vmem:[%s266 + $0xa0] sm:$0xff]
        %v296 = vld [vmem:[%s266 + $0xa8] sm:$0xff]
        %v297 = vld [vmem:[%s266 + $0xb0] sm:$0xff]
        %v298 = vld [vmem:[%s266 + $0xb8] sm:$0xff]
        %v299 = vld [vmem:[%s266 + $0xc0] sm:$0xff]
        %v300 = vld [vmem:[%s266 + $0xc8] sm:$0xff]
        %v301 = vld [vmem:[%s266 + $0xd0] sm:$0xff]
        %v302 = vld [vmem:[%s266 + $0xd8] sm:$0xff]
        %v303 = vld [vmem:[%s266 + $0xe0] sm:$0xff]
        %v304 = vld [vmem:[%s266 + $0xe8] sm:$0xff]
        %v305 = vld [vmem:[%s266 + $0xf0] sm:$0xff]
        %v306 = vld [vmem:[%s266 + $0xf8] sm:$0xff]
        %v307 = vld [vmem:[%s1] sm:$0x1]
        %v309 = vperm.slane %v307, 0
        %v311 = vmul.f32 %v275, %v309
        %v312 = vmul.f32 %v276, %v309
        %v313 = vmul.f32 %v277, %v309
        %v314 = vmul.f32 %v278, %v309
        %v315 = vmul.f32 %v279, %v309
        %v316 = vmul.f32 %v280, %v309
        %v317 = vmul.f32 %v281, %v309
        %v318 = vmul.f32 %v282, %v309
        %v319 = vmul.f32 %v283, %v309
        %v320 = vmul.f32 %v284, %v309
        %v321 = vmul.f32 %v285, %v309
        %v322 = vmul.f32 %v286, %v309
        %v323 = vmul.f32 %v287, %v309
        %v324 = vmul.f32 %v288, %v309
        %v325 = vmul.f32 %v289, %v309
        %v326 = vmul.f32 %v290, %v309
        %v327 = vmul.f32 %v291, %v309
        %v328 = vmul.f32 %v292, %v309
        %v329 = vmul.f32 %v293, %v309
        %v330 = vmul.f32 %v294, %v309
        %v331 = vmul.f32 %v295, %v309
        %v332 = vmul.f32 %v296, %v309
        %v333 = vmul.f32 %v297, %v309
        %v334 = vmul.f32 %v298, %v309
        %v335 = vmul.f32 %v299, %v309
        %v336 = vmul.f32 %v300, %v309
        %v337 = vmul.f32 %v301, %v309
        %v338 = vmul.f32 %v302, %v309
        %v339 = vmul.f32 %v303, %v309
        %v340 = vmul.f32 %v304, %v309
        %v341 = vmul.f32 %v305, %v309
        %v342 = vmul.f32 %v306, %v309
        %v343 = vld [vmem:[%s2] sm:$0x1]
        %v345 = vperm.slane %v343, 0
        %v347 = vadd.f32 %v311, %v345
        %v348 = vadd.f32 %v312, %v345
        %v349 = vadd.f32 %v313, %v345
        %v350 = vadd.f32 %v314, %v345
        %v351 = vadd.f32 %v315, %v345
        %v352 = vadd.f32 %v316, %v345
        %v353 = vadd.f32 %v317, %v345
        %v354 = vadd.f32 %v318, %v345
        %v355 = vadd.f32 %v319, %v345
        %v356 = vadd.f32 %v320, %v345
        %v357 = vadd.f32 %v321, %v345
        %v358 = vadd.f32 %v322, %v345
        %v359 = vadd.f32 %v323, %v345
        %v360 = vadd.f32 %v324, %v345
        %v361 = vadd.f32 %v325, %v345
        %v362 = vadd.f32 %v326, %v345
        %v363 = vadd.f32 %v327, %v345
        %v364 = vadd.f32 %v328, %v345
        %v365 = vadd.f32 %v329, %v345
        %v366 = vadd.f32 %v330, %v345
        %v367 = vadd.f32 %v331, %v345
        %v368 = vadd.f32 %v332, %v345
        %v369 = vadd.f32 %v333, %v345
        %v370 = vadd.f32 %v334, %v345
        %v371 = vadd.f32 %v335, %v345
        %v372 = vadd.f32 %v336, %v345
        %v373 = vadd.f32 %v337, %v345
        %v374 = vadd.f32 %v338, %v345
        %v375 = vadd.f32 %v339, %v345
        %v376 = vadd.f32 %v340, %v345
        %v377 = vadd.f32 %v341, %v345
        %v378 = vadd.f32 %v342, %v345
        %v379 = vld [vmem:[%s272] sm:$0xff]
        %v380 = vld [vmem:[%s272 + $0x8] sm:$0xff]
        %v381 = vld [vmem:[%s272 + $0x10] sm:$0xff]
        %v382 = vld [vmem:[%s272 + $0x18] sm:$0xff]
        %v383 = vld [vmem:[%s272 + $0x20] sm:$0xff]
        %v384 = vld [vmem:[%s272 + $0x28] sm:$0xff]
        %v385 = vld [vmem:[%s272 + $0x30] sm:$0xff]
        %v386 = vld [vmem:[%s272 + $0x38] sm:$0xff]
        %v387 = vld [vmem:[%s272 + $0x40] sm:$0xff]
        %v388 = vld [vmem:[%s272 + $0x48] sm:$0xff]
        %v389 = vld [vmem:[%s272 + $0x50] sm:$0xff]
        %v390 = vld [vmem:[%s272 + $0x58] sm:$0xff]
        %v391 = vld [vmem:[%s272 + $0x60] sm:$0xff]
        %v392 = vld [vmem:[%s272 + $0x68] sm:$0xff]
        %v393 = vld [vmem:[%s272 + $0x70] sm:$0xff]
        %v394 = vld [vmem:[%s272 + $0x78] sm:$0xff]
        %v395 = vld [vmem:[%s272 + $0x80] sm:$0xff]
        %v396 = vld [vmem:[%s272 + $0x88] sm:$0xff]
        %v397 = vld [vmem:[%s272 + $0x90] sm:$0xff]
        %v398 = vld [vmem:[%s272 + $0x98] sm:$0xff]
        %v399 = vld [vmem:[%s272 + $0xa0] sm:$0xff]
        %v400 = vld [vmem:[%s272 + $0xa8] sm:$0xff]
        %v401 = vld [vmem:[%s272 + $0xb0] sm:$0xff]
        %v402 = vld [vmem:[%s272 + $0xb8] sm:$0xff]
        %v403 = vld [vmem:[%s272 + $0xc0] sm:$0xff]
        %v404 = vld [vmem:[%s272 + $0xc8] sm:$0xff]
        %v405 = vld [vmem:[%s272 + $0xd0] sm:$0xff]
        %v406 = vld [vmem:[%s272 + $0xd8] sm:$0xff]
        %v407 = vld [vmem:[%s272 + $0xe0] sm:$0xff]
        %v408 = vld [vmem:[%s272 + $0xe8] sm:$0xff]
        %v409 = vld [vmem:[%s272 + $0xf0] sm:$0xff]
        %v410 = vld [vmem:[%s272 + $0xf8] sm:$0xff]
        %v411 = vld [vmem:[%s4] sm:$0x1]
        %v413 = vperm.slane %v411, 0
        %v415 = vmul.f32 %v379, %v413
        %v416 = vmul.f32 %v380, %v413
        %v417 = vmul.f32 %v381, %v413
        %v418 = vmul.f32 %v382, %v413
        %v419 = vmul.f32 %v383, %v413
        %v420 = vmul.f32 %v384, %v413
        %v421 = vmul.f32 %v385, %v413
        %v422 = vmul.f32 %v386, %v413
        %v423 = vmul.f32 %v387, %v413
        %v424 = vmul.f32 %v388, %v413
        %v425 = vmul.f32 %v389, %v413
        %v426 = vmul.f32 %v390, %v413
        %v427 = vmul.f32 %v391, %v413
        %v428 = vmul.f32 %v392, %v413
        %v429 = vmul.f32 %v393, %v413
        %v430 = vmul.f32 %v394, %v413
        %v431 = vmul.f32 %v395, %v413
        %v432 = vmul.f32 %v396, %v413
        %v433 = vmul.f32 %v397, %v413
        %v434 = vmul.f32 %v398, %v413
        %v435 = vmul.f32 %v399, %v413
        %v436 = vmul.f32 %v400, %v413
        %v437 = vmul.f32 %v401, %v413
        %v438 = vmul.f32 %v402, %v413
        %v439 = vmul.f32 %v403, %v413
        %v440 = vmul.f32 %v404, %v413
        %v441 = vmul.f32 %v405, %v413
        %v442 = vmul.f32 %v406, %v413
        %v443 = vmul.f32 %v407, %v413
        %v444 = vmul.f32 %v408, %v413
        %v445 = vmul.f32 %v409, %v413
        %v446 = vmul.f32 %v410, %v413
        %v447 = vadd.f32 %v347, %v415
        %v448 = vadd.f32 %v348, %v416
        %v449 = vadd.f32 %v349, %v417
        %v450 = vadd.f32 %v350, %v418
        %v451 = vadd.f32 %v351, %v419
        %v452 = vadd.f32 %v352, %v420
        %v453 = vadd.f32 %v353, %v421
        %v454 = vadd.f32 %v354, %v422
        %v455 = vadd.f32 %v355, %v423
        %v456 = vadd.f32 %v356, %v424
        %v457 = vadd.f32 %v357, %v425
        %v458 = vadd.f32 %v358, %v426
        %v459 = vadd.f32 %v359, %v427
        %v460 = vadd.f32 %v360, %v428
        %v461 = vadd.f32 %v361, %v429
        %v462 = vadd.f32 %v362, %v430
        %v463 = vadd.f32 %v363, %v431
        %v464 = vadd.f32 %v364, %v432
        %v465 = vadd.f32 %v365, %v433
        %v466 = vadd.f32 %v366, %v434
        %v467 = vadd.f32 %v367, %v435
        %v468 = vadd.f32 %v368, %v436
        %v469 = vadd.f32 %v369, %v437
        %v470 = vadd.f32 %v370, %v438
        %v471 = vadd.f32 %v371, %v439
        %v472 = vadd.f32 %v372, %v440
        %v473 = vadd.f32 %v373, %v441
        %v474 = vadd.f32 %v374, %v442
        %v475 = vadd.f32 %v375, %v443
        %v476 = vadd.f32 %v376, %v444
        %v477 = vadd.f32 %v377, %v445
        %v478 = vadd.f32 %v378, %v446
        %v479 = vld [vmem:[%s5] sm:$0x1]
        %v481 = vperm.slane %v479, 0
        %v483 = vadd.f32 %v447, %v481
        %v484 = vadd.f32 %v448, %v481
        %v485 = vadd.f32 %v449, %v481
        %v486 = vadd.f32 %v450, %v481
        %v487 = vadd.f32 %v451, %v481
        %v488 = vadd.f32 %v452, %v481
        %v489 = vadd.f32 %v453, %v481
        %v490 = vadd.f32 %v454, %v481
        %v491 = vadd.f32 %v455, %v481
        %v492 = vadd.f32 %v456, %v481
        %v493 = vadd.f32 %v457, %v481
        %v494 = vadd.f32 %v458, %v481
        %v495 = vadd.f32 %v459, %v481
        %v496 = vadd.f32 %v460, %v481
        %v497 = vadd.f32 %v461, %v481
        %v498 = vadd.f32 %v462, %v481
        %v499 = vadd.f32 %v463, %v481
        %v500 = vadd.f32 %v464, %v481
        %v501 = vadd.f32 %v465, %v481
        %v502 = vadd.f32 %v466, %v481
        %v503 = vadd.f32 %v467, %v481
        %v504 = vadd.f32 %v468, %v481
        %v505 = vadd.f32 %v469, %v481
        %v506 = vadd.f32 %v470, %v481
        %v507 = vadd.f32 %v471, %v481
        %v508 = vadd.f32 %v472, %v481
        %v509 = vadd.f32 %v473, %v481
        %v510 = vadd.f32 %v474, %v481
        %v511 = vadd.f32 %v475, %v481
        %v512 = vadd.f32 %v476, %v481
        %v513 = vadd.f32 %v477, %v481
        %v514 = vadd.f32 %v478, %v481
        %vm515 = vcmask 523264
        %516 = vst.msk [vmem:[%s261] sm:$0xff] %vm515, %v483
        %517 = vst.msk [vmem:[%s261 + $0x8] sm:$0xff] %vm515, %v484
        %518 = vst.msk [vmem:[%s261 + $0x10] sm:$0xff] %vm515, %v485
        %519 = vst.msk [vmem:[%s261 + $0x18] sm:$0xff] %vm515, %v486
        %520 = vst.msk [vmem:[%s261 + $0x20] sm:$0xff] %vm515, %v487
        %521 = vst.msk [vmem:[%s261 + $0x28] sm:$0xff] %vm515, %v488
        %522 = vst.msk [vmem:[%s261 + $0x30] sm:$0xff] %vm515, %v489
        %523 = vst.msk [vmem:[%s261 + $0x38] sm:$0xff] %vm515, %v490
        %524 = vst.msk [vmem:[%s261 + $0x40] sm:$0xff] %vm515, %v491
        %525 = vst.msk [vmem:[%s261 + $0x48] sm:$0xff] %vm515, %v492
        %526 = vst.msk [vmem:[%s261 + $0x50] sm:$0xff] %vm515, %v493
        %527 = vst.msk [vmem:[%s261 + $0x58] sm:$0xff] %vm515, %v494
        %528 = vst.msk [vmem:[%s261 + $0x60] sm:$0xff] %vm515, %v495
        %529 = vst.msk [vmem:[%s261 + $0x68] sm:$0xff] %vm515, %v496
        %530 = vst.msk [vmem:[%s261 + $0x70] sm:$0xff] %vm515, %v497
        %531 = vst.msk [vmem:[%s261 + $0x78] sm:$0xff] %vm515, %v498
        %532 = vst.msk [vmem:[%s261 + $0x80] sm:$0xff] %vm515, %v499
        %533 = vst.msk [vmem:[%s261 + $0x88] sm:$0xff] %vm515, %v500
        %534 = vst.msk [vmem:[%s261 + $0x90] sm:$0xff] %vm515, %v501
        %535 = vst.msk [vmem:[%s261 + $0x98] sm:$0xff] %vm515, %v502
        %536 = vst.msk [vmem:[%s261 + $0xa0] sm:$0xff] %vm515, %v503
        %537 = vst.msk [vmem:[%s261 + $0xa8] sm:$0xff] %vm515, %v504
        %538 = vst.msk [vmem:[%s261 + $0xb0] sm:$0xff] %vm515, %v505
        %539 = vst.msk [vmem:[%s261 + $0xb8] sm:$0xff] %vm515, %v506
        %540 = vst.msk [vmem:[%s261 + $0xc0] sm:$0xff] %vm515, %v507
        %541 = vst.msk [vmem:[%s261 + $0xc8] sm:$0xff] %vm515, %v508
        %542 = vst.msk [vmem:[%s261 + $0xd0] sm:$0xff] %vm515, %v509
        %543 = vst.msk [vmem:[%s261 + $0xd8] sm:$0xff] %vm515, %v510
        %544 = vst.msk [vmem:[%s261 + $0xe0] sm:$0xff] %vm515, %v511
        %545 = vst.msk [vmem:[%s261 + $0xe8] sm:$0xff] %vm515, %v512
        %546 = vst.msk [vmem:[%s261 + $0xf0] sm:$0xff] %vm515, %v513
        %547 = vst.msk [vmem:[%s261 + $0xf8] sm:$0xff] %vm515, %v514
        %s548 = sand.u32 %s164, 1
        %s549 = scalar_lea.sflag [#allocation3], %s548
        %s550 = sand.u32 %s164, 1
        %s551 = smul.addr %s550, 256
        %s552 = scalar_lea.vmem [#allocation2], %s551
        // Predicated region
        $region45: #{block_forward.13} parent=43 // pred_check
          %p553 = pneg %p174
        $region46: #{block_forward.13} parent=43 // pred_check_branch
          %555 = sbr.rel (%p553) target = $region48
        $region47: #{block_forward.13} parent=43 // pred_region
          %s556 = smul.u32 32, %s20
          %558 = vsyncadd %s549, 0
          %s559 = smul.addr %s556, 8
          %s560 = scalar_lea.hbm %s6, %s559
          %s561 = sshll.u32 %s552, 4
          %s562 = int_to_ptr.vmem [resolvable:$true] %s561
          %s563 = sshll.u32 %s560, 4
          %s564 = int_to_ptr.hbm [resolvable:$true] %s563
          %569 = dma.vmem_to_hbm [thread:$0]  %s562, 4096, %s564, %s549, 128, 128, 8
        $region48: #{block_forward.13} parent=43 // pred_fallthru
          _
      $region44: #{block_forward.13} parent=5 // pred_fallthru
        _
      %p570 = scmp.le.s32.totalorder 2, %s15
      // Predicated region
      $region49: #{block_forward.13} parent=5 // pred_check
        %p571 = pneg %p570
      $region50: #{block_forward.13} parent=5 // pred_check_branch
        %573 = sbr.rel (%p571) target = $region52
      $region51: #{block_forward.13} parent=5 // pred_region
        %s574 = ssub.s32 %s15, 2
        // Predicated region
        $region53: #{block_forward.13} parent=51 // pred_check
          %p575 = pneg %p180
        $region54: #{block_forward.13} parent=51 // pred_check_branch
          %577 = sbr.rel (%p575) target = $region56
        $region55: #{block_forward.13} parent=51 // pred_region
          %s578 = sand.u32 %s165, 1
          %s579 = scalar_lea.sflag [#allocation3], %s578
          %s580 = sand.u32 %s165, 1
          %s581 = smul.addr %s580, 256
          %s582 = scalar_lea.vmem [#allocation2], %s581
          %584 = dma.done %s579, 4096
        $region56: #{block_forward.13} parent=51 // pred_fallthru
          _
      $region52: #{block_forward.13} parent=5 // pred_fallthru
        _
    $region6: #{block_forward.13} parent=1 // loop_footer
      %s19 = sadd.s32 1, %s15
    $region7: #{block_forward.13} parent=1 // loop_footer_branch
      %14 = sbr.rel target = $region3
    $region8: #{block_forward.13} parent=1 // loop_exit
      _
    %585 = vsyncpa [#allocation3], 1
    %s586 = scalar_lea.sflag [#allocation3], 1
    %587 = vsyncpa %s586, 1

// kernel: block_forward.9
$region0: #{block_forward.9}
  #allocation0 [shape = 'u32[]', space=smem, size = 0x4, offset = 0x4, fixed_abs, tag = 'smem constant byte address 0x4 - core index']
  #allocation1 [shape = 'u32[72,128]{1,0:T(1,128)}', space=vmem, size = 0x9000, scoped, tag = 'internal scratch']
  %s0 = inlined_call_operand.vmem [shape: bf16[2,18,18,128], index: 0, kind: input, shape index: {}]
  %s1 = inlined_call_operand.vmem [shape: f32[9,128], index: 1, kind: input, shape index: {}]
  %s2 = inlined_call_operand.vmem [shape: bf16[2,16,16,128], index: 2, kind: output, shape index: {0}]
  %s3 = inlined_call_operand.vmem [shape: f32[2,1,128], index: 3, kind: output, shape index: {1}]
  %s4 = inlined_call_operand.vmem [shape: f32[2,1,128], index: 4, kind: output, shape index: {2}]
  %5 = xla_tuple %s2, %s3, %s4
  %s6 = sld [smem:[#allocation0]]
  $region57: #{block_forward.9} parent=0
    _
  %s8 = ssub.s32 1, %s6
  %s9 = scalar_select 0, %s8, %s6
  loop: start=0, step=1, limit=4
  $region2: #{block_forward.9} parent=0 // loop_pre_header
    _
  $region3: #{block_forward.9} parent=0 // loop_header
    %s11 = sphi 0, %s15
    %p12 = scmp.ge.s32.totalorder %s11, 4
    %s21 = sphi 0, %s23
    %s24 = sphi 0, %s21
    %s25 = sphi 0, %s24
    %s41 = sphi 0, %s25
    %s45 = sphi 0, %s45
    %s47 = sphi 0, %s45
    %s48 = sphi 0, %s47
    %s62 = sphi 0, %s48
    %s68 = sphi 0, %s70
    %s71 = sphi 0, %s68
    %s72 = sphi 0, %s71
    %s88 = sphi 0, %s72
    %s94 = sphi 0, %s96
    %s97 = sphi 0, %s94
    %s98 = sphi 0, %s97
    %s114 = sphi 0, %s98
    %s120 = sphi 0, %s122
    %s123 = sphi 0, %s120
    %s124 = sphi 0, %s123
    %s140 = sphi 0, %s124
  $region4: #{block_forward.9} parent=0 // loop_header_branch
    %14 = sbr.rel (%p12) target = $region8
  $region5: #{block_forward.9} parent=0 // loop_body
    %s16 = ssub.s32 %s11, 1
    %s17 = ssub.s32 %s11, 2
    %s18 = sadd.s32 %s11, 1
    %s19 = ssub.s32 %s11, %s18
    %p20 = scmp.eq.s32.totalorder %s19, 0
    %s22 = sadd.s32 %s21, 1
    %s23 = scalar_select %p20, %s21, %s22
    %p26 = pneg %p20
    %p27 = scmp.eq.s32.totalorder %s11, 1
    %p28 = por %p26, %p27
    %p29 = scmp.ne.s32.totalorder %s21, %s24
    %p30 = scmp.eq.s32.totalorder %s11, 0
    %p31 = por %p29, %p30
    %p32 = scmp.ne.s32.totalorder %s21, %s24
    %p33 = scmp.eq.s32.totalorder %s16, 1
    %p34 = por %p32, %p33
    %p35 = scmp.ne.s32.totalorder %s24, %s25
    %p36 = scmp.eq.s32.totalorder %s16, 0
    %p37 = por %p35, %p36
    %p38 = scmp.ne.s32.totalorder %s24, %s25
    %p39 = scmp.eq.s32.totalorder %s17, 1
    %p40 = por %p38, %p39
    %p42 = scmp.ne.s32.totalorder %s25, %s41
    %p43 = scmp.eq.s32.totalorder %s17, 0
    %p44 = por %p42, %p43
    %s46 = sadd.s32 %s45, 1
    %p49 = scmp.eq.s32.totalorder %s11, 1
    %p50 = scmp.ne.s32.totalorder %s45, %s47
    %p51 = scmp.eq.s32.totalorder %s11, 0
    %p52 = por %p50, %p51
    %p53 = scmp.ne.s32.totalorder %s45, %s47
    %p54 = scmp.eq.s32.totalorder %s16, 1
    %p55 = por %p53, %p54
    %p56 = scmp.ne.s32.totalorder %s47, %s48
    %p57 = scmp.eq.s32.totalorder %s16, 0
    %p58 = por %p56, %p57
    %p59 = scmp.ne.s32.totalorder %s47, %s48
    %p60 = scmp.eq.s32.totalorder %s17, 1
    %p61 = por %p59, %p60
    %p63 = scmp.ne.s32.totalorder %s48, %s62
    %p64 = scmp.eq.s32.totalorder %s17, 0
    %p65 = por %p63, %p64
    %s66 = ssub.s32 %s11, %s18
    %p67 = scmp.eq.s32.totalorder %s66, 0
    %s69 = sadd.s32 %s68, 1
    %s70 = scalar_select %p67, %s68, %s69
    %p73 = pneg %p67
    %p74 = scmp.eq.s32.totalorder %s11, 1
    %p75 = por %p73, %p74
    %p76 = scmp.ne.s32.totalorder %s68, %s71
    %p77 = scmp.eq.s32.totalorder %s11, 0
    %p78 = por %p76, %p77
    %p79 = scmp.ne.s32.totalorder %s68, %s71
    %p80 = scmp.eq.s32.totalorder %s16, 1
    %p81 = por %p79, %p80
    %p82 = scmp.ne.s32.totalorder %s71, %s72
    %p83 = scmp.eq.s32.totalorder %s16, 0
    %p84 = por %p82, %p83
    %p85 = scmp.ne.s32.totalorder %s71, %s72
    %p86 = scmp.eq.s32.totalorder %s17, 1
    %p87 = por %p85, %p86
    %p89 = scmp.ne.s32.totalorder %s72, %s88
    %p90 = scmp.eq.s32.totalorder %s17, 0
    %p91 = por %p89, %p90
    %s92 = ssub.s32 %s11, %s18
    %p93 = scmp.eq.s32.totalorder %s92, 0
    %s95 = sadd.s32 %s94, 1
    %s96 = scalar_select %p93, %s94, %s95
    %p99 = pneg %p93
    %p100 = scmp.eq.s32.totalorder %s11, 1
    %p101 = por %p99, %p100
    %p102 = scmp.ne.s32.totalorder %s94, %s97
    %p103 = scmp.eq.s32.totalorder %s11, 0
    %p104 = por %p102, %p103
    %p105 = scmp.ne.s32.totalorder %s94, %s97
    %p106 = scmp.eq.s32.totalorder %s16, 1
    %p107 = por %p105, %p106
    %p108 = scmp.ne.s32.totalorder %s97, %s98
    %p109 = scmp.eq.s32.totalorder %s16, 0
    %p110 = por %p108, %p109
    %p111 = scmp.ne.s32.totalorder %s97, %s98
    %p112 = scmp.eq.s32.totalorder %s17, 1
    %p113 = por %p111, %p112
    %p115 = scmp.ne.s32.totalorder %s98, %s114
    %p116 = scmp.eq.s32.totalorder %s17, 0
    %p117 = por %p115, %p116
    %s118 = ssub.s32 %s11, %s18
    %p119 = scmp.eq.s32.totalorder %s118, 0
    %s121 = sadd.s32 %s120, 1
    %s122 = scalar_select %p119, %s120, %s121
    %p125 = pneg %p119
    %p126 = scmp.eq.s32.totalorder %s11, 1
    %p127 = por %p125, %p126
    %p128 = scmp.ne.s32.totalorder %s120, %s123
    %p129 = scmp.eq.s32.totalorder %s11, 0
    %p130 = por %p128, %p129
    %p131 = scmp.ne.s32.totalorder %s120, %s123
    %p132 = scmp.eq.s32.totalorder %s16, 1
    %p133 = por %p131, %p132
    %p134 = scmp.ne.s32.totalorder %s123, %s124
    %p135 = scmp.eq.s32.totalorder %s16, 0
    %p136 = por %p134, %p135
    %p137 = scmp.ne.s32.totalorder %s123, %s124
    %p138 = scmp.eq.s32.totalorder %s17, 1
    %p139 = por %p137, %p138
    %p141 = scmp.ne.s32.totalorder %s124, %s140
    %p142 = scmp.eq.s32.totalorder %s17, 0
    %p143 = por %p141, %p142
    %p144 = scmp.le.s32.totalorder 1, %s11
    %p145 = scmp.lt.s32.totalorder %s11, 3
    %p146 = pnand %p144, %p145
    %p147 = pneg %p146
    // Predicated region
    $region9: #{block_forward.9} parent=5 // pred_check
      _
    $region10: #{block_forward.9} parent=5 // pred_check_branch
      %149 = sbr.rel (%p146) target = $region12
    $region11: #{block_forward.9} parent=5 // pred_region
      %s150 = ssub.s32 %s11, 1
      // Predicated region
      $region13: #{block_forward.9} parent=11 // pred_check
        %p151 = pneg %p58
      $region14: #{block_forward.9} parent=11 // pred_check_branch
        %153 = sbr.rel (%p151) target = $region16
      $region15: #{block_forward.9} parent=11 // pred_region
        _
      $region16: #{block_forward.9} parent=11 // pred_fallthru
        _
    $region12: #{block_forward.9} parent=5 // pred_fallthru
      _
    %p154 = scmp.lt.s32.totalorder %s11, 2
    // Predicated region
    $region17: #{block_forward.9} parent=5 // pred_check
      %p155 = pneg %p154
    $region18: #{block_forward.9} parent=5 // pred_check_branch
      %157 = sbr.rel (%p155) target = $region20
    $region19: #{block_forward.9} parent=5 // pred_region
      // Predicated region
      $region21: #{block_forward.9} parent=19 // pred_check
        %p158 = pneg %p31
      $region22: #{block_forward.9} parent=19 // pred_check_branch
        %160 = sbr.rel (%p158) target = $region24
      $region23: #{block_forward.9} parent=19 // pred_region
        %p161 = scmp.lt.s32.totalorder %s11, 1
        %s162 = scalar_select %p161, %s11, 1
        %s163 = smul.addr %s162, 54
        %s164 = smul.addr %s163, 4
        %s165 = scalar_lea.vmem %s0, %s164
      $region24: #{block_forward.9} parent=19 // pred_fallthru
        _
    $region20: #{block_forward.9} parent=5 // pred_fallthru
      _
    %p166 = scmp.le.s32.totalorder 1, %s11
    %p167 = scmp.lt.s32.totalorder %s11, 3
    %p168 = pnand %p166, %p167
    %p169 = pneg %p168
    // Predicated region
    $region25: #{block_forward.9} parent=5 // pred_check
      _
    $region26: #{block_forward.9} parent=5 // pred_check_branch
      %171 = sbr.rel (%p168) target = $region28
    $region27: #{block_forward.9} parent=5 // pred_region
      %s172 = ssub.s32 %s11, 1
      %p173 = scmp.lt.s32.totalorder %s16, 1
      %s174 = scalar_select %p173, %s16, 1
      %s175 = smul.addr %s174, 54
      %s176 = smul.addr %s175, 4
      %s177 = scalar_lea.vmem %s0, %s176
      %p178 = pneg %p37
      %p179 = pneg %p34
      %p180 = pneg %p58
      %p181 = pneg %p55
      %p182 = pneg %p84
      %p183 = pneg %p81
      %p184 = scmp.lt.s32.totalorder %s16, 1
      %s185 = scalar_select %p184, %s16, 1
      %s186 = smul.addr %s185, 32
      %s187 = smul.addr %s186, 4
      %s188 = scalar_lea.vmem %s2, %s187
      %p189 = pneg %p110
      %p190 = pneg %p107
      %p191 = scmp.lt.s32.totalorder %s16, 1
      %s192 = scalar_select %p191, %s16, 1
      %s193 = scalar_lea.vmem %s3, %s192
      %p194 = pneg %p136
      %p195 = pneg %p133
      %p196 = scmp.lt.s32.totalorder %s16, 1
      %s197 = scalar_select %p196, %s16, 1
      %s198 = scalar_lea.vmem %s4, %s197
      %p199 = scmp.lt.s32.totalorder %s16, 1
      %s200 = scalar_select %p199, %s16, 1
      %s201 = smul.addr %s200, 54
      %s202 = smul.addr %s201, 4
      %s203 = scalar_lea.vmem %s0, %s202
      %p204 = scmp.lt.s32.totalorder %s16, 1
      %s205 = scalar_select %p204, %s16, 1
      %s206 = smul.addr %s205, 32
      %s207 = smul.addr %s206, 4
      %s208 = scalar_lea.vmem %s2, %s207
      %p209 = scmp.lt.s32.totalorder %s16, 1
      %s210 = scalar_select %p209, %s16, 1
      %s211 = scalar_lea.vmem %s3, %s210
      %p212 = scmp.lt.s32.totalorder %s16, 1
      %s213 = scalar_select %p212, %s16, 1
      %s214 = scalar_lea.vmem %s4, %s213
      %v215 = vld [vmem:[%s1] sm:$0xff]
      %v216 = vld [vmem:[%s1 + $0x8] sm:$0x1]
      %v217 = vld [vmem:[%s203] sm:$0xf]
      %v218 = vld [vmem:[%s203 + $0x4] sm:$0xf]
      %v219 = vld [vmem:[%s203 + $0xc] sm:$0xf]
      %v220 = vld [vmem:[%s203 + $0x10] sm:$0xf]
      %v221 = vld [vmem:[%s203 + $0x18] sm:$0xf]
      %v222 = vld [vmem:[%s203 + $0x1c] sm:$0xf]
      %v223 = vld [vmem:[%s203 + $0x24] sm:$0xf]
      %v224 = vld [vmem:[%s203 + $0x28] sm:$0xf]
      %v225 = vld [vmem:[%s203 + $0x30] sm:$0xf]
      %v226 = vld [vmem:[%s203 + $0x34] sm:$0xf]
      %v227 = vld [vmem:[%s203 + $0x3c] sm:$0xf]
      %v228 = vld [vmem:[%s203 + $0x40] sm:$0xf]
      %v229 = vld [vmem:[%s203 + $0x48] sm:$0xf]
      %v230 = vld [vmem:[%s203 + $0x4c] sm:$0xf]
      %v231 = vld [vmem:[%s203 + $0x54] sm:$0xf]
      %v232 = vld [vmem:[%s203 + $0x58] sm:$0xf]
      %v233 = vld [vmem:[%s203 + $0x60] sm:$0xf]
      %v234 = vld [vmem:[%s203 + $0x64] sm:$0xf]
      %v235 = vld [vmem:[%s203 + $0x6c] sm:$0xf]
      %v236 = vld [vmem:[%s203 + $0x70] sm:$0xf]
      %v237 = vld [vmem:[%s203 + $0x78] sm:$0xf]
      %v238 = vld [vmem:[%s203 + $0x7c] sm:$0xf]
      %v239 = vld [vmem:[%s203 + $0x84] sm:$0xf]
      %v240 = vld [vmem:[%s203 + $0x88] sm:$0xf]
      %v241 = vld [vmem:[%s203 + $0x90] sm:$0xf]
      %v242 = vld [vmem:[%s203 + $0x94] sm:$0xf]
      %v243 = vld [vmem:[%s203 + $0x9c] sm:$0xf]
      %v244 = vld [vmem:[%s203 + $0xa0] sm:$0xf]
      %v245 = vld [vmem:[%s203 + $0xa8] sm:$0xf]
      %v246 = vld [vmem:[%s203 + $0xac] sm:$0xf]
      %v247 = vld [vmem:[%s203 + $0xb4] sm:$0xf]
      %v248 = vld [vmem:[%s203 + $0xb8] sm:$0xf]
      %v249 = vunpack.c.l.bf16 %v217
      %v250 = vunpack.c.l.bf16 %v218
      %v251 = vunpack.c.l.bf16 %v219
      %v252 = vunpack.c.l.bf16 %v220
      %v253 = vunpack.c.l.bf16 %v221
      %v254 = vunpack.c.l.bf16 %v222
      %v255 = vunpack.c.l.bf16 %v223
      %v256 = vunpack.c.l.bf16 %v224
      %v257 = vunpack.c.l.bf16 %v225
      %v258 = vunpack.c.l.bf16 %v226
      %v259 = vunpack.c.l.bf16 %v227
      %v260 = vunpack.c.l.bf16 %v228
      %v261 = vunpack.c.l.bf16 %v229
      %v262 = vunpack.c.l.bf16 %v230
      %v263 = vunpack.c.l.bf16 %v231
      %v264 = vunpack.c.l.bf16 %v232
      %v265 = vunpack.c.l.bf16 %v233
      %v266 = vunpack.c.l.bf16 %v234
      %v267 = vunpack.c.l.bf16 %v235
      %v268 = vunpack.c.l.bf16 %v236
      %v269 = vunpack.c.l.bf16 %v237
      %v270 = vunpack.c.l.bf16 %v238
      %v271 = vunpack.c.l.bf16 %v239
      %v272 = vunpack.c.l.bf16 %v240
      %v273 = vunpack.c.l.bf16 %v241
      %v274 = vunpack.c.l.bf16 %v242
      %v275 = vunpack.c.l.bf16 %v243
      %v276 = vunpack.c.l.bf16 %v244
      %v277 = vunpack.c.l.bf16 %v245
      %v278 = vunpack.c.l.bf16 %v246
      %v279 = vunpack.c.l.bf16 %v247
      %v280 = vunpack.c.l.bf16 %v248
      %v281 = vperm.slane %v215, 0
      %v282 = vmul.f32 %v249, %v281
      %v283 = vmul.f32 %v250, %v281
      %v284 = vmul.f32 %v251, %v281
      %v285 = vmul.f32 %v252, %v281
      %v286 = vmul.f32 %v253, %v281
      %v287 = vmul.f32 %v254, %v281
      %v288 = vmul.f32 %v255, %v281
      %v289 = vmul.f32 %v256, %v281
      %v290 = vmul.f32 %v257, %v281
      %v291 = vmul.f32 %v258, %v281
      %v292 = vmul.f32 %v259, %v281
      %v293 = vmul.f32 %v260, %v281
      %v294 = vmul.f32 %v261, %v281
      %v295 = vmul.f32 %v262, %v281
      %v296 = vmul.f32 %v263, %v281
      %v297 = vmul.f32 %v264, %v281
      %v298 = vmul.f32 %v265, %v281
      %v299 = vmul.f32 %v266, %v281
      %v300 = vmul.f32 %v267, %v281
      %v301 = vmul.f32 %v268, %v281
      %v302 = vmul.f32 %v269, %v281
      %v303 = vmul.f32 %v270, %v281
      %v304 = vmul.f32 %v271, %v281
      %v305 = vmul.f32 %v272, %v281
      %v306 = vmul.f32 %v273, %v281
      %v307 = vmul.f32 %v274, %v281
      %v308 = vmul.f32 %v275, %v281
      %v309 = vmul.f32 %v276, %v281
      %v310 = vmul.f32 %v277, %v281
      %v311 = vmul.f32 %v278, %v281
      %v312 = vmul.f32 %v279, %v281
      %v313 = vmul.f32 %v280, %v281
      %v314 = vadd.f32 %v282, 0.0
      %v315 = vadd.f32 %v283, 0.0
      %v316 = vadd.f32 %v284, 0.0
      %v317 = vadd.f32 %v285, 0.0
      %v318 = vadd.f32 %v286, 0.0
      %v319 = vadd.f32 %v287, 0.0
      %v320 = vadd.f32 %v288, 0.0
      %v321 = vadd.f32 %v289, 0.0
      %v322 = vadd.f32 %v290, 0.0
      %v323 = vadd.f32 %v291, 0.0
      %v324 = vadd.f32 %v292, 0.0
      %v325 = vadd.f32 %v293, 0.0
      %v326 = vadd.f32 %v294, 0.0
      %v327 = vadd.f32 %v295, 0.0
      %v328 = vadd.f32 %v296, 0.0
      %v329 = vadd.f32 %v297, 0.0
      %v330 = vadd.f32 %v298, 0.0
      %v331 = vadd.f32 %v299, 0.0
      %v332 = vadd.f32 %v300, 0.0
      %v333 = vadd.f32 %v301, 0.0
      %v334 = vadd.f32 %v302, 0.0
      %v335 = vadd.f32 %v303, 0.0
      %v336 = vadd.f32 %v304, 0.0
      %v337 = vadd.f32 %v305, 0.0
      %v338 = vadd.f32 %v306, 0.0
      %v339 = vadd.f32 %v307, 0.0
      %v340 = vadd.f32 %v308, 0.0
      %v341 = vadd.f32 %v309, 0.0
      %v342 = vadd.f32 %v310, 0.0
      %v343 = vadd.f32 %v311, 0.0
      %v344 = vadd.f32 %v312, 0.0
      %v345 = vadd.f32 %v313, 0.0
      %v346 = vld [vmem:[%s203 + $0x8] sm:$0x1]
      %v347 = vld [vmem:[%s203 + $0x14] sm:$0x1]
      %v348 = vld [vmem:[%s203 + $0x20] sm:$0x1]
      %v349 = vld [vmem:[%s203 + $0x2c] sm:$0x1]
      %v350 = vld [vmem:[%s203 + $0x38] sm:$0x1]
      %v351 = vld [vmem:[%s203 + $0x44] sm:$0x1]
      %v352 = vld [vmem:[%s203 + $0x50] sm:$0x1]
      %v353 = vld [vmem:[%s203 + $0x5c] sm:$0x1]
      %v354 = vld [vmem:[%s203 + $0x68] sm:$0x1]
      %v355 = vld [vmem:[%s203 + $0x74] sm:$0x1]
      %v356 = vld [vmem:[%s203 + $0x80] sm:$0x1]
      %v357 = vld [vmem:[%s203 + $0x8c] sm:$0x1]
      %v358 = vld [vmem:[%s203 + $0x98] sm:$0x1]
      %v359 = vld [vmem:[%s203 + $0xa4] sm:$0x1]
      %v360 = vld [vmem:[%s203 + $0xb0] sm:$0x1]
      %v361 = vld [vmem:[%s203 + $0xbc] sm:$0x1]
      %v362 = vunpack.c.l.bf16 %v346
      %v363 = vunpack.c.l.bf16 %v347
      %v364 = vunpack.c.l.bf16 %v348
      %v365 = vunpack.c.l.bf16 %v349
      %v366 = vunpack.c.l.bf16 %v350
      %v367 = vunpack.c.l.bf16 %v351
      %v368 = vunpack.c.l.bf16 %v352
      %v369 = vunpack.c.l.bf16 %v353
      %v370 = vunpack.c.l.bf16 %v354
      %v371 = vunpack.c.l.bf16 %v355
      %v372 = vunpack.c.l.bf16 %v356
      %v373 = vunpack.c.l.bf16 %v357
      %v374 = vunpack.c.l.bf16 %v358
      %v375 = vunpack.c.l.bf16 %v359
      %v376 = vunpack.c.l.bf16 %v360
      %v377 = vunpack.c.l.bf16 %v361
      %v378 = vperm.slane %v215, 1
      %v379 = vmul.f32 %v249, %v378
      %v380 = vmul.f32 %v250, %v378
      %v381 = vmul.f32 %v362, %v378
      %v382 = vmul.f32 %v251, %v378
      %v383 = vmul.f32 %v252, %v378
      %v384 = vmul.f32 %v363, %v378
      %v385 = vmul.f32 %v253, %v378
      %v386 = vmul.f32 %v254, %v378
      %v387 = vmul.f32 %v364, %v378
      %v388 = vmul.f32 %v255, %v378
      %v389 = vmul.f32 %v256, %v378
      %v390 = vmul.f32 %v365, %v378
      %v391 = vmul.f32 %v257, %v378
      %v392 = vmul.f32 %v258, %v378
      %v393 = vmul.f32 %v366, %v378
      %v394 = vmul.f32 %v259, %v378
      %v395 = vmul.f32 %v260, %v378
      %v396 = vmul.f32 %v367, %v378
      %v397 = vmul.f32 %v261, %v378
      %v398 = vmul.f32 %v262, %v378
      %v399 = vmul.f32 %v368, %v378
      %v400 = vmul.f32 %v263, %v378
      %v401 = vmul.f32 %v264, %v378
      %v402 = vmul.f32 %v369, %v378
      %v403 = vmul.f32 %v265, %v378
      %v404 = vmul.f32 %v266, %v378
      %v405 = vmul.f32 %v370, %v378
      %v406 = vmul.f32 %v267, %v378
      %v407 = vmul.f32 %v268, %v378
      %v408 = vmul.f32 %v371, %v378
      %v409 = vmul.f32 %v269, %v378
      %v410 = vmul.f32 %v270, %v378
      %v411 = vmul.f32 %v372, %v378
      %v412 = vmul.f32 %v271, %v378
      %v413 = vmul.f32 %v272, %v378
      %v414 = vmul.f32 %v373, %v378
      %v415 = vmul.f32 %v273, %v378
      %v416 = vmul.f32 %v274, %v378
      %v417 = vmul.f32 %v374, %v378
      %v418 = vmul.f32 %v275, %v378
      %v419 = vmul.f32 %v276, %v378
      %v420 = vmul.f32 %v375, %v378
      %v421 = vmul.f32 %v277, %v378
      %v422 = vmul.f32 %v278, %v378
      %v423 = vmul.f32 %v376, %v378
      %v424 = vmul.f32 %v279, %v378
      %v425 = vmul.f32 %v280, %v378
      %v426 = vmul.f32 %v377, %v378
      %vm475 = vcmask 1046528
      %v476 = vrot.slane %v379, 1
      %v477 = vrot.slane %v380, 1
      %v478 = vsel %vm475, %v476, %v477
      %v479 = vrot.slane %v381, 1
      %v480 = vsel %vm475, %v477, %v479
      %v481 = vrot.slane %v382, 1
      %v482 = vrot.slane %v383, 1
      %v483 = vsel %vm475, %v481, %v482
      %v484 = vrot.slane %v384, 1
      %v485 = vsel %vm475, %v482, %v484
      %v486 = vrot.slane %v385, 1
      %v487 = vrot.slane %v386, 1
      %v488 = vsel %vm475, %v486, %v487
      %v489 = vrot.slane %v387, 1
      %v490 = vsel %vm475, %v487, %v489
      %v491 = vrot.slane %v388, 1
      %v492 = vrot.slane %v389, 1
      %v493 = vsel %vm475, %v491, %v492
      %v494 = vrot.slane %v390, 1
      %v495 = vsel %vm475, %v492, %v494
      %v496 = vrot.slane %v391, 1
      %v497 = vrot.slane %v392, 1
      %v498 = vsel %vm475, %v496, %v497
      %v499 = vrot.slane %v393, 1
      %v500 = vsel %vm475, %v497, %v499
      %v501 = vrot.slane %v394, 1
      %v502 = vrot.slane %v395, 1
      %v503 = vsel %vm475, %v501, %v502
      %v504 = vrot.slane %v396, 1
      %v505 = vsel %vm475, %v502, %v504
      %v506 = vrot.slane %v397, 1
      %v507 = vrot.slane %v398, 1
      %v508 = vsel %vm475, %v506, %v507
      %v509 = vrot.slane %v399, 1
      %v510 = vsel %vm475, %v507, %v509
      %v511 = vrot.slane %v400, 1
      %v512 = vrot.slane %v401, 1
      %v513 = vsel %vm475, %v511, %v512
      %v514 = vrot.slane %v402, 1
      %v515 = vsel %vm475, %v512, %v514
      %v516 = vrot.slane %v403, 1
      %v517 = vrot.slane %v404, 1
      %v518 = vsel %vm475, %v516, %v517
      %v519 = vrot.slane %v405, 1
      %v520 = vsel %vm475, %v517, %v519
      %v521 = vrot.slane %v406, 1
      %v522 = vrot.slane %v407, 1
      %v523 = vsel %vm475, %v521, %v522
      %v524 = vrot.slane %v408, 1
      %v525 = vsel %vm475, %v522, %v524
      %v526 = vrot.slane %v409, 1
      %v527 = vrot.slane %v410, 1
      %v528 = vsel %vm475, %v526, %v527
      %v529 = vrot.slane %v411, 1
      %v530 = vsel %vm475, %v527, %v529
      %v531 = vrot.slane %v412, 1
      %v532 = vrot.slane %v413, 1
      %v533 = vsel %vm475, %v531, %v532
      %v534 = vrot.slane %v414, 1
      %v535 = vsel %vm475, %v532, %v534
      %v536 = vrot.slane %v415, 1
      %v537 = vrot.slane %v416, 1
      %v538 = vsel %vm475, %v536, %v537
      %v539 = vrot.slane %v417, 1
      %v540 = vsel %vm475, %v537, %v539
      %v541 = vrot.slane %v418, 1
      %v542 = vrot.slane %v419, 1
      %v543 = vsel %vm475, %v541, %v542
      %v544 = vrot.slane %v420, 1
      %v545 = vsel %vm475, %v542, %v544
      %v546 = vrot.slane %v421, 1
      %v547 = vrot.slane %v422, 1
      %v548 = vsel %vm475, %v546, %v547
      %v549 = vrot.slane %v423, 1
      %v550 = vsel %vm475, %v547, %v549
      %v551 = vrot.slane %v424, 1
      %v552 = vrot.slane %v425, 1
      %v553 = vsel %vm475, %v551, %v552
      %v554 = vrot.slane %v426, 1
      %v555 = vsel %vm475, %v552, %v554
      %v588 = vadd.f32 %v314, %v478
      %v589 = vadd.f32 %v315, %v480
      %v590 = vadd.f32 %v316, %v483
      %v591 = vadd.f32 %v317, %v485
      %v592 = vadd.f32 %v318, %v488
      %v593 = vadd.f32 %v319, %v490
      %v594 = vadd.f32 %v320, %v493
      %v595 = vadd.f32 %v321, %v495
      %v596 = vadd.f32 %v322, %v498
      %v597 = vadd.f32 %v323, %v500
      %v598 = vadd.f32 %v324, %v503
      %v599 = vadd.f32 %v325, %v505
      %v600 = vadd.f32 %v326, %v508
      %v601 = vadd.f32 %v327, %v510
      %v602 = vadd.f32 %v328, %v513
      %v603 = vadd.f32 %v329, %v515
      %v604 = vadd.f32 %v330, %v518
      %v605 = vadd.f32 %v331, %v520
      %v606 = vadd.f32 %v332, %v523
      %v607 = vadd.f32 %v333, %v525
      %v608 = vadd.f32 %v334, %v528
      %v609 = vadd.f32 %v335, %v530
      %v610 = vadd.f32 %v336, %v533
      %v611 = vadd.f32 %v337, %v535
      %v612 = vadd.f32 %v338, %v538
      %v613 = vadd.f32 %v339, %v540
      %v614 = vadd.f32 %v340, %v543
      %v615 = vadd.f32 %v341, %v545
      %v616 = vadd.f32 %v342, %v548
      %v617 = vadd.f32 %v343, %v550
      %v618 = vadd.f32 %v344, %v553
      %v619 = vadd.f32 %v345, %v555
      %v620 = vld [vmem:[%s203] sm:$0xe]
      %v621 = vld [vmem:[%s203 + $0xc] sm:$0xe]
      %v622 = vld [vmem:[%s203 + $0x18] sm:$0xe]
      %v623 = vld [vmem:[%s203 + $0x24] sm:$0xe]
      %v624 = vld [vmem:[%s203 + $0x30] sm:$0xe]
      %v625 = vld [vmem:[%s203 + $0x3c] sm:$0xe]
      %v626 = vld [vmem:[%s203 + $0x48] sm:$0xe]
      %v627 = vld [vmem:[%s203 + $0x54] sm:$0xe]
      %v628 = vld [vmem:[%s203 + $0x60] sm:$0xe]
      %v629 = vld [vmem:[%s203 + $0x6c] sm:$0xe]
      %v630 = vld [vmem:[%s203 + $0x78] sm:$0xe]
      %v631 = vld [vmem:[%s203 + $0x84] sm:$0xe]
      %v632 = vld [vmem:[%s203 + $0x90] sm:$0xe]
      %v633 = vld [vmem:[%s203 + $0x9c] sm:$0xe]
      %v634 = vld [vmem:[%s203 + $0xa8] sm:$0xe]
      %v635 = vld [vmem:[%s203 + $0xb4] sm:$0xe]
      %v636 = vunpack.c.l.bf16 %v620
      %v637 = vunpack.c.l.bf16 %v621
      %v638 = vunpack.c.l.bf16 %v622
      %v639 = vunpack.c.l.bf16 %v623
      %v640 = vunpack.c.l.bf16 %v624
      %v641 = vunpack.c.l.bf16 %v625
      %v642 = vunpack.c.l.bf16 %v626
      %v643 = vunpack.c.l.bf16 %v627
      %v644 = vunpack.c.l.bf16 %v628
      %v645 = vunpack.c.l.bf16 %v629
      %v646 = vunpack.c.l.bf16 %v630
      %v647 = vunpack.c.l.bf16 %v631
      %v648 = vunpack.c.l.bf16 %v632
      %v649 = vunpack.c.l.bf16 %v633
      %v650 = vunpack.c.l.bf16 %v634
      %v651 = vunpack.c.l.bf16 %v635
      %v652 = vperm.slane %v215, 2
      %v653 = vmul.f32 %v636, %v652
      %v654 = vmul.f32 %v250, %v652
      %v655 = vmul.f32 %v362, %v652
      %v656 = vmul.f32 %v637, %v652
      %v657 = vmul.f32 %v252, %v652
      %v658 = vmul.f32 %v363, %v652
      %v659 = vmul.f32 %v638, %v652
      %v660 = vmul.f32 %v254, %v652
      %v661 = vmul.f32 %v364, %v652
      %v662 = vmul.f32 %v639, %v652
      %v663 = vmul.f32 %v256, %v652
      %v664 = vmul.f32 %v365, %v652
      %v665 = vmul.f32 %v640, %v652
      %v666 = vmul.f32 %v258, %v652
      %v667 = vmul.f32 %v366, %v652
      %v668 = vmul.f32 %v641, %v652
      %v669 = vmul.f32 %v260, %v652
      %v670 = vmul.f32 %v367, %v652
      %v671 = vmul.f32 %v642, %v652
      %v672 = vmul.f32 %v262, %v652
      %v673 = vmul.f32 %v368, %v652
      %v674 = vmul.f32 %v643, %v652
      %v675 = vmul.f32 %v264, %v652
      %v676 = vmul.f32 %v369, %v652
      %v677 = vmul.f32 %v644, %v652
      %v678 = vmul.f32 %v266, %v652
      %v679 = vmul.f32 %v370, %v652
      %v680 = vmul.f32 %v645, %v652
      %v681 = vmul.f32 %v268, %v652
      %v682 = vmul.f32 %v371, %v652
      %v683 = vmul.f32 %v646, %v652
      %v684 = vmul.f32 %v270, %v652
      %v685 = vmul.f32 %v372, %v652
      %v686 = vmul.f32 %v647, %v652
      %v687 = vmul.f32 %v272, %v652
      %v688 = vmul.f32 %v373, %v652
      %v689 = vmul.f32 %v648, %v652
      %v690 = vmul.f32 %v274, %v652
      %v691 = vmul.f32 %v374, %v652
      %v692 = vmul.f32 %v649, %v652
      %v693 = vmul.f32 %v276, %v652
      %v694 = vmul.f32 %v375, %v652
      %v695 = vmul.f32 %v650, %v652
      %v696 = vmul.f32 %v278, %v652
      %v697 = vmul.f32 %v376, %v652
      %v698 = vmul.f32 %v651, %v652
      %v699 = vmul.f32 %v280, %v652
      %v700 = vmul.f32 %v377, %v652
      %vm749 = vcmask 1045504
      %v750 = vrot.slane %v653, 2
      %v751 = vrot.slane %v654, 2
      %v752 = vsel %vm749, %v750, %v751
      %v753 = vrot.slane %v655, 2
      %v754 = vsel %vm749, %v751, %v753
      %v755 = vrot.slane %v656, 2
      %v756 = vrot.slane %v657, 2
      %v757 = vsel %vm749, %v755, %v756
      %v758 = vrot.slane %v658, 2
      %v759 = vsel %vm749, %v756, %v758
      %v760 = vrot.slane %v659, 2
      %v761 = vrot.slane %v660, 2
      %v762 = vsel %vm749, %v760, %v761
      %v763 = vrot.slane %v661, 2
      %v764 = vsel %vm749, %v761, %v763
      %v765 = vrot.slane %v662, 2
      %v766 = vrot.slane %v663, 2
      %v767 = vsel %vm749, %v765, %v766
      %v768 = vrot.slane %v664, 2
      %v769 = vsel %vm749, %v766, %v768
      %v770 = vrot.slane %v665, 2
      %v771 = vrot.slane %v666, 2
      %v772 = vsel %vm749, %v770, %v771
      %v773 = vrot.slane %v667, 2
      %v774 = vsel %vm749, %v771, %v773
      %v775 = vrot.slane %v668, 2
      %v776 = vrot.slane %v669, 2
      %v777 = vsel %vm749, %v775, %v776
      %v778 = vrot.slane %v670, 2
      %v779 = vsel %vm749, %v776, %v778
      %v780 = vrot.slane %v671, 2
      %v781 = vrot.slane %v672, 2
      %v782 = vsel %vm749, %v780, %v781
      %v783 = vrot.slane %v673, 2
      %v784 = vsel %vm749, %v781, %v783
      %v785 = vrot.slane %v674, 2
      %v786 = vrot.slane %v675, 2
      %v787 = vsel %vm749, %v785, %v786
      %v788 = vrot.slane %v676, 2
      %v789 = vsel %vm749, %v786, %v788
      %v790 = vrot.slane %v677, 2
      %v791 = vrot.slane %v678, 2
      %v792 = vsel %vm749, %v790, %v791
      %v793 = vrot.slane %v679, 2
      %v794 = vsel %vm749, %v791, %v793
      %v795 = vrot.slane %v680, 2
      %v796 = vrot.slane %v681, 2
      %v797 = vsel %vm749, %v795, %v796
      %v798 = vrot.slane %v682, 2
      %v799 = vsel %vm749, %v796, %v798
      %v800 = vrot.slane %v683, 2
      %v801 = vrot.slane %v684, 2
      %v802 = vsel %vm749, %v800, %v801
      %v803 = vrot.slane %v685, 2
      %v804 = vsel %vm749, %v801, %v803
      %v805 = vrot.slane %v686, 2
      %v806 = vrot.slane %v687, 2
      %v807 = vsel %vm749, %v805, %v806
      %v808 = vrot.slane %v688, 2
      %v809 = vsel %vm749, %v806, %v808
      %v810 = vrot.slane %v689, 2
      %v811 = vrot.slane %v690, 2
      %v812 = vsel %vm749, %v810, %v811
      %v813 = vrot.slane %v691, 2
      %v814 = vsel %vm749, %v811, %v813
      %v815 = vrot.slane %v692, 2
      %v816 = vrot.slane %v693, 2
      %v817 = vsel %vm749, %v815, %v816
      %v818 = vrot.slane %v694, 2
      %v819 = vsel %vm749, %v816, %v818
      %v820 = vrot.slane %v695, 2
      %v821 = vrot.slane %v696, 2
      %v822 = vsel %vm749, %v820, %v821
      %v823 = vrot.slane %v697, 2
      %v824 = vsel %vm749, %v821, %v823
      %v825 = vrot.slane %v698, 2
      %v826 = vrot.slane %v699, 2
      %v827 = vsel %vm749, %v825, %v826
      %v828 = vrot.slane %v700, 2
      %v829 = vsel %vm749, %v826, %v828
      %v862 = vadd.f32 %v588, %v752
      %v863 = vadd.f32 %v589, %v754
      %v864 = vadd.f32 %v590, %v757
      %v865 = vadd.f32 %v591, %v759
      %v866 = vadd.f32 %v592, %v762
      %v867 = vadd.f32 %v593, %v764
      %v868 = vadd.f32 %v594, %v767
      %v869 = vadd.f32 %v595, %v769
      %v870 = vadd.f32 %v596, %v772
      %v871 = vadd.f32 %v597, %v774
      %v872 = vadd.f32 %v598, %v777
      %v873 = vadd.f32 %v599, %v779
      %v874 = vadd.f32 %v600, %v782
      %v875 = vadd.f32 %v601, %v784
      %v876 = vadd.f32 %v602, %v787
      %v877 = vadd.f32 %v603, %v789
      %v878 = vadd.f32 %v604, %v792
      %v879 = vadd.f32 %v605, %v794
      %v880 = vadd.f32 %v606, %v797
      %v881 = vadd.f32 %v607, %v799
      %v882 = vadd.f32 %v608, %v802
      %v883 = vadd.f32 %v609, %v804
      %v884 = vadd.f32 %v610, %v807
      %v885 = vadd.f32 %v611, %v809
      %v886 = vadd.f32 %v612, %v812
      %v887 = vadd.f32 %v613, %v814
      %v888 = vadd.f32 %v614, %v817
      %v889 = vadd.f32 %v615, %v819
      %v890 = vadd.f32 %v616, %v822
      %v891 = vadd.f32 %v617, %v824
      %v892 = vadd.f32 %v618, %v827
      %v893 = vadd.f32 %v619, %v829
      %s894 = scalar_lea.vmem %s203, 12
      %v895 = vld [vmem:[%s894] sm:$0xf]
      %v896 = vld [vmem:[%s894 + $0x4] sm:$0xf]
      %v897 = vld [vmem:[%s894 + $0xc] sm:$0xf]
      %v898 = vld [vmem:[%s894 + $0x10] sm:$0xf]
      %v899 = vld [vmem:[%s894 + $0x18] sm:$0xf]
      %v900 = vld [vmem:[%s894 + $0x1c] sm:$0xf]
      %v901 = vld [vmem:[%s894 + $0x24] sm:$0xf]
      %v902 = vld [vmem:[%s894 + $0x28] sm:$0xf]
      %v903 = vld [vmem:[%s894 + $0x30] sm:$0xf]
      %v904 = vld [vmem:[%s894 + $0x34] sm:$0xf]
      %v905 = vld [vmem:[%s894 + $0x3c] sm:$0xf]
      %v906 = vld [vmem:[%s894 + $0x40] sm:$0xf]
      %v907 = vld [vmem:[%s894 + $0x48] sm:$0xf]
      %v908 = vld [vmem:[%s894 + $0x4c] sm:$0xf]
      %v909 = vld [vmem:[%s894 + $0x54] sm:$0xf]
      %v910 = vld [vmem:[%s894 + $0x58] sm:$0xf]
      %v911 = vld [vmem:[%s894 + $0x60] sm:$0xf]
      %v912 = vld [vmem:[%s894 + $0x64] sm:$0xf]
      %v913 = vld [vmem:[%s894 + $0x6c] sm:$0xf]
      %v914 = vld [vmem:[%s894 + $0x70] sm:$0xf]
      %v915 = vld [vmem:[%s894 + $0x78] sm:$0xf]
      %v916 = vld [vmem:[%s894 + $0x7c] sm:$0xf]
      %v917 = vld [vmem:[%s894 + $0x84] sm:$0xf]
      %v918 = vld [vmem:[%s894 + $0x88] sm:$0xf]
      %v919 = vld [vmem:[%s894 + $0x90] sm:$0xf]
      %v920 = vld [vmem:[%s894 + $0x94] sm:$0xf]
      %v921 = vld [vmem:[%s894 + $0x9c] sm:$0xf]
      %v922 = vld [vmem:[%s894 + $0xa0] sm:$0xf]
      %v923 = vld [vmem:[%s894 + $0xa8] sm:$0xf]
      %v924 = vld [vmem:[%s894 + $0xac] sm:$0xf]
      %v925 = vld [vmem:[%s894 + $0xb4] sm:$0xf]
      %v926 = vld [vmem:[%s894 + $0xb8] sm:$0xf]
      %v927 = vunpack.c.l.bf16 %v895
      %v928 = vunpack.c.l.bf16 %v896
      %v929 = vunpack.c.l.bf16 %v897
      %v930 = vunpack.c.l.bf16 %v898
      %v931 = vunpack.c.l.bf16 %v899
      %v932 = vunpack.c.l.bf16 %v900
      %v933 = vunpack.c.l.bf16 %v901
      %v934 = vunpack.c.l.bf16 %v902
      %v935 = vunpack.c.l.bf16 %v903
      %v936 = vunpack.c.l.bf16 %v904
      %v937 = vunpack.c.l.bf16 %v905
      %v938 = vunpack.c.l.bf16 %v906
      %v939 = vunpack.c.l.bf16 %v907
      %v940 = vunpack.c.l.bf16 %v908
      %v941 = vunpack.c.l.bf16 %v909
      %v942 = vunpack.c.l.bf16 %v910
      %v943 = vunpack.c.l.bf16 %v911
      %v944 = vunpack.c.l.bf16 %v912
      %v945 = vunpack.c.l.bf16 %v913
      %v946 = vunpack.c.l.bf16 %v914
      %v947 = vunpack.c.l.bf16 %v915
      %v948 = vunpack.c.l.bf16 %v916
      %v949 = vunpack.c.l.bf16 %v917
      %v950 = vunpack.c.l.bf16 %v918
      %v951 = vunpack.c.l.bf16 %v919
      %v952 = vunpack.c.l.bf16 %v920
      %v953 = vunpack.c.l.bf16 %v921
      %v954 = vunpack.c.l.bf16 %v922
      %v955 = vunpack.c.l.bf16 %v923
      %v956 = vunpack.c.l.bf16 %v924
      %v957 = vunpack.c.l.bf16 %v925
      %v958 = vunpack.c.l.bf16 %v926
      %v959 = vperm.slane %v215, 3
      %v960 = vmul.f32 %v927, %v959
      %v961 = vmul.f32 %v928, %v959
      %v962 = vmul.f32 %v929, %v959
      %v963 = vmul.f32 %v930, %v959
      %v964 = vmul.f32 %v931, %v959
      %v965 = vmul.f32 %v932, %v959
      %v966 = vmul.f32 %v933, %v959
      %v967 = vmul.f32 %v934, %v959
      %v968 = vmul.f32 %v935, %v959
      %v969 = vmul.f32 %v936, %v959
      %v970 = vmul.f32 %v937, %v959
      %v971 = vmul.f32 %v938, %v959
      %v972 = vmul.f32 %v939, %v959
      %v973 = vmul.f32 %v940, %v959
      %v974 = vmul.f32 %v941, %v959
      %v975 = vmul.f32 %v942, %v959
      %v976 = vmul.f32 %v943, %v959
      %v977 = vmul.f32 %v944, %v959
      %v978 = vmul.f32 %v945, %v959
      %v979 = vmul.f32 %v946, %v959
      %v980 = vmul.f32 %v947, %v959
      %v981 = vmul.f32 %v948, %v959
      %v982 = vmul.f32 %v949, %v959
      %v983 = vmul.f32 %v950, %v959
      %v984 = vmul.f32 %v951, %v959
      %v985 = vmul.f32 %v952, %v959
      %v986 = vmul.f32 %v953, %v959
      %v987 = vmul.f32 %v954, %v959
      %v988 = vmul.f32 %v955, %v959
      %v989 = vmul.f32 %v956, %v959
      %v990 = vmul.f32 %v957, %v959
      %v991 = vmul.f32 %v958, %v959
      %v992 = vadd.f32 %v862, %v960
      %v993 = vadd.f32 %v863, %v961
      %v994 = vadd.f32 %v864, %v962
      %v995 = vadd.f32 %v865, %v963
      %v996 = vadd.f32 %v866, %v964
      %v997 = vadd.f32 %v867, %v965
      %v998 = vadd.f32 %v868, %v966
      %v999 = vadd.f32 %v869, %v967
      %v1000 = vadd.f32 %v870, %v968
      %v1001 = vadd.f32 %v871, %v969
      %v1002 = vadd.f32 %v872, %v970
      %v1003 = vadd.f32 %v873, %v971
      %v1004 = vadd.f32 %v874, %v972
      %v1005 = vadd.f32 %v875, %v973
      %v1006 = vadd.f32 %v876, %v974
      %v1007 = vadd.f32 %v877, %v975
      %v1008 = vadd.f32 %v878, %v976
      %v1009 = vadd.f32 %v879, %v977
      %v1010 = vadd.f32 %v880, %v978
      %v1011 = vadd.f32 %v881, %v979
      %v1012 = vadd.f32 %v882, %v980
      %v1013 = vadd.f32 %v883, %v981
      %v1014 = vadd.f32 %v884, %v982
      %v1015 = vadd.f32 %v885, %v983
      %v1016 = vadd.f32 %v886, %v984
      %v1017 = vadd.f32 %v887, %v985
      %v1018 = vadd.f32 %v888, %v986
      %v1019 = vadd.f32 %v889, %v987
      %v1020 = vadd.f32 %v890, %v988
      %v1021 = vadd.f32 %v891, %v989
      %v1022 = vadd.f32 %v892, %v990
      %v1023 = vadd.f32 %v893, %v991
      %v1024 = vld [vmem:[%s894 + $0x8] sm:$0x1]
      %v1025 = vld [vmem:[%s894 + $0x14] sm:$0x1]
      %v1026 = vld [vmem:[%s894 + $0x20] sm:$0x1]
      %v1027 = vld [vmem:[%s894 + $0x2c] sm:$0x1]
      %v1028 = vld [vmem:[%s894 + $0x38] sm:$0x1]
      %v1029 = vld [vmem:[%s894 + $0x44] sm:$0x1]
      %v1030 = vld [vmem:[%s894 + $0x50] sm:$0x1]
      %v1031 = vld [vmem:[%s894 + $0x5c] sm:$0x1]
      %v1032 = vld [vmem:[%s894 + $0x68] sm:$0x1]
      %v1033 = vld [vmem:[%s894 + $0x74] sm:$0x1]
      %v1034 = vld [vmem:[%s894 + $0x80] sm:$0x1]
      %v1035 = vld [vmem:[%s894 + $0x8c] sm:$0x1]
      %v1036 = vld [vmem:[%s894 + $0x98] sm:$0x1]
      %v1037 = vld [vmem:[%s894 + $0xa4] sm:$0x1]
      %v1038 = vld [vmem:[%s894 + $0xb0] sm:$0x1]
      %v1039 = vld [vmem:[%s894 + $0xbc] sm:$0x1]
      %v1040 = vunpack.c.l.bf16 %v1024
      %v1041 = vunpack.c.l.bf16 %v1025
      %v1042 = vunpack.c.l.bf16 %v1026
      %v1043 = vunpack.c.l.bf16 %v1027
      %v1044 = vunpack.c.l.bf16 %v1028
      %v1045 = vunpack.c.l.bf16 %v1029
      %v1046 = vunpack.c.l.bf16 %v1030
      %v1047 = vunpack.c.l.bf16 %v1031
      %v1048 = vunpack.c.l.bf16 %v1032
      %v1049 = vunpack.c.l.bf16 %v1033
      %v1050 = vunpack.c.l.bf16 %v1034
      %v1051 = vunpack.c.l.bf16 %v1035
      %v1052 = vunpack.c.l.bf16 %v1036
      %v1053 = vunpack.c.l.bf16 %v1037
      %v1054 = vunpack.c.l.bf16 %v1038
      %v1055 = vunpack.c.l.bf16 %v1039
      %v1056 = vperm.slane %v215, 4
      %v1057 = vmul.f32 %v927, %v1056
      %v1058 = vmul.f32 %v928, %v1056
      %v1059 = vmul.f32 %v1040, %v1056
      %v1060 = vmul.f32 %v929, %v1056
      %v1061 = vmul.f32 %v930, %v1056
      %v1062 = vmul.f32 %v1041, %v1056
      %v1063 = vmul.f32 %v931, %v1056
      %v1064 = vmul.f32 %v932, %v1056
      %v1065 = vmul.f32 %v1042, %v1056
      %v1066 = vmul.f32 %v933, %v1056
      %v1067 = vmul.f32 %v934, %v1056
      %v1068 = vmul.f32 %v1043, %v1056
      %v1069 = vmul.f32 %v935, %v1056
      %v1070 = vmul.f32 %v936, %v1056
      %v1071 = vmul.f32 %v1044, %v1056
      %v1072 = vmul.f32 %v937, %v1056
      %v1073 = vmul.f32 %v938, %v1056
      %v1074 = vmul.f32 %v1045, %v1056
      %v1075 = vmul.f32 %v939, %v1056
      %v1076 = vmul.f32 %v940, %v1056
      %v1077 = vmul.f32 %v1046, %v1056
      %v1078 = vmul.f32 %v941, %v1056
      %v1079 = vmul.f32 %v942, %v1056
      %v1080 = vmul.f32 %v1047, %v1056
      %v1081 = vmul.f32 %v943, %v1056
      %v1082 = vmul.f32 %v944, %v1056
      %v1083 = vmul.f32 %v1048, %v1056
      %v1084 = vmul.f32 %v945, %v1056
      %v1085 = vmul.f32 %v946, %v1056
      %v1086 = vmul.f32 %v1049, %v1056
      %v1087 = vmul.f32 %v947, %v1056
      %v1088 = vmul.f32 %v948, %v1056
      %v1089 = vmul.f32 %v1050, %v1056
      %v1090 = vmul.f32 %v949, %v1056
      %v1091 = vmul.f32 %v950, %v1056
      %v1092 = vmul.f32 %v1051, %v1056
      %v1093 = vmul.f32 %v951, %v1056
      %v1094 = vmul.f32 %v952, %v1056
      %v1095 = vmul.f32 %v1052, %v1056
      %v1096 = vmul.f32 %v953, %v1056
      %v1097 = vmul.f32 %v954, %v1056
      %v1098 = vmul.f32 %v1053, %v1056
      %v1099 = vmul.f32 %v955, %v1056
      %v1100 = vmul.f32 %v956, %v1056
      %v1101 = vmul.f32 %v1054, %v1056
      %v1102 = vmul.f32 %v957, %v1056
      %v1103 = vmul.f32 %v958, %v1056
      %v1104 = vmul.f32 %v1055, %v1056
      %v1153 = vrot.slane %v1057, 1
      %v1154 = vrot.slane %v1058, 1
      %v1155 = vsel %vm475, %v1153, %v1154
      %v1156 = vrot.slane %v1059, 1
      %v1157 = vsel %vm475, %v1154, %v1156
      %v1158 = vrot.slane %v1060, 1
      %v1159 = vrot.slane %v1061, 1
      %v1160 = vsel %vm475, %v1158, %v1159
      %v1161 = vrot.slane %v1062, 1
      %v1162 = vsel %vm475, %v1159, %v1161
      %v1163 = vrot.slane %v1063, 1
      %v1164 = vrot.slane %v1064, 1
      %v1165 = vsel %vm475, %v1163, %v1164
      %v1166 = vrot.slane %v1065, 1
      %v1167 = vsel %vm475, %v1164, %v1166
      %v1168 = vrot.slane %v1066, 1
      %v1169 = vrot.slane %v1067, 1
      %v1170 = vsel %vm475, %v1168, %v1169
      %v1171 = vrot.slane %v1068, 1
      %v1172 = vsel %vm475, %v1169, %v1171
      %v1173 = vrot.slane %v1069, 1
      %v1174 = vrot.slane %v1070, 1
      %v1175 = vsel %vm475, %v1173, %v1174
      %v1176 = vrot.slane %v1071, 1
      %v1177 = vsel %vm475, %v1174, %v1176
      %v1178 = vrot.slane %v1072, 1
      %v1179 = vrot.slane %v1073, 1
      %v1180 = vsel %vm475, %v1178, %v1179
      %v1181 = vrot.slane %v1074, 1
      %v1182 = vsel %vm475, %v1179, %v1181
      %v1183 = vrot.slane %v1075, 1
      %v1184 = vrot.slane %v1076, 1
      %v1185 = vsel %vm475, %v1183, %v1184
      %v1186 = vrot.slane %v1077, 1
      %v1187 = vsel %vm475, %v1184, %v1186
      %v1188 = vrot.slane %v1078, 1
      %v1189 = vrot.slane %v1079, 1
      %v1190 = vsel %vm475, %v1188, %v1189
      %v1191 = vrot.slane %v1080, 1
      %v1192 = vsel %vm475, %v1189, %v1191
      %v1193 = vrot.slane %v1081, 1
      %v1194 = vrot.slane %v1082, 1
      %v1195 = vsel %vm475, %v1193, %v1194
      %v1196 = vrot.slane %v1083, 1
      %v1197 = vsel %vm475, %v1194, %v1196
      %v1198 = vrot.slane %v1084, 1
      %v1199 = vrot.slane %v1085, 1
      %v1200 = vsel %vm475, %v1198, %v1199
      %v1201 = vrot.slane %v1086, 1
      %v1202 = vsel %vm475, %v1199, %v1201
      %v1203 = vrot.slane %v1087, 1
      %v1204 = vrot.slane %v1088, 1
      %v1205 = vsel %vm475, %v1203, %v1204
      %v1206 = vrot.slane %v1089, 1
      %v1207 = vsel %vm475, %v1204, %v1206
      %v1208 = vrot.slane %v1090, 1
      %v1209 = vrot.slane %v1091, 1
      %v1210 = vsel %vm475, %v1208, %v1209
      %v1211 = vrot.slane %v1092, 1
      %v1212 = vsel %vm475, %v1209, %v1211
      %v1213 = vrot.slane %v1093, 1
      %v1214 = vrot.slane %v1094, 1
      %v1215 = vsel %vm475, %v1213, %v1214
      %v1216 = vrot.slane %v1095, 1
      %v1217 = vsel %vm475, %v1214, %v1216
      %v1218 = vrot.slane %v1096, 1
      %v1219 = vrot.slane %v1097, 1
      %v1220 = vsel %vm475, %v1218, %v1219
      %v1221 = vrot.slane %v1098, 1
      %v1222 = vsel %vm475, %v1219, %v1221
      %v1223 = vrot.slane %v1099, 1
      %v1224 = vrot.slane %v1100, 1
      %v1225 = vsel %vm475, %v1223, %v1224
      %v1226 = vrot.slane %v1101, 1
      %v1227 = vsel %vm475, %v1224, %v1226
      %v1228 = vrot.slane %v1102, 1
      %v1229 = vrot.slane %v1103, 1
      %v1230 = vsel %vm475, %v1228, %v1229
      %v1231 = vrot.slane %v1104, 1
      %v1232 = vsel %vm475, %v1229, %v1231
      %v1265 = vadd.f32 %v992, %v1155
      %v1266 = vadd.f32 %v993, %v1157
      %v1267 = vadd.f32 %v994, %v1160
      %v1268 = vadd.f32 %v995, %v1162
      %v1269 = vadd.f32 %v996, %v1165
      %v1270 = vadd.f32 %v997, %v1167
      %v1271 = vadd.f32 %v998, %v1170
      %v1272 = vadd.f32 %v999, %v1172
      %v1273 = vadd.f32 %v1000, %v1175
      %v1274 = vadd.f32 %v1001, %v1177
      %v1275 = vadd.f32 %v1002, %v1180
      %v1276 = vadd.f32 %v1003, %v1182
      %v1277 = vadd.f32 %v1004, %v1185
      %v1278 = vadd.f32 %v1005, %v1187
      %v1279 = vadd.f32 %v1006, %v1190
      %v1280 = vadd.f32 %v1007, %v1192
      %v1281 = vadd.f32 %v1008, %v1195
      %v1282 = vadd.f32 %v1009, %v1197
      %v1283 = vadd.f32 %v1010, %v1200
      %v1284 = vadd.f32 %v1011, %v1202
      %v1285 = vadd.f32 %v1012, %v1205
      %v1286 = vadd.f32 %v1013, %v1207
      %v1287 = vadd.f32 %v1014, %v1210
      %v1288 = vadd.f32 %v1015, %v1212
      %v1289 = vadd.f32 %v1016, %v1215
      %v1290 = vadd.f32 %v1017, %v1217
      %v1291 = vadd.f32 %v1018, %v1220
      %v1292 = vadd.f32 %v1019, %v1222
      %v1293 = vadd.f32 %v1020, %v1225
      %v1294 = vadd.f32 %v1021, %v1227
      %v1295 = vadd.f32 %v1022, %v1230
      %v1296 = vadd.f32 %v1023, %v1232
      %v1297 = vld [vmem:[%s894] sm:$0xe]
      %v1298 = vld [vmem:[%s894 + $0xc] sm:$0xe]
      %v1299 = vld [vmem:[%s894 + $0x18] sm:$0xe]
      %v1300 = vld [vmem:[%s894 + $0x24] sm:$0xe]
      %v1301 = vld [vmem:[%s894 + $0x30] sm:$0xe]
      %v1302 = vld [vmem:[%s894 + $0x3c] sm:$0xe]
      %v1303 = vld [vmem:[%s894 + $0x48] sm:$0xe]
      %v1304 = vld [vmem:[%s894 + $0x54] sm:$0xe]
      %v1305 = vld [vmem:[%s894 + $0x60] sm:$0xe]
      %v1306 = vld [vmem:[%s894 + $0x6c] sm:$0xe]
      %v1307 = vld [vmem:[%s894 + $0x78] sm:$0xe]
      %v1308 = vld [vmem:[%s894 + $0x84] sm:$0xe]
      %v1309 = vld [vmem:[%s894 + $0x90] sm:$0xe]
      %v1310 = vld [vmem:[%s894 + $0x9c] sm:$0xe]
      %v1311 = vld [vmem:[%s894 + $0xa8] sm:$0xe]
      %v1312 = vld [vmem:[%s894 + $0xb4] sm:$0xe]
      %v1313 = vunpack.c.l.bf16 %v1297
      %v1314 = vunpack.c.l.bf16 %v1298
      %v1315 = vunpack.c.l.bf16 %v1299
      %v1316 = vunpack.c.l.bf16 %v1300
      %v1317 = vunpack.c.l.bf16 %v1301
      %v1318 = vunpack.c.l.bf16 %v1302
      %v1319 = vunpack.c.l.bf16 %v1303
      %v1320 = vunpack.c.l.bf16 %v1304
      %v1321 = vunpack.c.l.bf16 %v1305
      %v1322 = vunpack.c.l.bf16 %v1306
      %v1323 = vunpack.c.l.bf16 %v1307
      %v1324 = vunpack.c.l.bf16 %v1308
      %v1325 = vunpack.c.l.bf16 %v1309
      %v1326 = vunpack.c.l.bf16 %v1310
      %v1327 = vunpack.c.l.bf16 %v1311
      %v1328 = vunpack.c.l.bf16 %v1312
      %v1329 = vperm.slane %v215, 5
      %v1330 = vmul.f32 %v1313, %v1329
      %v1331 = vmul.f32 %v928, %v1329
      %v1332 = vmul.f32 %v1040, %v1329
      %v1333 = vmul.f32 %v1314, %v1329
      %v1334 = vmul.f32 %v930, %v1329
      %v1335 = vmul.f32 %v1041, %v1329
      %v1336 = vmul.f32 %v1315, %v1329
      %v1337 = vmul.f32 %v932, %v1329
      %v1338 = vmul.f32 %v1042, %v1329
      %v1339 = vmul.f32 %v1316, %v1329
      %v1340 = vmul.f32 %v934, %v1329
      %v1341 = vmul.f32 %v1043, %v1329
      %v1342 = vmul.f32 %v1317, %v1329
      %v1343 = vmul.f32 %v936, %v1329
      %v1344 = vmul.f32 %v1044, %v1329
      %v1345 = vmul.f32 %v1318, %v1329
      %v1346 = vmul.f32 %v938, %v1329
      %v1347 = vmul.f32 %v1045, %v1329
      %v1348 = vmul.f32 %v1319, %v1329
      %v1349 = vmul.f32 %v940, %v1329
      %v1350 = vmul.f32 %v1046, %v1329
      %v1351 = vmul.f32 %v1320, %v1329
      %v1352 = vmul.f32 %v942, %v1329
      %v1353 = vmul.f32 %v1047, %v1329
      %v1354 = vmul.f32 %v1321, %v1329
      %v1355 = vmul.f32 %v944, %v1329
      %v1356 = vmul.f32 %v1048, %v1329
      %v1357 = vmul.f32 %v1322, %v1329
      %v1358 = vmul.f32 %v946, %v1329
      %v1359 = vmul.f32 %v1049, %v1329
      %v1360 = vmul.f32 %v1323, %v1329
      %v1361 = vmul.f32 %v948, %v1329
      %v1362 = vmul.f32 %v1050, %v1329
      %v1363 = vmul.f32 %v1324, %v1329
      %v1364 = vmul.f32 %v950, %v1329
      %v1365 = vmul.f32 %v1051, %v1329
      %v1366 = vmul.f32 %v1325, %v1329
      %v1367 = vmul.f32 %v952, %v1329
      %v1368 = vmul.f32 %v1052, %v1329
      %v1369 = vmul.f32 %v1326, %v1329
      %v1370 = vmul.f32 %v954, %v1329
      %v1371 = vmul.f32 %v1053, %v1329
      %v1372 = vmul.f32 %v1327, %v1329
      %v1373 = vmul.f32 %v956, %v1329
      %v1374 = vmul.f32 %v1054, %v1329
      %v1375 = vmul.f32 %v1328, %v1329
      %v1376 = vmul.f32 %v958, %v1329
      %v1377 = vmul.f32 %v1055, %v1329
      %v1426 = vrot.slane %v1330, 2
      %v1427 = vrot.slane %v1331, 2
      %v1428 = vsel %vm749, %v1426, %v1427
      %v1429 = vrot.slane %v1332, 2
      %v1430 = vsel %vm749, %v1427, %v1429
      %v1431 = vrot.slane %v1333, 2
      %v1432 = vrot.slane %v1334, 2
      %v1433 = vsel %vm749, %v1431, %v1432
      %v1434 = vrot.slane %v1335, 2
      %v1435 = vsel %vm749, %v1432, %v1434
      %v1436 = vrot.slane %v1336, 2
      %v1437 = vrot.slane %v1337, 2
      %v1438 = vsel %vm749, %v1436, %v1437
      %v1439 = vrot.slane %v1338, 2
      %v1440 = vsel %vm749, %v1437, %v1439
      %v1441 = vrot.slane %v1339, 2
      %v1442 = vrot.slane %v1340, 2
      %v1443 = vsel %vm749, %v1441, %v1442
      %v1444 = vrot.slane %v1341, 2
      %v1445 = vsel %vm749, %v1442, %v1444
      %v1446 = vrot.slane %v1342, 2
      %v1447 = vrot.slane %v1343, 2
      %v1448 = vsel %vm749, %v1446, %v1447
      %v1449 = vrot.slane %v1344, 2
      %v1450 = vsel %vm749, %v1447, %v1449
      %v1451 = vrot.slane %v1345, 2
      %v1452 = vrot.slane %v1346, 2
      %v1453 = vsel %vm749, %v1451, %v1452
      %v1454 = vrot.slane %v1347, 2
      %v1455 = vsel %vm749, %v1452, %v1454
      %v1456 = vrot.slane %v1348, 2
      %v1457 = vrot.slane %v1349, 2
      %v1458 = vsel %vm749, %v1456, %v1457
      %v1459 = vrot.slane %v1350, 2
      %v1460 = vsel %vm749, %v1457, %v1459
      %v1461 = vrot.slane %v1351, 2
      %v1462 = vrot.slane %v1352, 2
      %v1463 = vsel %vm749, %v1461, %v1462
      %v1464 = vrot.slane %v1353, 2
      %v1465 = vsel %vm749, %v1462, %v1464
      %v1466 = vrot.slane %v1354, 2
      %v1467 = vrot.slane %v1355, 2
      %v1468 = vsel %vm749, %v1466, %v1467
      %v1469 = vrot.slane %v1356, 2
      %v1470 = vsel %vm749, %v1467, %v1469
      %v1471 = vrot.slane %v1357, 2
      %v1472 = vrot.slane %v1358, 2
      %v1473 = vsel %vm749, %v1471, %v1472
      %v1474 = vrot.slane %v1359, 2
      %v1475 = vsel %vm749, %v1472, %v1474
      %v1476 = vrot.slane %v1360, 2
      %v1477 = vrot.slane %v1361, 2
      %v1478 = vsel %vm749, %v1476, %v1477
      %v1479 = vrot.slane %v1362, 2
      %v1480 = vsel %vm749, %v1477, %v1479
      %v1481 = vrot.slane %v1363, 2
      %v1482 = vrot.slane %v1364, 2
      %v1483 = vsel %vm749, %v1481, %v1482
      %v1484 = vrot.slane %v1365, 2
      %v1485 = vsel %vm749, %v1482, %v1484
      %v1486 = vrot.slane %v1366, 2
      %v1487 = vrot.slane %v1367, 2
      %v1488 = vsel %vm749, %v1486, %v1487
      %v1489 = vrot.slane %v1368, 2
      %v1490 = vsel %vm749, %v1487, %v1489
      %v1491 = vrot.slane %v1369, 2
      %v1492 = vrot.slane %v1370, 2
      %v1493 = vsel %vm749, %v1491, %v1492
      %v1494 = vrot.slane %v1371, 2
      %v1495 = vsel %vm749, %v1492, %v1494
      %v1496 = vrot.slane %v1372, 2
      %v1497 = vrot.slane %v1373, 2
      %v1498 = vsel %vm749, %v1496, %v1497
      %v1499 = vrot.slane %v1374, 2
      %v1500 = vsel %vm749, %v1497, %v1499
      %v1501 = vrot.slane %v1375, 2
      %v1502 = vrot.slane %v1376, 2
      %v1503 = vsel %vm749, %v1501, %v1502
      %v1504 = vrot.slane %v1377, 2
      %v1505 = vsel %vm749, %v1502, %v1504
      %v1538 = vadd.f32 %v1265, %v1428
      %v1539 = vadd.f32 %v1266, %v1430
      %v1540 = vadd.f32 %v1267, %v1433
      %v1541 = vadd.f32 %v1268, %v1435
      %v1542 = vadd.f32 %v1269, %v1438
      %v1543 = vadd.f32 %v1270, %v1440
      %v1544 = vadd.f32 %v1271, %v1443
      %v1545 = vadd.f32 %v1272, %v1445
      %v1546 = vadd.f32 %v1273, %v1448
      %v1547 = vadd.f32 %v1274, %v1450
      %v1548 = vadd.f32 %v1275, %v1453
      %v1549 = vadd.f32 %v1276, %v1455
      %v1550 = vadd.f32 %v1277, %v1458
      %v1551 = vadd.f32 %v1278, %v1460
      %v1552 = vadd.f32 %v1279, %v1463
      %v1553 = vadd.f32 %v1280, %v1465
      %v1554 = vadd.f32 %v1281, %v1468
      %v1555 = vadd.f32 %v1282, %v1470
      %v1556 = vadd.f32 %v1283, %v1473
      %v1557 = vadd.f32 %v1284, %v1475
      %v1558 = vadd.f32 %v1285, %v1478
      %v1559 = vadd.f32 %v1286, %v1480
      %v1560 = vadd.f32 %v1287, %v1483
      %v1561 = vadd.f32 %v1288, %v1485
      %v1562 = vadd.f32 %v1289, %v1488
      %v1563 = vadd.f32 %v1290, %v1490
      %v1564 = vadd.f32 %v1291, %v1493
      %v1565 = vadd.f32 %v1292, %v1495
      %v1566 = vadd.f32 %v1293, %v1498
      %v1567 = vadd.f32 %v1294, %v1500
      %v1568 = vadd.f32 %v1295, %v1503
      %v1569 = vadd.f32 %v1296, %v1505
      %s1570 = scalar_lea.vmem %s203, 24
      %v1571 = vld [vmem:[%s1570] sm:$0xf]
      %v1572 = vld [vmem:[%s1570 + $0x4] sm:$0xf]
      %v1573 = vld [vmem:[%s1570 + $0xc] sm:$0xf]
      %v1574 = vld [vmem:[%s1570 + $0x10] sm:$0xf]
      %v1575 = vld [vmem:[%s1570 + $0x18] sm:$0xf]
      %v1576 = vld [vmem:[%s1570 + $0x1c] sm:$0xf]
      %v1577 = vld [vmem:[%s1570 + $0x24] sm:$0xf]
      %v1578 = vld [vmem:[%s1570 + $0x28] sm:$0xf]
      %v1579 = vld [vmem:[%s1570 + $0x30] sm:$0xf]
      %v1580 = vld [vmem:[%s1570 + $0x34] sm:$0xf]
      %v1581 = vld [vmem:[%s1570 + $0x3c] sm:$0xf]
      %v1582 = vld [vmem:[%s1570 + $0x40] sm:$0xf]
      %v1583 = vld [vmem:[%s1570 + $0x48] sm:$0xf]
      %v1584 = vld [vmem:[%s1570 + $0x4c] sm:$0xf]
      %v1585 = vld [vmem:[%s1570 + $0x54] sm:$0xf]
      %v1586 = vld [vmem:[%s1570 + $0x58] sm:$0xf]
      %v1587 = vld [vmem:[%s1570 + $0x60] sm:$0xf]
      %v1588 = vld [vmem:[%s1570 + $0x64] sm:$0xf]
      %v1589 = vld [vmem:[%s1570 + $0x6c] sm:$0xf]
      %v1590 = vld [vmem:[%s1570 + $0x70] sm:$0xf]
      %v1591 = vld [vmem:[%s1570 + $0x78] sm:$0xf]
      %v1592 = vld [vmem:[%s1570 + $0x7c] sm:$0xf]
      %v1593 = vld [vmem:[%s1570 + $0x84] sm:$0xf]
      %v1594 = vld [vmem:[%s1570 + $0x88] sm:$0xf]
      %v1595 = vld [vmem:[%s1570 + $0x90] sm:$0xf]
      %v1596 = vld [vmem:[%s1570 + $0x94] sm:$0xf]
      %v1597 = vld [vmem:[%s1570 + $0x9c] sm:$0xf]
      %v1598 = vld [vmem:[%s1570 + $0xa0] sm:$0xf]
      %v1599 = vld [vmem:[%s1570 + $0xa8] sm:$0xf]
      %v1600 = vld [vmem:[%s1570 + $0xac] sm:$0xf]
      %v1601 = vld [vmem:[%s1570 + $0xb4] sm:$0xf]
      %v1602 = vld [vmem:[%s1570 + $0xb8] sm:$0xf]
      %v1603 = vunpack.c.l.bf16 %v1571
      %v1604 = vunpack.c.l.bf16 %v1572
      %v1605 = vunpack.c.l.bf16 %v1573
      %v1606 = vunpack.c.l.bf16 %v1574
      %v1607 = vunpack.c.l.bf16 %v1575
      %v1608 = vunpack.c.l.bf16 %v1576
      %v1609 = vunpack.c.l.bf16 %v1577
      %v1610 = vunpack.c.l.bf16 %v1578
      %v1611 = vunpack.c.l.bf16 %v1579
      %v1612 = vunpack.c.l.bf16 %v1580
      %v1613 = vunpack.c.l.bf16 %v1581
      %v1614 = vunpack.c.l.bf16 %v1582
      %v1615 = vunpack.c.l.bf16 %v1583
      %v1616 = vunpack.c.l.bf16 %v1584
      %v1617 = vunpack.c.l.bf16 %v1585
      %v1618 = vunpack.c.l.bf16 %v1586
      %v1619 = vunpack.c.l.bf16 %v1587
      %v1620 = vunpack.c.l.bf16 %v1588
      %v1621 = vunpack.c.l.bf16 %v1589
      %v1622 = vunpack.c.l.bf16 %v1590
      %v1623 = vunpack.c.l.bf16 %v1591
      %v1624 = vunpack.c.l.bf16 %v1592
      %v1625 = vunpack.c.l.bf16 %v1593
      %v1626 = vunpack.c.l.bf16 %v1594
      %v1627 = vunpack.c.l.bf16 %v1595
      %v1628 = vunpack.c.l.bf16 %v1596
      %v1629 = vunpack.c.l.bf16 %v1597
      %v1630 = vunpack.c.l.bf16 %v1598
      %v1631 = vunpack.c.l.bf16 %v1599
      %v1632 = vunpack.c.l.bf16 %v1600
      %v1633 = vunpack.c.l.bf16 %v1601
      %v1634 = vunpack.c.l.bf16 %v1602
      %v1635 = vperm.slane %v215, 6
      %v1636 = vmul.f32 %v1603, %v1635
      %v1637 = vmul.f32 %v1604, %v1635
      %v1638 = vmul.f32 %v1605, %v1635
      %v1639 = vmul.f32 %v1606, %v1635
      %v1640 = vmul.f32 %v1607, %v1635
      %v1641 = vmul.f32 %v1608, %v1635
      %v1642 = vmul.f32 %v1609, %v1635
      %v1643 = vmul.f32 %v1610, %v1635
      %v1644 = vmul.f32 %v1611, %v1635
      %v1645 = vmul.f32 %v1612, %v1635
      %v1646 = vmul.f32 %v1613, %v1635
      %v1647 = vmul.f32 %v1614, %v1635
      %v1648 = vmul.f32 %v1615, %v1635
      %v1649 = vmul.f32 %v1616, %v1635
      %v1650 = vmul.f32 %v1617, %v1635
      %v1651 = vmul.f32 %v1618, %v1635
      %v1652 = vmul.f32 %v1619, %v1635
      %v1653 = vmul.f32 %v1620, %v1635
      %v1654 = vmul.f32 %v1621, %v1635
      %v1655 = vmul.f32 %v1622, %v1635
      %v1656 = vmul.f32 %v1623, %v1635
      %v1657 = vmul.f32 %v1624, %v1635
      %v1658 = vmul.f32 %v1625, %v1635
      %v1659 = vmul.f32 %v1626, %v1635
      %v1660 = vmul.f32 %v1627, %v1635
      %v1661 = vmul.f32 %v1628, %v1635
      %v1662 = vmul.f32 %v1629, %v1635
      %v1663 = vmul.f32 %v1630, %v1635
      %v1664 = vmul.f32 %v1631, %v1635
      %v1665 = vmul.f32 %v1632, %v1635
      %v1666 = vmul.f32 %v1633, %v1635
      %v1667 = vmul.f32 %v1634, %v1635
      %v1668 = vadd.f32 %v1538, %v1636
      %v1669 = vadd.f32 %v1539, %v1637
      %v1670 = vadd.f32 %v1540, %v1638
      %v1671 = vadd.f32 %v1541, %v1639
      %v1672 = vadd.f32 %v1542, %v1640
      %v1673 = vadd.f32 %v1543, %v1641
      %v1674 = vadd.f32 %v1544, %v1642
      %v1675 = vadd.f32 %v1545, %v1643
      %v1676 = vadd.f32 %v1546, %v1644
      %v1677 = vadd.f32 %v1547, %v1645
      %v1678 = vadd.f32 %v1548, %v1646
      %v1679 = vadd.f32 %v1549, %v1647
      %v1680 = vadd.f32 %v1550, %v1648
      %v1681 = vadd.f32 %v1551, %v1649
      %v1682 = vadd.f32 %v1552, %v1650
      %v1683 = vadd.f32 %v1553, %v1651
      %v1684 = vadd.f32 %v1554, %v1652
      %v1685 = vadd.f32 %v1555, %v1653
      %v1686 = vadd.f32 %v1556, %v1654
      %v1687 = vadd.f32 %v1557, %v1655
      %v1688 = vadd.f32 %v1558, %v1656
      %v1689 = vadd.f32 %v1559, %v1657
      %v1690 = vadd.f32 %v1560, %v1658
      %v1691 = vadd.f32 %v1561, %v1659
      %v1692 = vadd.f32 %v1562, %v1660
      %v1693 = vadd.f32 %v1563, %v1661
      %v1694 = vadd.f32 %v1564, %v1662
      %v1695 = vadd.f32 %v1565, %v1663
      %v1696 = vadd.f32 %v1566, %v1664
      %v1697 = vadd.f32 %v1567, %v1665
      %v1698 = vadd.f32 %v1568, %v1666
      %v1699 = vadd.f32 %v1569, %v1667
      %v1700 = vld [vmem:[%s1570 + $0x8] sm:$0x1]
      %v1701 = vld [vmem:[%s1570 + $0x14] sm:$0x1]
      %v1702 = vld [vmem:[%s1570 + $0x20] sm:$0x1]
      %v1703 = vld [vmem:[%s1570 + $0x2c] sm:$0x1]
      %v1704 = vld [vmem:[%s1570 + $0x38] sm:$0x1]
      %v1705 = vld [vmem:[%s1570 + $0x44] sm:$0x1]
      %v1706 = vld [vmem:[%s1570 + $0x50] sm:$0x1]
      %v1707 = vld [vmem:[%s1570 + $0x5c] sm:$0x1]
      %v1708 = vld [vmem:[%s1570 + $0x68] sm:$0x1]
      %v1709 = vld [vmem:[%s1570 + $0x74] sm:$0x1]
      %v1710 = vld [vmem:[%s1570 + $0x80] sm:$0x1]
      %v1711 = vld [vmem:[%s1570 + $0x8c] sm:$0x1]
      %v1712 = vld [vmem:[%s1570 + $0x98] sm:$0x1]
      %v1713 = vld [vmem:[%s1570 + $0xa4] sm:$0x1]
      %v1714 = vld [vmem:[%s1570 + $0xb0] sm:$0x1]
      %v1715 = vld [vmem:[%s1570 + $0xbc] sm:$0x1]
      %v1716 = vunpack.c.l.bf16 %v1700
      %v1717 = vunpack.c.l.bf16 %v1701
      %v1718 = vunpack.c.l.bf16 %v1702
      %v1719 = vunpack.c.l.bf16 %v1703
      %v1720 = vunpack.c.l.bf16 %v1704
      %v1721 = vunpack.c.l.bf16 %v1705
      %v1722 = vunpack.c.l.bf16 %v1706
      %v1723 = vunpack.c.l.bf16 %v1707
      %v1724 = vunpack.c.l.bf16 %v1708
      %v1725 = vunpack.c.l.bf16 %v1709
      %v1726 = vunpack.c.l.bf16 %v1710
      %v1727 = vunpack.c.l.bf16 %v1711
      %v1728 = vunpack.c.l.bf16 %v1712
      %v1729 = vunpack.c.l.bf16 %v1713
      %v1730 = vunpack.c.l.bf16 %v1714
      %v1731 = vunpack.c.l.bf16 %v1715
      %v1732 = vperm.slane %v215, 7
      %v1733 = vmul.f32 %v1603, %v1732
      %v1734 = vmul.f32 %v1604, %v1732
      %v1735 = vmul.f32 %v1716, %v1732
      %v1736 = vmul.f32 %v1605, %v1732
      %v1737 = vmul.f32 %v1606, %v1732
      %v1738 = vmul.f32 %v1717, %v1732
      %v1739 = vmul.f32 %v1607, %v1732
      %v1740 = vmul.f32 %v1608, %v1732
      %v1741 = vmul.f32 %v1718, %v1732
      %v1742 = vmul.f32 %v1609, %v1732
      %v1743 = vmul.f32 %v1610, %v1732
      %v1744 = vmul.f32 %v1719, %v1732
      %v1745 = vmul.f32 %v1611, %v1732
      %v1746 = vmul.f32 %v1612, %v1732
      %v1747 = vmul.f32 %v1720, %v1732
      %v1748 = vmul.f32 %v1613, %v1732
      %v1749 = vmul.f32 %v1614, %v1732
      %v1750 = vmul.f32 %v1721, %v1732
      %v1751 = vmul.f32 %v1615, %v1732
      %v1752 = vmul.f32 %v1616, %v1732
      %v1753 = vmul.f32 %v1722, %v1732
      %v1754 = vmul.f32 %v1617, %v1732
      %v1755 = vmul.f32 %v1618, %v1732
      %v1756 = vmul.f32 %v1723, %v1732
      %v1757 = vmul.f32 %v1619, %v1732
      %v1758 = vmul.f32 %v1620, %v1732
      %v1759 = vmul.f32 %v1724, %v1732
      %v1760 = vmul.f32 %v1621, %v1732
      %v1761 = vmul.f32 %v1622, %v1732
      %v1762 = vmul.f32 %v1725, %v1732
      %v1763 = vmul.f32 %v1623, %v1732
      %v1764 = vmul.f32 %v1624, %v1732
      %v1765 = vmul.f32 %v1726, %v1732
      %v1766 = vmul.f32 %v1625, %v1732
      %v1767 = vmul.f32 %v1626, %v1732
      %v1768 = vmul.f32 %v1727, %v1732
      %v1769 = vmul.f32 %v1627, %v1732
      %v1770 = vmul.f32 %v1628, %v1732
      %v1771 = vmul.f32 %v1728, %v1732
      %v1772 = vmul.f32 %v1629, %v1732
      %v1773 = vmul.f32 %v1630, %v1732
      %v1774 = vmul.f32 %v1729, %v1732
      %v1775 = vmul.f32 %v1631, %v1732
      %v1776 = vmul.f32 %v1632, %v1732
      %v1777 = vmul.f32 %v1730, %v1732
      %v1778 = vmul.f32 %v1633, %v1732
      %v1779 = vmul.f32 %v1634, %v1732
      %v1780 = vmul.f32 %v1731, %v1732
      %v1829 = vrot.slane %v1733, 1
      %v1830 = vrot.slane %v1734, 1
      %v1831 = vsel %vm475, %v1829, %v1830
      %v1832 = vrot.slane %v1735, 1
      %v1833 = vsel %vm475, %v1830, %v1832
      %v1834 = vrot.slane %v1736, 1
      %v1835 = vrot.slane %v1737, 1
      %v1836 = vsel %vm475, %v1834, %v1835
      %v1837 = vrot.slane %v1738, 1
      %v1838 = vsel %vm475, %v1835, %v1837
      %v1839 = vrot.slane %v1739, 1
      %v1840 = vrot.slane %v1740, 1
      %v1841 = vsel %vm475, %v1839, %v1840
      %v1842 = vrot.slane %v1741, 1
      %v1843 = vsel %vm475, %v1840, %v1842
      %v1844 = vrot.slane %v1742, 1
      %v1845 = vrot.slane %v1743, 1
      %v1846 = vsel %vm475, %v1844, %v1845
      %v1847 = vrot.slane %v1744, 1
      %v1848 = vsel %vm475, %v1845, %v1847
      %v1849 = vrot.slane %v1745, 1
      %v1850 = vrot.slane %v1746, 1
      %v1851 = vsel %vm475, %v1849, %v1850
      %v1852 = vrot.slane %v1747, 1
      %v1853 = vsel %vm475, %v1850, %v1852
      %v1854 = vrot.slane %v1748, 1
      %v1855 = vrot.slane %v1749, 1
      %v1856 = vsel %vm475, %v1854, %v1855
      %v1857 = vrot.slane %v1750, 1
      %v1858 = vsel %vm475, %v1855, %v1857
      %v1859 = vrot.slane %v1751, 1
      %v1860 = vrot.slane %v1752, 1
      %v1861 = vsel %vm475, %v1859, %v1860
      %v1862 = vrot.slane %v1753, 1
      %v1863 = vsel %vm475, %v1860, %v1862
      %v1864 = vrot.slane %v1754, 1
      %v1865 = vrot.slane %v1755, 1
      %v1866 = vsel %vm475, %v1864, %v1865
      %v1867 = vrot.slane %v1756, 1
      %v1868 = vsel %vm475, %v1865, %v1867
      %v1869 = vrot.slane %v1757, 1
      %v1870 = vrot.slane %v1758, 1
      %v1871 = vsel %vm475, %v1869, %v1870
      %v1872 = vrot.slane %v1759, 1
      %v1873 = vsel %vm475, %v1870, %v1872
      %v1874 = vrot.slane %v1760, 1
      %v1875 = vrot.slane %v1761, 1
      %v1876 = vsel %vm475, %v1874, %v1875
      %v1877 = vrot.slane %v1762, 1
      %v1878 = vsel %vm475, %v1875, %v1877
      %v1879 = vrot.slane %v1763, 1
      %v1880 = vrot.slane %v1764, 1
      %v1881 = vsel %vm475, %v1879, %v1880
      %v1882 = vrot.slane %v1765, 1
      %v1883 = vsel %vm475, %v1880, %v1882
      %v1884 = vrot.slane %v1766, 1
      %v1885 = vrot.slane %v1767, 1
      %v1886 = vsel %vm475, %v1884, %v1885
      %v1887 = vrot.slane %v1768, 1
      %v1888 = vsel %vm475, %v1885, %v1887
      %v1889 = vrot.slane %v1769, 1
      %v1890 = vrot.slane %v1770, 1
      %v1891 = vsel %vm475, %v1889, %v1890
      %v1892 = vrot.slane %v1771, 1
      %v1893 = vsel %vm475, %v1890, %v1892
      %v1894 = vrot.slane %v1772, 1
      %v1895 = vrot.slane %v1773, 1
      %v1896 = vsel %vm475, %v1894, %v1895
      %v1897 = vrot.slane %v1774, 1
      %v1898 = vsel %vm475, %v1895, %v1897
      %v1899 = vrot.slane %v1775, 1
      %v1900 = vrot.slane %v1776, 1
      %v1901 = vsel %vm475, %v1899, %v1900
      %v1902 = vrot.slane %v1777, 1
      %v1903 = vsel %vm475, %v1900, %v1902
      %v1904 = vrot.slane %v1778, 1
      %v1905 = vrot.slane %v1779, 1
      %v1906 = vsel %vm475, %v1904, %v1905
      %v1907 = vrot.slane %v1780, 1
      %v1908 = vsel %vm475, %v1905, %v1907
      %v1941 = vadd.f32 %v1668, %v1831
      %v1942 = vadd.f32 %v1669, %v1833
      %v1943 = vadd.f32 %v1670, %v1836
      %v1944 = vadd.f32 %v1671, %v1838
      %v1945 = vadd.f32 %v1672, %v1841
      %v1946 = vadd.f32 %v1673, %v1843
      %v1947 = vadd.f32 %v1674, %v1846
      %v1948 = vadd.f32 %v1675, %v1848
      %v1949 = vadd.f32 %v1676, %v1851
      %v1950 = vadd.f32 %v1677, %v1853
      %v1951 = vadd.f32 %v1678, %v1856
      %v1952 = vadd.f32 %v1679, %v1858
      %v1953 = vadd.f32 %v1680, %v1861
      %v1954 = vadd.f32 %v1681, %v1863
      %v1955 = vadd.f32 %v1682, %v1866
      %v1956 = vadd.f32 %v1683, %v1868
      %v1957 = vadd.f32 %v1684, %v1871
      %v1958 = vadd.f32 %v1685, %v1873
      %v1959 = vadd.f32 %v1686, %v1876
      %v1960 = vadd.f32 %v1687, %v1878
      %v1961 = vadd.f32 %v1688, %v1881
      %v1962 = vadd.f32 %v1689, %v1883
      %v1963 = vadd.f32 %v1690, %v1886
      %v1964 = vadd.f32 %v1691, %v1888
      %v1965 = vadd.f32 %v1692, %v1891
      %v1966 = vadd.f32 %v1693, %v1893
      %v1967 = vadd.f32 %v1694, %v1896
      %v1968 = vadd.f32 %v1695, %v1898
      %v1969 = vadd.f32 %v1696, %v1901
      %v1970 = vadd.f32 %v1697, %v1903
      %v1971 = vadd.f32 %v1698, %v1906
      %v1972 = vadd.f32 %v1699, %v1908
      %v1973 = vld [vmem:[%s1570] sm:$0xe]
      %v1974 = vld [vmem:[%s1570 + $0xc] sm:$0xe]
      %v1975 = vld [vmem:[%s1570 + $0x18] sm:$0xe]
      %v1976 = vld [vmem:[%s1570 + $0x24] sm:$0xe]
      %v1977 = vld [vmem:[%s1570 + $0x30] sm:$0xe]
      %v1978 = vld [vmem:[%s1570 + $0x3c] sm:$0xe]
      %v1979 = vld [vmem:[%s1570 + $0x48] sm:$0xe]
      %v1980 = vld [vmem:[%s1570 + $0x54] sm:$0xe]
      %v1981 = vld [vmem:[%s1570 + $0x60] sm:$0xe]
      %v1982 = vld [vmem:[%s1570 + $0x6c] sm:$0xe]
      %v1983 = vld [vmem:[%s1570 + $0x78] sm:$0xe]
      %v1984 = vld [vmem:[%s1570 + $0x84] sm:$0xe]
      %v1985 = vld [vmem:[%s1570 + $0x90] sm:$0xe]
      %v1986 = vld [vmem:[%s1570 + $0x9c] sm:$0xe]
      %v1987 = vld [vmem:[%s1570 + $0xa8] sm:$0xe]
      %v1988 = vld [vmem:[%s1570 + $0xb4] sm:$0xe]
      %v1989 = vunpack.c.l.bf16 %v1973
      %v1990 = vunpack.c.l.bf16 %v1974
      %v1991 = vunpack.c.l.bf16 %v1975
      %v1992 = vunpack.c.l.bf16 %v1976
      %v1993 = vunpack.c.l.bf16 %v1977
      %v1994 = vunpack.c.l.bf16 %v1978
      %v1995 = vunpack.c.l.bf16 %v1979
      %v1996 = vunpack.c.l.bf16 %v1980
      %v1997 = vunpack.c.l.bf16 %v1981
      %v1998 = vunpack.c.l.bf16 %v1982
      %v1999 = vunpack.c.l.bf16 %v1983
      %v2000 = vunpack.c.l.bf16 %v1984
      %v2001 = vunpack.c.l.bf16 %v1985
      %v2002 = vunpack.c.l.bf16 %v1986
      %v2003 = vunpack.c.l.bf16 %v1987
      %v2004 = vunpack.c.l.bf16 %v1988
      %v2005 = vperm.slane %v216, 0
      %v2006 = vmul.f32 %v1989, %v2005
      %v2007 = vmul.f32 %v1604, %v2005
      %v2008 = vmul.f32 %v1716, %v2005
      %v2009 = vmul.f32 %v1990, %v2005
      %v2010 = vmul.f32 %v1606, %v2005
      %v2011 = vmul.f32 %v1717, %v2005
      %v2012 = vmul.f32 %v1991, %v2005
      %v2013 = vmul.f32 %v1608, %v2005
      %v2014 = vmul.f32 %v1718, %v2005
      %v2015 = vmul.f32 %v1992, %v2005
      %v2016 = vmul.f32 %v1610, %v2005
      %v2017 = vmul.f32 %v1719, %v2005
      %v2018 = vmul.f32 %v1993, %v2005
      %v2019 = vmul.f32 %v1612, %v2005
      %v2020 = vmul.f32 %v1720, %v2005
      %v2021 = vmul.f32 %v1994, %v2005
      %v2022 = vmul.f32 %v1614, %v2005
      %v2023 = vmul.f32 %v1721, %v2005
      %v2024 = vmul.f32 %v1995, %v2005
      %v2025 = vmul.f32 %v1616, %v2005
      %v2026 = vmul.f32 %v1722, %v2005
      %v2027 = vmul.f32 %v1996, %v2005
      %v2028 = vmul.f32 %v1618, %v2005
      %v2029 = vmul.f32 %v1723, %v2005
      %v2030 = vmul.f32 %v1997, %v2005
      %v2031 = vmul.f32 %v1620, %v2005
      %v2032 = vmul.f32 %v1724, %v2005
      %v2033 = vmul.f32 %v1998, %v2005
      %v2034 = vmul.f32 %v1622, %v2005
      %v2035 = vmul.f32 %v1725, %v2005
      %v2036 = vmul.f32 %v1999, %v2005
      %v2037 = vmul.f32 %v1624, %v2005
      %v2038 = vmul.f32 %v1726, %v2005
      %v2039 = vmul.f32 %v2000, %v2005
      %v2040 = vmul.f32 %v1626, %v2005
      %v2041 = vmul.f32 %v1727, %v2005
      %v2042 = vmul.f32 %v2001, %v2005
      %v2043 = vmul.f32 %v1628, %v2005
      %v2044 = vmul.f32 %v1728, %v2005
      %v2045 = vmul.f32 %v2002, %v2005
      %v2046 = vmul.f32 %v1630, %v2005
      %v2047 = vmul.f32 %v1729, %v2005
      %v2048 = vmul.f32 %v2003, %v2005
      %v2049 = vmul.f32 %v1632, %v2005
      %v2050 = vmul.f32 %v1730, %v2005
      %v2051 = vmul.f32 %v2004, %v2005
      %v2052 = vmul.f32 %v1634, %v2005
      %v2053 = vmul.f32 %v1731, %v2005
      %v2102 = vrot.slane %v2006, 2
      %v2103 = vrot.slane %v2007, 2
      %v2104 = vsel %vm749, %v2102, %v2103
      %v2105 = vrot.slane %v2008, 2
      %v2106 = vsel %vm749, %v2103, %v2105
      %v2107 = vrot.slane %v2009, 2
      %v2108 = vrot.slane %v2010, 2
      %v2109 = vsel %vm749, %v2107, %v2108
      %v2110 = vrot.slane %v2011, 2
      %v2111 = vsel %vm749, %v2108, %v2110
      %v2112 = vrot.slane %v2012, 2
      %v2113 = vrot.slane %v2013, 2
      %v2114 = vsel %vm749, %v2112, %v2113
      %v2115 = vrot.slane %v2014, 2
      %v2116 = vsel %vm749, %v2113, %v2115
      %v2117 = vrot.slane %v2015, 2
      %v2118 = vrot.slane %v2016, 2
      %v2119 = vsel %vm749, %v2117, %v2118
      %v2120 = vrot.slane %v2017, 2
      %v2121 = vsel %vm749, %v2118, %v2120
      %v2122 = vrot.slane %v2018, 2
      %v2123 = vrot.slane %v2019, 2
      %v2124 = vsel %vm749, %v2122, %v2123
      %v2125 = vrot.slane %v2020, 2
      %v2126 = vsel %vm749, %v2123, %v2125
      %v2127 = vrot.slane %v2021, 2
      %v2128 = vrot.slane %v2022, 2
      %v2129 = vsel %vm749, %v2127, %v2128
      %v2130 = vrot.slane %v2023, 2
      %v2131 = vsel %vm749, %v2128, %v2130
      %v2132 = vrot.slane %v2024, 2
      %v2133 = vrot.slane %v2025, 2
      %v2134 = vsel %vm749, %v2132, %v2133
      %v2135 = vrot.slane %v2026, 2
      %v2136 = vsel %vm749, %v2133, %v2135
      %v2137 = vrot.slane %v2027, 2
      %v2138 = vrot.slane %v2028, 2
      %v2139 = vsel %vm749, %v2137, %v2138
      %v2140 = vrot.slane %v2029, 2
      %v2141 = vsel %vm749, %v2138, %v2140
      %v2142 = vrot.slane %v2030, 2
      %v2143 = vrot.slane %v2031, 2
      %v2144 = vsel %vm749, %v2142, %v2143
      %v2145 = vrot.slane %v2032, 2
      %v2146 = vsel %vm749, %v2143, %v2145
      %v2147 = vrot.slane %v2033, 2
      %v2148 = vrot.slane %v2034, 2
      %v2149 = vsel %vm749, %v2147, %v2148
      %v2150 = vrot.slane %v2035, 2
      %v2151 = vsel %vm749, %v2148, %v2150
      %v2152 = vrot.slane %v2036, 2
      %v2153 = vrot.slane %v2037, 2
      %v2154 = vsel %vm749, %v2152, %v2153
      %v2155 = vrot.slane %v2038, 2
      %v2156 = vsel %vm749, %v2153, %v2155
      %v2157 = vrot.slane %v2039, 2
      %v2158 = vrot.slane %v2040, 2
      %v2159 = vsel %vm749, %v2157, %v2158
      %v2160 = vrot.slane %v2041, 2
      %v2161 = vsel %vm749, %v2158, %v2160
      %v2162 = vrot.slane %v2042, 2
      %v2163 = vrot.slane %v2043, 2
      %v2164 = vsel %vm749, %v2162, %v2163
      %v2165 = vrot.slane %v2044, 2
      %v2166 = vsel %vm749, %v2163, %v2165
      %v2167 = vrot.slane %v2045, 2
      %v2168 = vrot.slane %v2046, 2
      %v2169 = vsel %vm749, %v2167, %v2168
      %v2170 = vrot.slane %v2047, 2
      %v2171 = vsel %vm749, %v2168, %v2170
      %v2172 = vrot.slane %v2048, 2
      %v2173 = vrot.slane %v2049, 2
      %v2174 = vsel %vm749, %v2172, %v2173
      %v2175 = vrot.slane %v2050, 2
      %v2176 = vsel %vm749, %v2173, %v2175
      %v2177 = vrot.slane %v2051, 2
      %v2178 = vrot.slane %v2052, 2
      %v2179 = vsel %vm749, %v2177, %v2178
      %v2180 = vrot.slane %v2053, 2
      %v2181 = vsel %vm749, %v2178, %v2180
      %v2214 = vadd.f32 %v1941, %v2104
      %v2215 = vadd.f32 %v1942, %v2106
      %v2216 = vadd.f32 %v1943, %v2109
      %v2217 = vadd.f32 %v1944, %v2111
      %v2218 = vadd.f32 %v1945, %v2114
      %v2219 = vadd.f32 %v1946, %v2116
      %v2220 = vadd.f32 %v1947, %v2119
      %v2221 = vadd.f32 %v1948, %v2121
      %v2222 = vadd.f32 %v1949, %v2124
      %v2223 = vadd.f32 %v1950, %v2126
      %v2224 = vadd.f32 %v1951, %v2129
      %v2225 = vadd.f32 %v1952, %v2131
      %v2226 = vadd.f32 %v1953, %v2134
      %v2227 = vadd.f32 %v1954, %v2136
      %v2228 = vadd.f32 %v1955, %v2139
      %v2229 = vadd.f32 %v1956, %v2141
      %v2230 = vadd.f32 %v1957, %v2144
      %v2231 = vadd.f32 %v1958, %v2146
      %v2232 = vadd.f32 %v1959, %v2149
      %v2233 = vadd.f32 %v1960, %v2151
      %v2234 = vadd.f32 %v1961, %v2154
      %v2235 = vadd.f32 %v1962, %v2156
      %v2236 = vadd.f32 %v1963, %v2159
      %v2237 = vadd.f32 %v1964, %v2161
      %v2238 = vadd.f32 %v1965, %v2164
      %v2239 = vadd.f32 %v1966, %v2166
      %v2240 = vadd.f32 %v1967, %v2169
      %v2241 = vadd.f32 %v1968, %v2171
      %v2242 = vadd.f32 %v1969, %v2174
      %v2243 = vadd.f32 %v1970, %v2176
      %v2244 = vadd.f32 %v1971, %v2179
      %v2245 = vadd.f32 %v1972, %v2181
      %v2246 = vpack.c.bf16 %v2214, %v2214
      %v2247 = vpack.c.bf16 %v2215, %v2215
      %v2248 = vpack.c.bf16 %v2216, %v2216
      %v2249 = vpack.c.bf16 %v2217, %v2217
      %v2250 = vpack.c.bf16 %v2218, %v2218
      %v2251 = vpack.c.bf16 %v2219, %v2219
      %v2252 = vpack.c.bf16 %v2220, %v2220
      %v2253 = vpack.c.bf16 %v2221, %v2221
      %v2254 = vpack.c.bf16 %v2222, %v2222
      %v2255 = vpack.c.bf16 %v2223, %v2223
      %v2256 = vpack.c.bf16 %v2224, %v2224
      %v2257 = vpack.c.bf16 %v2225, %v2225
      %v2258 = vpack.c.bf16 %v2226, %v2226
      %v2259 = vpack.c.bf16 %v2227, %v2227
      %v2260 = vpack.c.bf16 %v2228, %v2228
      %v2261 = vpack.c.bf16 %v2229, %v2229
      %v2262 = vpack.c.bf16 %v2230, %v2230
      %v2263 = vpack.c.bf16 %v2231, %v2231
      %v2264 = vpack.c.bf16 %v2232, %v2232
      %v2265 = vpack.c.bf16 %v2233, %v2233
      %v2266 = vpack.c.bf16 %v2234, %v2234
      %v2267 = vpack.c.bf16 %v2235, %v2235
      %v2268 = vpack.c.bf16 %v2236, %v2236
      %v2269 = vpack.c.bf16 %v2237, %v2237
      %v2270 = vpack.c.bf16 %v2238, %v2238
      %v2271 = vpack.c.bf16 %v2239, %v2239
      %v2272 = vpack.c.bf16 %v2240, %v2240
      %v2273 = vpack.c.bf16 %v2241, %v2241
      %v2274 = vpack.c.bf16 %v2242, %v2242
      %v2275 = vpack.c.bf16 %v2243, %v2243
      %v2276 = vpack.c.bf16 %v2244, %v2244
      %v2277 = vpack.c.bf16 %v2245, %v2245
      %2278 = vst [vmem:[%s208] sm:$0xf] %v2246
      %2279 = vst [vmem:[%s208 + $0x4] sm:$0xf] %v2247
      %2280 = vst [vmem:[%s208 + $0x8] sm:$0xf] %v2248
      %2281 = vst [vmem:[%s208 + $0xc] sm:$0xf] %v2249
      %2282 = vst [vmem:[%s208 + $0x10] sm:$0xf] %v2250
      %2283 = vst [vmem:[%s208 + $0x14] sm:$0xf] %v2251
      %2284 = vst [vmem:[%s208 + $0x18] sm:$0xf] %v2252
      %2285 = vst [vmem:[%s208 + $0x1c] sm:$0xf] %v2253
      %2286 = vst [vmem:[%s208 + $0x20] sm:$0xf] %v2254
      %2287 = vst [vmem:[%s208 + $0x24] sm:$0xf] %v2255
      %2288 = vst [vmem:[%s208 + $0x28] sm:$0xf] %v2256
      %2289 = vst [vmem:[%s208 + $0x2c] sm:$0xf] %v2257
      %2290 = vst [vmem:[%s208 + $0x30] sm:$0xf] %v2258
      %2291 = vst [vmem:[%s208 + $0x34] sm:$0xf] %v2259
      %2292 = vst [vmem:[%s208 + $0x38] sm:$0xf] %v2260
      %2293 = vst [vmem:[%s208 + $0x3c] sm:$0xf] %v2261
      %2294 = vst [vmem:[%s208 + $0x40] sm:$0xf] %v2262
      %2295 = vst [vmem:[%s208 + $0x44] sm:$0xf] %v2263
      %2296 = vst [vmem:[%s208 + $0x48] sm:$0xf] %v2264
      %2297 = vst [vmem:[%s208 + $0x4c] sm:$0xf] %v2265
      %2298 = vst [vmem:[%s208 + $0x50] sm:$0xf] %v2266
      %2299 = vst [vmem:[%s208 + $0x54] sm:$0xf] %v2267
      %2300 = vst [vmem:[%s208 + $0x58] sm:$0xf] %v2268
      %2301 = vst [vmem:[%s208 + $0x5c] sm:$0xf] %v2269
      %2302 = vst [vmem:[%s208 + $0x60] sm:$0xf] %v2270
      %2303 = vst [vmem:[%s208 + $0x64] sm:$0xf] %v2271
      %2304 = vst [vmem:[%s208 + $0x68] sm:$0xf] %v2272
      %2305 = vst [vmem:[%s208 + $0x6c] sm:$0xf] %v2273
      %2306 = vst [vmem:[%s208 + $0x70] sm:$0xf] %v2274
      %2307 = vst [vmem:[%s208 + $0x74] sm:$0xf] %v2275
      %2308 = vst [vmem:[%s208 + $0x78] sm:$0xf] %v2276
      %2309 = vst [vmem:[%s208 + $0x7c] sm:$0xf] %v2277
      %v2310 = vadd.f32 %v2214, %v2215
      %v2311 = vadd.f32 %v2310, %v2216
      %v2312 = vadd.f32 %v2311, %v2217
      %v2313 = vadd.f32 %v2312, %v2218
      %v2314 = vadd.f32 %v2313, %v2219
      %v2315 = vadd.f32 %v2314, %v2220
      %v2316 = vadd.f32 %v2315, %v2221
      %v2317 = vadd.f32 %v2316, %v2222
      %v2318 = vadd.f32 %v2317, %v2223
      %v2319 = vadd.f32 %v2318, %v2224
      %v2320 = vadd.f32 %v2319, %v2225
      %v2321 = vadd.f32 %v2320, %v2226
      %v2322 = vadd.f32 %v2321, %v2227
      %v2323 = vadd.f32 %v2322, %v2228
      %v2324 = vadd.f32 %v2323, %v2229
      %v2325 = vadd.f32 %v2324, %v2230
      %v2326 = vadd.f32 %v2325, %v2231
      %v2327 = vadd.f32 %v2326, %v2232
      %v2328 = vadd.f32 %v2327, %v2233
      %v2329 = vadd.f32 %v2328, %v2234
      %v2330 = vadd.f32 %v2329, %v2235
      %v2331 = vadd.f32 %v2330, %v2236
      %v2332 = vadd.f32 %v2331, %v2237
      %v2333 = vadd.f32 %v2332, %v2238
      %v2334 = vadd.f32 %v2333, %v2239
      %v2335 = vadd.f32 %v2334, %v2240
      %v2336 = vadd.f32 %v2335, %v2241
      %v2337 = vadd.f32 %v2336, %v2242
      %v2338 = vadd.f32 %v2337, %v2243
      %v2339 = vadd.f32 %v2338, %v2244
      %v2340 = vadd.f32 %v2339, %v2245
      %v2341 = vrot.slane %v2340, 4
      %v2342 = vadd.f32 %v2340, %v2341
      %v2343 = vrot.slane %v2342, 2
      %v2344 = vadd.f32 %v2342, %v2343
      %v2345 = vrot.slane %v2344, 1
      %v2346 = vadd.f32 %v2344, %v2345
      %2347 = vst [vmem:[%s211] sm:$0x1] %v2346
      %v2348 = vmul.f32 %v2214, %v2214
      %v2349 = vmul.f32 %v2215, %v2215
      %v2350 = vmul.f32 %v2216, %v2216
      %v2351 = vmul.f32 %v2217, %v2217
      %v2352 = vmul.f32 %v2218, %v2218
      %v2353 = vmul.f32 %v2219, %v2219
      %v2354 = vmul.f32 %v2220, %v2220
      %v2355 = vmul.f32 %v2221, %v2221
      %v2356 = vmul.f32 %v2222, %v2222
      %v2357 = vmul.f32 %v2223, %v2223
      %v2358 = vmul.f32 %v2224, %v2224
      %v2359 = vmul.f32 %v2225, %v2225
      %v2360 = vmul.f32 %v2226, %v2226
      %v2361 = vmul.f32 %v2227, %v2227
      %v2362 = vmul.f32 %v2228, %v2228
      %v2363 = vmul.f32 %v2229, %v2229
      %v2364 = vmul.f32 %v2230, %v2230
      %v2365 = vmul.f32 %v2231, %v2231
      %v2366 = vmul.f32 %v2232, %v2232
      %v2367 = vmul.f32 %v2233, %v2233
      %v2368 = vmul.f32 %v2234, %v2234
      %v2369 = vmul.f32 %v2235, %v2235
      %v2370 = vmul.f32 %v2236, %v2236
      %v2371 = vmul.f32 %v2237, %v2237
      %v2372 = vmul.f32 %v2238, %v2238
      %v2373 = vmul.f32 %v2239, %v2239
      %v2374 = vmul.f32 %v2240, %v2240
      %v2375 = vmul.f32 %v2241, %v2241
      %v2376 = vmul.f32 %v2242, %v2242
      %v2377 = vmul.f32 %v2243, %v2243
      %v2378 = vmul.f32 %v2244, %v2244
      %v2379 = vmul.f32 %v2245, %v2245
      %v2380 = vadd.f32 %v2348, %v2349
      %v2381 = vadd.f32 %v2380, %v2350
      %v2382 = vadd.f32 %v2381, %v2351
      %v2383 = vadd.f32 %v2382, %v2352
      %v2384 = vadd.f32 %v2383, %v2353
      %v2385 = vadd.f32 %v2384, %v2354
      %v2386 = vadd.f32 %v2385, %v2355
      %v2387 = vadd.f32 %v2386, %v2356
      %v2388 = vadd.f32 %v2387, %v2357
      %v2389 = vadd.f32 %v2388, %v2358
      %v2390 = vadd.f32 %v2389, %v2359
      %v2391 = vadd.f32 %v2390, %v2360
      %v2392 = vadd.f32 %v2391, %v2361
      %v2393 = vadd.f32 %v2392, %v2362
      %v2394 = vadd.f32 %v2393, %v2363
      %v2395 = vadd.f32 %v2394, %v2364
      %v2396 = vadd.f32 %v2395, %v2365
      %v2397 = vadd.f32 %v2396, %v2366
      %v2398 = vadd.f32 %v2397, %v2367
      %v2399 = vadd.f32 %v2398, %v2368
      %v2400 = vadd.f32 %v2399, %v2369
      %v2401 = vadd.f32 %v2400, %v2370
      %v2402 = vadd.f32 %v2401, %v2371
      %v2403 = vadd.f32 %v2402, %v2372
      %v2404 = vadd.f32 %v2403, %v2373
      %v2405 = vadd.f32 %v2404, %v2374
      %v2406 = vadd.f32 %v2405, %v2375
      %v2407 = vadd.f32 %v2406, %v2376
      %v2408 = vadd.f32 %v2407, %v2377
      %v2409 = vadd.f32 %v2408, %v2378
      %v2410 = vadd.f32 %v2409, %v2379
      %v2411 = vrot.slane %v2410, 4
      %v2412 = vadd.f32 %v2410, %v2411
      %v2413 = vrot.slane %v2412, 2
      %v2414 = vadd.f32 %v2412, %v2413
      %v2415 = vrot.slane %v2414, 1
      %v2416 = vadd.f32 %v2414, %v2415
      %2417 = vst [vmem:[%s214] sm:$0x1] %v2416
      %p2418 = scmp.lt.s32.totalorder %s16, 1
      %s2419 = scalar_select %p2418, %s16, 1
      %s2420 = smul.addr %s2419, 32
      %s2421 = smul.addr %s2420, 4
      %s2422 = scalar_lea.vmem %s2, %s2421
      %p2423 = scmp.lt.s32.totalorder %s16, 1
      %s2424 = scalar_select %p2423, %s16, 1
      %s2425 = scalar_lea.vmem %s3, %s2424
      %p2426 = scmp.lt.s32.totalorder %s16, 1
      %s2427 = scalar_select %p2426, %s16, 1
      %s2428 = scalar_lea.vmem %s4, %s2427
      // Predicated region
      $region29: #{block_forward.9} parent=27 // pred_check
        %p2429 = pneg %p81
      $region30: #{block_forward.9} parent=27 // pred_check_branch
        %2431 = sbr.rel (%p2429) target = $region32
      $region31: #{block_forward.9} parent=27 // pred_region
        _
      $region32: #{block_forward.9} parent=27 // pred_fallthru
        _
      // Predicated region
      $region33: #{block_forward.9} parent=27 // pred_check
        %p2432 = pneg %p107
      $region34: #{block_forward.9} parent=27 // pred_check_branch
        %2434 = sbr.rel (%p2432) target = $region36
      $region35: #{block_forward.9} parent=27 // pred_region
        _
      $region36: #{block_forward.9} parent=27 // pred_fallthru
        _
      // Predicated region
      $region37: #{block_forward.9} parent=27 // pred_check
        %p2435 = pneg %p133
      $region38: #{block_forward.9} parent=27 // pred_check_branch
        %2437 = sbr.rel (%p2435) target = $region40
      $region39: #{block_forward.9} parent=27 // pred_region
        _
      $region40: #{block_forward.9} parent=27 // pred_fallthru
        _
    $region28: #{block_forward.9} parent=5 // pred_fallthru
      _
    %p2438 = scmp.le.s32.totalorder 2, %s11
    // Predicated region
    $region41: #{block_forward.9} parent=5 // pred_check
      %p2439 = pneg %p2438
    $region42: #{block_forward.9} parent=5 // pred_check_branch
      %2441 = sbr.rel (%p2439) target = $region44
    $region43: #{block_forward.9} parent=5 // pred_region
      %s2442 = ssub.s32 %s11, 2
      // Predicated region
      $region45: #{block_forward.9} parent=43 // pred_check
        %p2443 = pneg %p87
      $region46: #{block_forward.9} parent=43 // pred_check_branch
        %2445 = sbr.rel (%p2443) target = $region48
      $region47: #{block_forward.9} parent=43 // pred_region
        %p2446 = scmp.lt.s32.totalorder %s17, 1
        %s2447 = scalar_select %p2446, %s17, 1
        %s2448 = smul.addr %s2447, 32
        %s2449 = smul.addr %s2448, 4
        %s2450 = scalar_lea.vmem %s2, %s2449
      $region48: #{block_forward.9} parent=43 // pred_fallthru
        _
      // Predicated region
      $region49: #{block_forward.9} parent=43 // pred_check
        %p2451 = pneg %p113
      $region50: #{block_forward.9} parent=43 // pred_check_branch
        %2453 = sbr.rel (%p2451) target = $region52
      $region51: #{block_forward.9} parent=43 // pred_region
        %p2454 = scmp.lt.s32.totalorder %s17, 1
        %s2455 = scalar_select %p2454, %s17, 1
        %s2456 = scalar_lea.vmem %s3, %s2455
      $region52: #{block_forward.9} parent=43 // pred_fallthru
        _
      // Predicated region
      $region53: #{block_forward.9} parent=43 // pred_check
        %p2457 = pneg %p139
      $region54: #{block_forward.9} parent=43 // pred_check_branch
        %2459 = sbr.rel (%p2457) target = $region56
      $region55: #{block_forward.9} parent=43 // pred_region
        %p2460 = scmp.lt.s32.totalorder %s17, 1
        %s2461 = scalar_select %p2460, %s17, 1
        %s2462 = scalar_lea.vmem %s4, %s2461
      $region56: #{block_forward.9} parent=43 // pred_fallthru
        _
    $region44: #{block_forward.9} parent=5 // pred_fallthru
      _
  $region6: #{block_forward.9} parent=0 // loop_footer
    %s15 = sadd.s32 1, %s11
  $region7: #{block_forward.9} parent=0 // loop_footer_branch
    %10 = sbr.rel target = $region3
  $region8: #{block_forward.9} parent=0 // loop_exit
    _

</llo_original>
